<compile_context>
chip_gen: v6e
topology: v6e:2x2x1
jax: 0.10.0
libtpu: 0.0.40
codegen_flags: <defaults>
</compile_context>

<pallas_src>
import functools

import jax
import jax.numpy as jnp
from jax import lax
from jax.experimental import pallas as pl
from jax.experimental.pallas import tpu as pltpu

EPS = 1e-5
LANE = 128


def _round_up(x, m):
    return ((x + m - 1) // m) * m


# ------------------------------------------------------------------ kernel

def _resnext_block_kernel(x_ref, mask_ref,
                          w1sc_ref, b1_ref, w2_ref, b2_ref, w3_ref, b3sc_ref,
                          o_ref, h1p_ref, tap_ref, *, pad_w, guard, cp):
    P = o_ref.shape[0]                         # (H+2)*(W+2) padded pixels

    x_bf = x_ref[...]                          # (P, Cin) bf16, zero on border rows
    mask = mask_ref[...]                       # (P, 1) f32: 1 interior, 0 border

    # ---- stage 1 (1x1 conv, BN folded) fused with the shortcut 1x1 conv:
    # one matmul against [w1 | wsc] -> (P, 2*cp); split the halves.
    res = jnp.dot(x_bf, w1sc_ref[...], preferred_element_type=jnp.float32)
    # Border rows are forced to zero so they act as the 3x3 conv's zero padding.
    h1 = jnp.maximum(res[:, :cp] + b1_ref[...], 0.0) * mask
    o_ref[...] = res[:, cp:]                   # park shortcut branch in the output

    # ---- stage h1 into a guard-padded f32 scratch.  Only the two guard bands
    # (never written, but read by the shifted taps) are zeroed - per step, so
    # the kernel stays correct regardless of how grid steps map to cores.
    zero_halo = jnp.zeros((guard, cp), jnp.float32)
    h1p_ref[0:guard, :] = zero_halo
    h1p_ref[guard + P:guard + P + guard, :] = zero_halo
    h1p_ref[guard:guard + P, :] = h1

    # ---- build the (P, 9*cp) bf16 im2col tap matrix: tap (kh, kw) is the
    # constant flat-row offset (kh-1)*(W+2) + (kw-1) on the padded grid.
    for t in range(9):                         # static unroll over the 9 taps
        off = (t // 3 - 1) * pad_w + (t % 3 - 1)
        tap_ref[:, t * cp:(t + 1) * cp] = (
            h1p_ref[guard + off:guard + off + P, :].astype(jnp.bfloat16))

    # ---- stage 2: grouped 3x3 conv as a single K = 9*cp matmul.  The MXU
    # accumulates over K internally -> no VMEM accumulator at all.
    h2 = jnp.dot(tap_ref[...], w2_ref[...], preferred_element_type=jnp.float32)
    h2 = jnp.maximum(h2 + b2_ref[...], 0.0)

    # ---- stage 3 (1x1 conv + BN) + residual add + final ReLU (b3+bsc pre-added).
    y3 = jnp.dot(h2.astype(jnp.bfloat16), w3_ref[...],
                 preferred_element_type=jnp.float32)
    o_ref[...] = jnp.maximum(o_ref[...] + y3 + b3sc_ref[...], 0.0)


# ------------------------------------------------------------------ wrapper

def resnext_inconv_forward(x_nchw, prep, *, out_ch):
    N, Cin, H, W = x_nchw.shape
    cp = prep["w3"].shape[0]                   # lane-padded channel width (128)
    Wp = W + 2
    P = (H + 2) * Wp
    guard = _round_up(Wp + 1, 8)               # >= max tap offset, sublane aligned

    # Pad spatially (3x3 halo), flatten pixels, channels last, cast to bf16 once.
    x_nhwc = jnp.transpose(x_nchw, (0, 2, 3, 1)).astype(jnp.bfloat16)
    xp = jnp.pad(x_nhwc, ((0, 0), (1, 1), (1, 1), (0, 0)))
    xp_flat = xp.reshape(N, P, Cin)

    # Interior mask of the padded grid (emulates the 3x3 conv's zero padding).
    py = jnp.arange(H + 2)
    px = jnp.arange(Wp)
    interior = ((py >= 1) & (py <= H))[:, None] & ((px >= 1) & (px <= W))[None, :]
    mask = interior.reshape(P, 1).astype(jnp.float32)

    kernel = functools.partial(_resnext_block_kernel, pad_w=Wp, guard=guard, cp=cp)

    def full(shape):
        return pl.BlockSpec(shape, lambda n: (0, 0))

    out_pad = pl.pallas_call(
        kernel,
        out_shape=jax.ShapeDtypeStruct((N, P, cp), jnp.float32),
        grid=(N,),                             # one image per step; >=2 parallel
        in_specs=[                             # steps keep both v7x cores busy
            pl.BlockSpec((None, P, Cin), lambda n: (n, 0, 0)),   # x (per image)
            full((P, 1)),                                        # border mask
            full((Cin, 2 * cp)), full((1, cp)),                  # [w1|wsc] bf16, b1
            full((9 * cp, cp)), full((1, cp)),                   # w2 taps bf16, b2
            full((cp, cp)), full((1, cp)),                       # w3 bf16, b3+bsc
        ],
        out_specs=pl.BlockSpec((None, P, cp), lambda n: (n, 0, 0)),
        scratch_shapes=[
            pltpu.VMEM((P + 2 * guard, cp), jnp.float32),        # guard-padded h1
            pltpu.VMEM((P, 9 * cp), jnp.bfloat16),               # im2col tap matrix
        ],
        compiler_params=pltpu.CompilerParams(dimension_semantics=("parallel",)),
    )(xp_flat, mask, prep["w1sc"], prep["b1"], prep["w2"], prep["b2"],
      prep["w3"], prep["b3sc"])

    out = out_pad.reshape(N, H + 2, Wp, cp)[:, 1:H + 1, 1:W + 1, :out_ch]
    return jnp.transpose(out, (0, 3, 1, 2))


# ------------------------------------------------------------------ one-time param prep

def _fold_bn(gamma, beta, mean, var):
    scale = gamma / jnp.sqrt(var + EPS)
    shift = beta - mean * scale
    return scale.astype(jnp.float32), shift.astype(jnp.float32)


def _grouped_to_dense_taps(w2, cardinality):
    # PyTorch grouped weight (Cout, Cout//groups, 3, 3) -> (9, Cout, Cout)
    # block-diagonal dense weight per tap, dense[t, ci, co] with t = kh*3 + kw.
    # NOTE: density is 1/cardinality; fine while the MXU is starved at small
    # widths, restructure before growing Cout to production ResNeXt sizes.
    Cout, gs, kh, kw = w2.shape
    assert kh == 3 and kw == 3
    assert Cout % cardinality == 0 and gs == Cout // cardinality
    co = jnp.arange(Cout)
    dense = jnp.zeros((9, Cout, Cout), jnp.float32)
    for j in range(gs):
        ci = (co // gs) * gs + j
        vals = w2[:, j, :, :].reshape(Cout, 9).T          # (9, Cout) indexed [t, co]
        dense = dense.at[:, ci, co].add(vals)
    return dense


def prepare_params(params, cardinality):
    """Fold BN stats into the conv weights and pad channels to the lane width."""
    out_ch = params["w3"].shape[0]
    cp = _round_up(out_ch, LANE)
    pad_c = cp - out_ch

    s1, b1 = _fold_bn(*params["bn1"])
    s2, b2 = _fold_bn(*params["bn2"])
    s3, b3 = _fold_bn(*params["bn3"])
    ssc, bsc = _fold_bn(*params["bnsc"])

    w1 = params["w1"][:, :, 0, 0].T * s1[None, :]                 # (Cin, Cout)
    wsc = params["wsc"][:, :, 0, 0].T * ssc[None, :]              # (Cin, Cout)
    w2 = _grouped_to_dense_taps(params["w2"], cardinality) * s2[None, None, :]
    w3 = params["w3"][:, :, 0, 0].T * s3[None, :]                 # (Cout, Cout)

    w1sc = jnp.concatenate([jnp.pad(w1, ((0, 0), (0, pad_c))),
                            jnp.pad(wsc, ((0, 0), (0, pad_c)))], axis=1)
    w2p = jnp.pad(w2, ((0, 0), (0, pad_c), (0, pad_c))).reshape(9 * cp, cp)
    w3p = jnp.pad(w3, ((0, pad_c), (0, pad_c)))

    row = lambda v: jnp.pad(v, (0, pad_c))[None, :].astype(jnp.float32)
    return {
        "w1sc": w1sc.astype(jnp.bfloat16),
        "b1": row(b1),
        "w2": w2p.astype(jnp.bfloat16),
        "b2": row(b2),
        "w3": w3p.astype(jnp.bfloat16),
        "b3sc": row(b3 + bsc),                 # shifts pre-added: one bias, one vadd
    }


def init_params(key, in_ch, out_ch, cardinality):
    ks = jax.random.split(key, 20)
    gs = out_ch // cardinality

    def bn(k1, k2, k3, k4, c):
        return (jax.random.uniform(k1, (c,), minval=0.5, maxval=1.5),   # gamma
                jax.random.normal(k2, (c,)) * 0.1,                      # beta
                jax.random.normal(k3, (c,)) * 0.1,                      # running_mean
                jax.random.uniform(k4, (c,), minval=0.5, maxval=1.5))   # running_var

    p = {
        "w1": jax.random.normal(ks[0], (out_ch, in_ch, 1, 1)) * 0.1,
        "w2": jax.random.normal(ks[1], (out_ch, gs, 3, 3)) * 0.1,
        "w3": jax.random.normal(ks[2], (out_ch, out_ch, 1, 1)) * 0.1,
        "wsc": jax.random.normal(ks[3], (out_ch, in_ch, 1, 1)) * 0.1,
        "bn1": bn(ks[4], ks[5], ks[6], ks[7], out_ch),
        "bn2": bn(ks[8], ks[9], ks[10], ks[11], out_ch),
        "bn3": bn(ks[12], ks[13], ks[14], ks[15], out_ch),
        "bnsc": bn(ks[16], ks[17], ks[18], ks[19], out_ch),
    }
    return jax.tree.map(lambda a: a.astype(jnp.float32), p)


# ------------------------------------------------------------------ pure-JAX reference

def reference_forward(x, params, cardinality):
    def conv(a, w, groups=1, pad=0):
        return lax.conv_general_dilated(
            a, w, (1, 1), [(pad, pad), (pad, pad)],
            dimension_numbers=("NCHW", "OIHW", "NCHW"),
            feature_group_count=groups)

    def bn(a, stats):
        g, b, m, v = stats
        return (g[None, :, None, None] * (a - m[None, :, None, None])
                / jnp.sqrt(v[None, :, None, None] + EPS) + b[None, :, None, None])

    h = jnp.maximum(bn(conv(x, params["w1"]), params["bn1"]), 0.0)
    h = jnp.maximum(bn(conv(h, params["w2"], groups=cardinality, pad=1), params["bn2"]), 0.0)
    out = bn(conv(h, params["w3"]), params["bn3"])
    sc = bn(conv(x, params["wsc"]), params["bnsc"])
    return jnp.maximum(out + sc, 0.0)


# ------------------------------------------------------------------ main

if __name__ == "__main__":
    N, in_ch, H, W = 2, 4, 16, 16
    out_ch, cardinality = 64, 32     # out_ch must be divisible by cardinality

    key = jax.random.PRNGKey(0)
    kx, kp = jax.random.split(key)
    x = jax.random.normal(kx, (N, in_ch, H, W), dtype=jnp.float32)
    params = init_params(kp, in_ch, out_ch, cardinality)

    prep = prepare_params(params, cardinality)          # one-time weight/BN folding
    fwd = jax.jit(functools.partial(resnext_inconv_forward, out_ch=out_ch))

    out = jax.block_until_ready(fwd(x, prep))
    ref = jax.block_until_ready(reference_forward(x, params, cardinality))

    assert out.shape == (N, out_ch, H, W), out.shape
    # bf16 MXU operands with f32 accumulation vs an all-f32 conv reference.
    max_err = float(jnp.max(jnp.abs(out - ref)))
    assert jnp.allclose(out, ref, rtol=3e-2, atol=3e-2), max_err
    print("KERNEL_OK")
</pallas_src>

<mosaic_0001>
module attributes {stable_mosaic.version = 11 : i64} {
  func.func @_resnext_block_kernel(%arg0: i32, %arg1: memref<1x324x4xbf16, #tpu.memory_space<vmem>>, %arg2: memref<324x1xf32, #tpu.memory_space<vmem>>, %arg3: memref<4x256xbf16, #tpu.memory_space<vmem>>, %arg4: memref<1x128xf32, #tpu.memory_space<vmem>>, %arg5: memref<1152x128xbf16, #tpu.memory_space<vmem>>, %arg6: memref<1x128xf32, #tpu.memory_space<vmem>>, %arg7: memref<128x128xbf16, #tpu.memory_space<vmem>>, %arg8: memref<1x128xf32, #tpu.memory_space<vmem>>, %arg9: memref<1x324x128xf32, #tpu.memory_space<vmem>>, %arg10: memref<372x128xf32, #tpu.memory_space<vmem>>, %arg11: memref<324x1152xbf16, #tpu.memory_space<vmem>>) attributes {dimension_semantics = [#tpu.dimension_semantics<parallel>], iteration_bounds = array<i64: 2>, scalar_prefetch = 0 : i64, scratch_operands = 2 : i64, tpu.core_type = #tpu.core_type<tc>, window_params = [{transform_indices = @transform_0, window_bounds = array<i64: 1, 324, 4>}, {pipeline_mode = #tpu.pipeline_mode<synchronous>, transform_indices = @transform_1, window_bounds = array<i64: 324, 1>}, {pipeline_mode = #tpu.pipeline_mode<synchronous>, transform_indices = @transform_2, window_bounds = array<i64: 4, 256>}, {pipeline_mode = #tpu.pipeline_mode<synchronous>, transform_indices = @transform_3, window_bounds = array<i64: 1, 128>}, {pipeline_mode = #tpu.pipeline_mode<synchronous>, transform_indices = @transform_4, window_bounds = array<i64: 1152, 128>}, {pipeline_mode = #tpu.pipeline_mode<synchronous>, transform_indices = @transform_5, window_bounds = array<i64: 1, 128>}, {pipeline_mode = #tpu.pipeline_mode<synchronous>, transform_indices = @transform_6, window_bounds = array<i64: 128, 128>}, {pipeline_mode = #tpu.pipeline_mode<synchronous>, transform_indices = @transform_7, window_bounds = array<i64: 1, 128>}, {transform_indices = @transform_8, window_bounds = array<i64: 1, 324, 128>}]} {
    %c0 = arith.constant 0 : index
    %c0_0 = arith.constant 0 : index
    %c0_1 = arith.constant 0 : index
    %0 = vector.load %arg1[%c0, %c0_0, %c0_1] : memref<1x324x4xbf16, #tpu.memory_space<vmem>>, vector<1x324x4xbf16>
    %1 = vector.shape_cast %0 : vector<1x324x4xbf16> to vector<324x4xbf16>
    %c0_2 = arith.constant 0 : index
    %c0_3 = arith.constant 0 : index
    %2 = vector.load %arg2[%c0_2, %c0_3] : memref<324x1xf32, #tpu.memory_space<vmem>>, vector<324x1xf32>
    %c0_4 = arith.constant 0 : index
    %c0_5 = arith.constant 0 : index
    %3 = vector.load %arg3[%c0_4, %c0_5] : memref<4x256xbf16, #tpu.memory_space<vmem>>, vector<4x256xbf16>
    %cst = arith.constant dense<0.000000e+00> : vector<324x256xf32>
    %4 = tpu.matmul %1, %3, %cst {dimension_numbers = #tpu.dot_dimension_numbers<[1], [0], [0], [1], [0, 0, 1, 1], [], []>} : vector<324x4xbf16>, vector<4x256xbf16>, vector<324x256xf32> -> vector<324x256xf32>
    %5 = vector.extract_strided_slice %4 {offsets = [0, 0], sizes = [324, 128], strides = [1, 1]} : vector<324x256xf32> to vector<324x128xf32>
    %c0_6 = arith.constant 0 : index
    %c0_7 = arith.constant 0 : index
    %6 = vector.load %arg4[%c0_6, %c0_7] : memref<1x128xf32, #tpu.memory_space<vmem>>, vector<1x128xf32>
    %7 = vector.broadcast %6 : vector<1x128xf32> to vector<324x128xf32>
    %8 = arith.addf %5, %7 : vector<324x128xf32>
    %cst_8 = arith.constant 0.000000e+00 : f32
    %9 = vector.broadcast %cst_8 : f32 to vector<324x128xf32>
    %10 = arith.maximumf %8, %9 : vector<324x128xf32>
    %11 = vector.broadcast %2 : vector<324x1xf32> to vector<324x128xf32>
    %12 = arith.mulf %10, %11 : vector<324x128xf32>
    %13 = vector.extract_strided_slice %4 {offsets = [0, 128], sizes = [324, 128], strides = [1, 1]} : vector<324x256xf32> to vector<324x128xf32>
    %c0_9 = arith.constant 0 : index
    %c0_10 = arith.constant 0 : index
    %c0_11 = arith.constant 0 : index
    %14 = vector.load %arg9[%c0_9, %c0_10, %c0_11] : memref<1x324x128xf32, #tpu.memory_space<vmem>>, vector<1x324x128xf32>
    %15 = vector.shape_cast %14 : vector<1x324x128xf32> to vector<324x128xf32>
    %16 = vector.shape_cast %13 : vector<324x128xf32> to vector<1x324x128xf32>
    tpu.vector_store %arg9[%c0_9, %c0_10, %c0_11], %16 {strides = array<i32>} : memref<1x324x128xf32, #tpu.memory_space<vmem>>, vector<1x324x128xf32>,
    %cst_12 = arith.constant 0.000000e+00 : f32
    %17 = vector.broadcast %cst_12 : f32 to vector<24x128xf32>
    %c0_13 = arith.constant 0 : index
    %c0_14 = arith.constant 0 : index
    %18 = vector.load %arg10[%c0_13, %c0_14] : memref<372x128xf32, #tpu.memory_space<vmem>>, vector<24x128xf32>
    tpu.vector_store %arg10[%c0_13, %c0_14], %17 {strides = array<i32>} : memref<372x128xf32, #tpu.memory_space<vmem>>, vector<24x128xf32>,
    %c348 = arith.constant 348 : index
    %c0_15 = arith.constant 0 : index
    %19 = vector.load %arg10[%c348, %c0_15] : memref<372x128xf32, #tpu.memory_space<vmem>>, vector<24x128xf32>
    tpu.vector_store %arg10[%c348, %c0_15], %17 {strides = array<i32>} : memref<372x128xf32, #tpu.memory_space<vmem>>, vector<24x128xf32>,
    %c24 = arith.constant 24 : index
    %c0_16 = arith.constant 0 : index
    %20 = vector.load %arg10[%c24, %c0_16] : memref<372x128xf32, #tpu.memory_space<vmem>>, vector<324x128xf32>
    tpu.vector_store %arg10[%c24, %c0_16], %12 {strides = array<i32>} : memref<372x128xf32, #tpu.memory_space<vmem>>, vector<324x128xf32>,
    %c5 = arith.constant 5 : index
    %c0_17 = arith.constant 0 : index
    %21 = vector.load %arg10[%c5, %c0_17] : memref<372x128xf32, #tpu.memory_space<vmem>>, vector<324x128xf32>
    %22 = arith.truncf %21 : vector<324x128xf32> to vector<324x128xbf16>
    %c0_18 = arith.constant 0 : index
    %c0_19 = arith.constant 0 : index
    %23 = vector.load %arg11[%c0_18, %c0_19] : memref<324x1152xbf16, #tpu.memory_space<vmem>>, vector<324x128xbf16>
    tpu.vector_store %arg11[%c0_18, %c0_19], %22 {strides = array<i32>} : memref<324x1152xbf16, #tpu.memory_space<vmem>>, vector<324x128xbf16>,
    %c6 = arith.constant 6 : index
    %c0_20 = arith.constant 0 : index
    %24 = vector.load %arg10[%c6, %c0_20] : memref<372x128xf32, #tpu.memory_space<vmem>>, vector<324x128xf32>
    %25 = arith.truncf %24 : vector<324x128xf32> to vector<324x128xbf16>
    %c0_21 = arith.constant 0 : index
    %c128 = arith.constant 128 : index
    %26 = vector.load %arg11[%c0_21, %c128] : memref<324x1152xbf16, #tpu.memory_space<vmem>>, vector<324x128xbf16>
    tpu.vector_store %arg11[%c0_21, %c128], %25 {strides = array<i32>} : memref<324x1152xbf16, #tpu.memory_space<vmem>>, vector<324x128xbf16>,
    %c7 = arith.constant 7 : index
    %c0_22 = arith.constant 0 : index
    %27 = vector.load %arg10[%c7, %c0_22] : memref<372x128xf32, #tpu.memory_space<vmem>>, vector<324x128xf32>
    %28 = arith.truncf %27 : vector<324x128xf32> to vector<324x128xbf16>
    %c0_23 = arith.constant 0 : index
    %c256 = arith.constant 256 : index
    %29 = vector.load %arg11[%c0_23, %c256] : memref<324x1152xbf16, #tpu.memory_space<vmem>>, vector<324x128xbf16>
    tpu.vector_store %arg11[%c0_23, %c256], %28 {strides = array<i32>} : memref<324x1152xbf16, #tpu.memory_space<vmem>>, vector<324x128xbf16>,
    %c23 = arith.constant 23 : index
    %c0_24 = arith.constant 0 : index
    %30 = vector.load %arg10[%c23, %c0_24] : memref<372x128xf32, #tpu.memory_space<vmem>>, vector<324x128xf32>
    %31 = arith.truncf %30 : vector<324x128xf32> to vector<324x128xbf16>
    %c0_25 = arith.constant 0 : index
    %c384 = arith.constant 384 : index
    %32 = vector.load %arg11[%c0_25, %c384] : memref<324x1152xbf16, #tpu.memory_space<vmem>>, vector<324x128xbf16>
    tpu.vector_store %arg11[%c0_25, %c384], %31 {strides = array<i32>} : memref<324x1152xbf16, #tpu.memory_space<vmem>>, vector<324x128xbf16>,
    %c24_26 = arith.constant 24 : index
    %c0_27 = arith.constant 0 : index
    %33 = vector.load %arg10[%c24_26, %c0_27] : memref<372x128xf32, #tpu.memory_space<vmem>>, vector<324x128xf32>
    %34 = arith.truncf %33 : vector<324x128xf32> to vector<324x128xbf16>
    %c0_28 = arith.constant 0 : index
    %c512 = arith.constant 512 : index
    %35 = vector.load %arg11[%c0_28, %c512] : memref<324x1152xbf16, #tpu.memory_space<vmem>>, vector<324x128xbf16>
    tpu.vector_store %arg11[%c0_28, %c512], %34 {strides = array<i32>} : memref<324x1152xbf16, #tpu.memory_space<vmem>>, vector<324x128xbf16>,
    %c25 = arith.constant 25 : index
    %c0_29 = arith.constant 0 : index
    %36 = vector.load %arg10[%c25, %c0_29] : memref<372x128xf32, #tpu.memory_space<vmem>>, vector<324x128xf32>
    %37 = arith.truncf %36 : vector<324x128xf32> to vector<324x128xbf16>
    %c0_30 = arith.constant 0 : index
    %c640 = arith.constant 640 : index
    %38 = vector.load %arg11[%c0_30, %c640] : memref<324x1152xbf16, #tpu.memory_space<vmem>>, vector<324x128xbf16>
    tpu.vector_store %arg11[%c0_30, %c640], %37 {strides = array<i32>} : memref<324x1152xbf16, #tpu.memory_space<vmem>>, vector<324x128xbf16>,
    %c41 = arith.constant 41 : index
    %c0_31 = arith.constant 0 : index
    %39 = vector.load %arg10[%c41, %c0_31] : memref<372x128xf32, #tpu.memory_space<vmem>>, vector<324x128xf32>
    %40 = arith.truncf %39 : vector<324x128xf32> to vector<324x128xbf16>
    %c0_32 = arith.constant 0 : index
    %c768 = arith.constant 768 : index
    %41 = vector.load %arg11[%c0_32, %c768] : memref<324x1152xbf16, #tpu.memory_space<vmem>>, vector<324x128xbf16>
    tpu.vector_store %arg11[%c0_32, %c768], %40 {strides = array<i32>} : memref<324x1152xbf16, #tpu.memory_space<vmem>>, vector<324x128xbf16>,
    %c42 = arith.constant 42 : index
    %c0_33 = arith.constant 0 : index
    %42 = vector.load %arg10[%c42, %c0_33] : memref<372x128xf32, #tpu.memory_space<vmem>>, vector<324x128xf32>
    %43 = arith.truncf %42 : vector<324x128xf32> to vector<324x128xbf16>
    %c0_34 = arith.constant 0 : index
    %c896 = arith.constant 896 : index
    %44 = vector.load %arg11[%c0_34, %c896] : memref<324x1152xbf16, #tpu.memory_space<vmem>>, vector<324x128xbf16>
    tpu.vector_store %arg11[%c0_34, %c896], %43 {strides = array<i32>} : memref<324x1152xbf16, #tpu.memory_space<vmem>>, vector<324x128xbf16>,
    %c43 = arith.constant 43 : index
    %c0_35 = arith.constant 0 : index
    %45 = vector.load %arg10[%c43, %c0_35] : memref<372x128xf32, #tpu.memory_space<vmem>>, vector<324x128xf32>
    %46 = arith.truncf %45 : vector<324x128xf32> to vector<324x128xbf16>
    %c0_36 = arith.constant 0 : index
    %c1024 = arith.constant 1024 : index
    %47 = vector.load %arg11[%c0_36, %c1024] : memref<324x1152xbf16, #tpu.memory_space<vmem>>, vector<324x128xbf16>
    tpu.vector_store %arg11[%c0_36, %c1024], %46 {strides = array<i32>} : memref<324x1152xbf16, #tpu.memory_space<vmem>>, vector<324x128xbf16>,
    %c0_37 = arith.constant 0 : index
    %c0_38 = arith.constant 0 : index
    %48 = vector.load %arg11[%c0_37, %c0_38] : memref<324x1152xbf16, #tpu.memory_space<vmem>>, vector<324x1152xbf16>
    %c0_39 = arith.constant 0 : index
    %c0_40 = arith.constant 0 : index
    %49 = vector.load %arg5[%c0_39, %c0_40] : memref<1152x128xbf16, #tpu.memory_space<vmem>>, vector<1152x128xbf16>
    %cst_41 = arith.constant dense<0.000000e+00> : vector<324x128xf32>
    %50 = tpu.matmul %48, %49, %cst_41 {dimension_numbers = #tpu.dot_dimension_numbers<[1], [0], [0], [1], [0, 0, 1, 1], [], []>} : vector<324x1152xbf16>, vector<1152x128xbf16>, vector<324x128xf32> -> vector<324x128xf32>
    %c0_42 = arith.constant 0 : index
    %c0_43 = arith.constant 0 : index
    %51 = vector.load %arg6[%c0_42, %c0_43] : memref<1x128xf32, #tpu.memory_space<vmem>>, vector<1x128xf32>
    %52 = vector.broadcast %51 : vector<1x128xf32> to vector<324x128xf32>
    %53 = arith.addf %50, %52 : vector<324x128xf32>
    %cst_44 = arith.constant 0.000000e+00 : f32
    %54 = vector.broadcast %cst_44 : f32 to vector<324x128xf32>
    %55 = arith.maximumf %53, %54 : vector<324x128xf32>
    %56 = arith.truncf %55 : vector<324x128xf32> to vector<324x128xbf16>
    %c0_45 = arith.constant 0 : index
    %c0_46 = arith.constant 0 : index
    %57 = vector.load %arg7[%c0_45, %c0_46] : memref<128x128xbf16, #tpu.memory_space<vmem>>, vector<128x128xbf16>
    %cst_47 = arith.constant dense<0.000000e+00> : vector<324x128xf32>
    %58 = tpu.matmul %56, %57, %cst_47 {dimension_numbers = #tpu.dot_dimension_numbers<[1], [0], [0], [1], [0, 0, 1, 1], [], []>} : vector<324x128xbf16>, vector<128x128xbf16>, vector<324x128xf32> -> vector<324x128xf32>
    %c0_48 = arith.constant 0 : index
    %c0_49 = arith.constant 0 : index
    %c0_50 = arith.constant 0 : index
    %59 = vector.load %arg9[%c0_48, %c0_49, %c0_50] : memref<1x324x128xf32, #tpu.memory_space<vmem>>, vector<1x324x128xf32>
    %60 = vector.shape_cast %59 : vector<1x324x128xf32> to vector<324x128xf32>
    %61 = arith.addf %60, %58 : vector<324x128xf32>
    %c0_51 = arith.constant 0 : index
    %c0_52 = arith.constant 0 : index
    %62 = vector.load %arg8[%c0_51, %c0_52] : memref<1x128xf32, #tpu.memory_space<vmem>>, vector<1x128xf32>
    %63 = vector.broadcast %62 : vector<1x128xf32> to vector<324x128xf32>
    %64 = arith.addf %61, %63 : vector<324x128xf32>
    %cst_53 = arith.constant 0.000000e+00 : f32
    %65 = vector.broadcast %cst_53 : f32 to vector<324x128xf32>
    %66 = arith.maximumf %64, %65 : vector<324x128xf32>
    %c0_54 = arith.constant 0 : index
    %c0_55 = arith.constant 0 : index
    %c0_56 = arith.constant 0 : index
    %67 = vector.load %arg9[%c0_54, %c0_55, %c0_56] : memref<1x324x128xf32, #tpu.memory_space<vmem>>, vector<1x324x128xf32>
    %68 = vector.shape_cast %67 : vector<1x324x128xf32> to vector<324x128xf32>
    %69 = vector.shape_cast %66 : vector<324x128xf32> to vector<1x324x128xf32>
    tpu.vector_store %arg9[%c0_54, %c0_55, %c0_56], %69 {strides = array<i32>} : memref<1x324x128xf32, #tpu.memory_space<vmem>>, vector<1x324x128xf32>,
    return
  }
  func.func @transform_0(%arg0: i32) -> (i32, i32, i32) {
    %c0_i32 = arith.constant 0 : i32
    %c0_i32_0 = arith.constant 0 : i32
    %c0_i32_1 = arith.constant 0 : i32
    return %arg0, %c0_i32, %c0_i32_0 : i32, i32, i32
  }
  func.func @transform_1(%arg0: i32) -> (i32, i32) {
    %c0_i32 = arith.constant 0 : i32
    %c0_i32_0 = arith.constant 0 : i32
    %c0_i32_1 = arith.constant 0 : i32
    return %c0_i32, %c0_i32_0 : i32, i32
  }
  func.func @transform_2(%arg0: i32) -> (i32, i32) {
    %c0_i32 = arith.constant 0 : i32
    %c0_i32_0 = arith.constant 0 : i32
    %c0_i32_1 = arith.constant 0 : i32
    return %c0_i32, %c0_i32_0 : i32, i32
  }
  func.func @transform_3(%arg0: i32) -> (i32, i32) {
    %c0_i32 = arith.constant 0 : i32
    %c0_i32_0 = arith.constant 0 : i32
    %c0_i32_1 = arith.constant 0 : i32
    return %c0_i32, %c0_i32_0 : i32, i32
  }
  func.func @transform_4(%arg0: i32) -> (i32, i32) {
    %c0_i32 = arith.constant 0 : i32
    %c0_i32_0 = arith.constant 0 : i32
    %c0_i32_1 = arith.constant 0 : i32
    return %c0_i32, %c0_i32_0 : i32, i32
  }
  func.func @transform_5(%arg0: i32) -> (i32, i32) {
    %c0_i32 = arith.constant 0 : i32
    %c0_i32_0 = arith.constant 0 : i32
    %c0_i32_1 = arith.constant 0 : i32
    return %c0_i32, %c0_i32_0 : i32, i32
  }
  func.func @transform_6(%arg0: i32) -> (i32, i32) {
    %c0_i32 = arith.constant 0 : i32
    %c0_i32_0 = arith.constant 0 : i32
    %c0_i32_1 = arith.constant 0 : i32
    return %c0_i32, %c0_i32_0 : i32, i32
  }
  func.func @transform_7(%arg0: i32) -> (i32, i32) {
    %c0_i32 = arith.constant 0 : i32
    %c0_i32_0 = arith.constant 0 : i32
    %c0_i32_1 = arith.constant 0 : i32
    return %c0_i32, %c0_i32_0 : i32, i32
  }
  func.func @transform_8(%arg0: i32) -> (i32, i32, i32) {
    %c0_i32 = arith.constant 0 : i32
    %c0_i32_0 = arith.constant 0 : i32
    %c0_i32_1 = arith.constant 0 : i32
    return %arg0, %c0_i32, %c0_i32_0 : i32, i32, i32
  }
}

</mosaic_0001>

<llo_original>
// kernel: resnext_inconv_forward.1
$region0: #{resnext_inconv_forward.1}
  #allocation0 [shape = 'u32[]', space=smem, size = 0x4, offset = 0x4, fixed_abs, tag = 'smem constant byte address 0x4 - core index']
  #allocation1 [shape = 'u32[144,128]{1,0:T(1,128)}', space=vmem, size = 0x12000, scoped, tag = 'internal scratch']
  #allocation2 [shape = 'f32[372,128]{1,0:T(8,128)}', space=vmem, size = 0x2f000, scoped, tag = 'scratch operand']
  #allocation3 [shape = 'bf16[324,1152]{1,0:T(8,128)(2,1)}', space=vmem, size = 0xb8800, scoped, tag = 'scratch operand']
  %s0 = inlined_call_operand.vmem [shape: bf16[2,324,4], index: 0, kind: input, shape index: {}]
  %s1 = inlined_call_operand.vmem [shape: f32[324,1], index: 1, kind: input, shape index: {}]
  %s2 = inlined_call_operand.vmem [shape: bf16[4,256], index: 2, kind: input, shape index: {}]
  %s3 = inlined_call_operand.vmem [shape: f32[1,128], index: 3, kind: input, shape index: {}]
  %s4 = inlined_call_operand.vmem [shape: bf16[1152,128], index: 4, kind: input, shape index: {}]
  %s5 = inlined_call_operand.vmem [shape: f32[1,128], index: 5, kind: input, shape index: {}]
  %s6 = inlined_call_operand.vmem [shape: bf16[128,128], index: 6, kind: input, shape index: {}]
  %s7 = inlined_call_operand.vmem [shape: f32[1,128], index: 7, kind: input, shape index: {}]
  %s8 = inlined_call_operand.vmem [shape: f32[2,324,128], index: 8, kind: output, shape index: {}]
  %s9 = sld [smem:[#allocation0]]
  $region65: #{resnext_inconv_forward.1} parent=0
    _
  %s11 = ssub.s32 1, %s9
  %s12 = scalar_select 0, %s11, %s9
  loop: start=0, step=1, limit=4
  $region2: #{resnext_inconv_forward.1} parent=0 // loop_pre_header
    _
  $region3: #{resnext_inconv_forward.1} parent=0 // loop_header
    %s14 = sphi 0, %s18
    %p15 = scmp.ge.s32.totalorder %s14, 4
    %s24 = sphi 0, %s26
    %s27 = sphi 0, %s24
    %s28 = sphi 0, %s27
    %s44 = sphi 0, %s28
    %s48 = sphi 0, %s48
    %s50 = sphi 0, %s48
    %s51 = sphi 0, %s50
    %s65 = sphi 0, %s51
    %s69 = sphi 0, %s69
    %s71 = sphi 0, %s69
    %s72 = sphi 0, %s71
    %s86 = sphi 0, %s72
    %s90 = sphi 0, %s90
    %s92 = sphi 0, %s90
    %s93 = sphi 0, %s92
    %s107 = sphi 0, %s93
    %s111 = sphi 0, %s111
    %s113 = sphi 0, %s111
    %s114 = sphi 0, %s113
    %s128 = sphi 0, %s114
    %s132 = sphi 0, %s132
    %s134 = sphi 0, %s132
    %s135 = sphi 0, %s134
    %s149 = sphi 0, %s135
    %s153 = sphi 0, %s153
    %s155 = sphi 0, %s153
    %s156 = sphi 0, %s155
    %s170 = sphi 0, %s156
    %s174 = sphi 0, %s174
    %s176 = sphi 0, %s174
    %s177 = sphi 0, %s176
    %s191 = sphi 0, %s177
    %s197 = sphi 0, %s199
    %s200 = sphi 0, %s197
    %s201 = sphi 0, %s200
    %s217 = sphi 0, %s201
  $region4: #{resnext_inconv_forward.1} parent=0 // loop_header_branch
    %17 = sbr.rel (%p15) target = $region8
  $region5: #{resnext_inconv_forward.1} parent=0 // loop_body
    %s19 = ssub.s32 %s14, 1
    %s20 = ssub.s32 %s14, 2
    %s21 = sadd.s32 %s14, 1
    %s22 = ssub.s32 %s14, %s21
    %p23 = scmp.eq.s32.totalorder %s22, 0
    %s25 = sadd.s32 %s24, 1
    %s26 = scalar_select %p23, %s24, %s25
    %p29 = pneg %p23
    %p30 = scmp.eq.s32.totalorder %s14, 1
    %p31 = por %p29, %p30
    %p32 = scmp.ne.s32.totalorder %s24, %s27
    %p33 = scmp.eq.s32.totalorder %s14, 0
    %p34 = por %p32, %p33
    %p35 = scmp.ne.s32.totalorder %s24, %s27
    %p36 = scmp.eq.s32.totalorder %s19, 1
    %p37 = por %p35, %p36
    %p38 = scmp.ne.s32.totalorder %s27, %s28
    %p39 = scmp.eq.s32.totalorder %s19, 0
    %p40 = por %p38, %p39
    %p41 = scmp.ne.s32.totalorder %s27, %s28
    %p42 = scmp.eq.s32.totalorder %s20, 1
    %p43 = por %p41, %p42
    %p45 = scmp.ne.s32.totalorder %s28, %s44
    %p46 = scmp.eq.s32.totalorder %s20, 0
    %p47 = por %p45, %p46
    %s49 = sadd.s32 %s48, 1
    %p52 = scmp.eq.s32.totalorder %s14, 1
    %p53 = scmp.ne.s32.totalorder %s48, %s50
    %p54 = scmp.eq.s32.totalorder %s14, 0
    %p55 = por %p53, %p54
    %p56 = scmp.ne.s32.totalorder %s48, %s50
    %p57 = scmp.eq.s32.totalorder %s19, 1
    %p58 = por %p56, %p57
    %p59 = scmp.ne.s32.totalorder %s50, %s51
    %p60 = scmp.eq.s32.totalorder %s19, 0
    %p61 = por %p59, %p60
    %p62 = scmp.ne.s32.totalorder %s50, %s51
    %p63 = scmp.eq.s32.totalorder %s20, 1
    %p64 = por %p62, %p63
    %p66 = scmp.ne.s32.totalorder %s51, %s65
    %p67 = scmp.eq.s32.totalorder %s20, 0
    %p68 = por %p66, %p67
    %s70 = sadd.s32 %s69, 1
    %p73 = scmp.eq.s32.totalorder %s14, 1
    %p74 = scmp.ne.s32.totalorder %s69, %s71
    %p75 = scmp.eq.s32.totalorder %s14, 0
    %p76 = por %p74, %p75
    %p77 = scmp.ne.s32.totalorder %s69, %s71
    %p78 = scmp.eq.s32.totalorder %s19, 1
    %p79 = por %p77, %p78
    %p80 = scmp.ne.s32.totalorder %s71, %s72
    %p81 = scmp.eq.s32.totalorder %s19, 0
    %p82 = por %p80, %p81
    %p83 = scmp.ne.s32.totalorder %s71, %s72
    %p84 = scmp.eq.s32.totalorder %s20, 1
    %p85 = por %p83, %p84
    %p87 = scmp.ne.s32.totalorder %s72, %s86
    %p88 = scmp.eq.s32.totalorder %s20, 0
    %p89 = por %p87, %p88
    %s91 = sadd.s32 %s90, 1
    %p94 = scmp.eq.s32.totalorder %s14, 1
    %p95 = scmp.ne.s32.totalorder %s90, %s92
    %p96 = scmp.eq.s32.totalorder %s14, 0
    %p97 = por %p95, %p96
    %p98 = scmp.ne.s32.totalorder %s90, %s92
    %p99 = scmp.eq.s32.totalorder %s19, 1
    %p100 = por %p98, %p99
    %p101 = scmp.ne.s32.totalorder %s92, %s93
    %p102 = scmp.eq.s32.totalorder %s19, 0
    %p103 = por %p101, %p102
    %p104 = scmp.ne.s32.totalorder %s92, %s93
    %p105 = scmp.eq.s32.totalorder %s20, 1
    %p106 = por %p104, %p105
    %p108 = scmp.ne.s32.totalorder %s93, %s107
    %p109 = scmp.eq.s32.totalorder %s20, 0
    %p110 = por %p108, %p109
    %s112 = sadd.s32 %s111, 1
    %p115 = scmp.eq.s32.totalorder %s14, 1
    %p116 = scmp.ne.s32.totalorder %s111, %s113
    %p117 = scmp.eq.s32.totalorder %s14, 0
    %p118 = por %p116, %p117
    %p119 = scmp.ne.s32.totalorder %s111, %s113
    %p120 = scmp.eq.s32.totalorder %s19, 1
    %p121 = por %p119, %p120
    %p122 = scmp.ne.s32.totalorder %s113, %s114
    %p123 = scmp.eq.s32.totalorder %s19, 0
    %p124 = por %p122, %p123
    %p125 = scmp.ne.s32.totalorder %s113, %s114
    %p126 = scmp.eq.s32.totalorder %s20, 1
    %p127 = por %p125, %p126
    %p129 = scmp.ne.s32.totalorder %s114, %s128
    %p130 = scmp.eq.s32.totalorder %s20, 0
    %p131 = por %p129, %p130
    %s133 = sadd.s32 %s132, 1
    %p136 = scmp.eq.s32.totalorder %s14, 1
    %p137 = scmp.ne.s32.totalorder %s132, %s134
    %p138 = scmp.eq.s32.totalorder %s14, 0
    %p139 = por %p137, %p138
    %p140 = scmp.ne.s32.totalorder %s132, %s134
    %p141 = scmp.eq.s32.totalorder %s19, 1
    %p142 = por %p140, %p141
    %p143 = scmp.ne.s32.totalorder %s134, %s135
    %p144 = scmp.eq.s32.totalorder %s19, 0
    %p145 = por %p143, %p144
    %p146 = scmp.ne.s32.totalorder %s134, %s135
    %p147 = scmp.eq.s32.totalorder %s20, 1
    %p148 = por %p146, %p147
    %p150 = scmp.ne.s32.totalorder %s135, %s149
    %p151 = scmp.eq.s32.totalorder %s20, 0
    %p152 = por %p150, %p151
    %s154 = sadd.s32 %s153, 1
    %p157 = scmp.eq.s32.totalorder %s14, 1
    %p158 = scmp.ne.s32.totalorder %s153, %s155
    %p159 = scmp.eq.s32.totalorder %s14, 0
    %p160 = por %p158, %p159
    %p161 = scmp.ne.s32.totalorder %s153, %s155
    %p162 = scmp.eq.s32.totalorder %s19, 1
    %p163 = por %p161, %p162
    %p164 = scmp.ne.s32.totalorder %s155, %s156
    %p165 = scmp.eq.s32.totalorder %s19, 0
    %p166 = por %p164, %p165
    %p167 = scmp.ne.s32.totalorder %s155, %s156
    %p168 = scmp.eq.s32.totalorder %s20, 1
    %p169 = por %p167, %p168
    %p171 = scmp.ne.s32.totalorder %s156, %s170
    %p172 = scmp.eq.s32.totalorder %s20, 0
    %p173 = por %p171, %p172
    %s175 = sadd.s32 %s174, 1
    %p178 = scmp.eq.s32.totalorder %s14, 1
    %p179 = scmp.ne.s32.totalorder %s174, %s176
    %p180 = scmp.eq.s32.totalorder %s14, 0
    %p181 = por %p179, %p180
    %p182 = scmp.ne.s32.totalorder %s174, %s176
    %p183 = scmp.eq.s32.totalorder %s19, 1
    %p184 = por %p182, %p183
    %p185 = scmp.ne.s32.totalorder %s176, %s177
    %p186 = scmp.eq.s32.totalorder %s19, 0
    %p187 = por %p185, %p186
    %p188 = scmp.ne.s32.totalorder %s176, %s177
    %p189 = scmp.eq.s32.totalorder %s20, 1
    %p190 = por %p188, %p189
    %p192 = scmp.ne.s32.totalorder %s177, %s191
    %p193 = scmp.eq.s32.totalorder %s20, 0
    %p194 = por %p192, %p193
    %s195 = ssub.s32 %s14, %s21
    %p196 = scmp.eq.s32.totalorder %s195, 0
    %s198 = sadd.s32 %s197, 1
    %s199 = scalar_select %p196, %s197, %s198
    %p202 = pneg %p196
    %p203 = scmp.eq.s32.totalorder %s14, 1
    %p204 = por %p202, %p203
    %p205 = scmp.ne.s32.totalorder %s197, %s200
    %p206 = scmp.eq.s32.totalorder %s14, 0
    %p207 = por %p205, %p206
    %p208 = scmp.ne.s32.totalorder %s197, %s200
    %p209 = scmp.eq.s32.totalorder %s19, 1
    %p210 = por %p208, %p209
    %p211 = scmp.ne.s32.totalorder %s200, %s201
    %p212 = scmp.eq.s32.totalorder %s19, 0
    %p213 = por %p211, %p212
    %p214 = scmp.ne.s32.totalorder %s200, %s201
    %p215 = scmp.eq.s32.totalorder %s20, 1
    %p216 = por %p214, %p215
    %p218 = scmp.ne.s32.totalorder %s201, %s217
    %p219 = scmp.eq.s32.totalorder %s20, 0
    %p220 = por %p218, %p219
    %p221 = scmp.le.s32.totalorder 1, %s14
    %p222 = scmp.lt.s32.totalorder %s14, 3
    %p223 = pnand %p221, %p222
    %p224 = pneg %p223
    // Predicated region
    $region9: #{resnext_inconv_forward.1} parent=5 // pred_check
      _
    $region10: #{resnext_inconv_forward.1} parent=5 // pred_check_branch
      %226 = sbr.rel (%p223) target = $region12
    $region11: #{resnext_inconv_forward.1} parent=5 // pred_region
      %s227 = ssub.s32 %s14, 1
      // Predicated region
      $region13: #{resnext_inconv_forward.1} parent=11 // pred_check
        %p228 = pneg %p61
      $region14: #{resnext_inconv_forward.1} parent=11 // pred_check_branch
        %230 = sbr.rel (%p228) target = $region16
      $region15: #{resnext_inconv_forward.1} parent=11 // pred_region
        _
      $region16: #{resnext_inconv_forward.1} parent=11 // pred_fallthru
        _
      // Predicated region
      $region17: #{resnext_inconv_forward.1} parent=11 // pred_check
        %p231 = pneg %p82
      $region18: #{resnext_inconv_forward.1} parent=11 // pred_check_branch
        %233 = sbr.rel (%p231) target = $region20
      $region19: #{resnext_inconv_forward.1} parent=11 // pred_region
        _
      $region20: #{resnext_inconv_forward.1} parent=11 // pred_fallthru
        _
      // Predicated region
      $region21: #{resnext_inconv_forward.1} parent=11 // pred_check
        %p234 = pneg %p103
      $region22: #{resnext_inconv_forward.1} parent=11 // pred_check_branch
        %236 = sbr.rel (%p234) target = $region24
      $region23: #{resnext_inconv_forward.1} parent=11 // pred_region
        _
      $region24: #{resnext_inconv_forward.1} parent=11 // pred_fallthru
        _
      // Predicated region
      $region25: #{resnext_inconv_forward.1} parent=11 // pred_check
        %p237 = pneg %p124
      $region26: #{resnext_inconv_forward.1} parent=11 // pred_check_branch
        %239 = sbr.rel (%p237) target = $region28
      $region27: #{resnext_inconv_forward.1} parent=11 // pred_region
        _
      $region28: #{resnext_inconv_forward.1} parent=11 // pred_fallthru
        _
      // Predicated region
      $region29: #{resnext_inconv_forward.1} parent=11 // pred_check
        %p240 = pneg %p145
      $region30: #{resnext_inconv_forward.1} parent=11 // pred_check_branch
        %242 = sbr.rel (%p240) target = $region32
      $region31: #{resnext_inconv_forward.1} parent=11 // pred_region
        _
      $region32: #{resnext_inconv_forward.1} parent=11 // pred_fallthru
        _
      // Predicated region
      $region33: #{resnext_inconv_forward.1} parent=11 // pred_check
        %p243 = pneg %p166
      $region34: #{resnext_inconv_forward.1} parent=11 // pred_check_branch
        %245 = sbr.rel (%p243) target = $region36
      $region35: #{resnext_inconv_forward.1} parent=11 // pred_region
        _
      $region36: #{resnext_inconv_forward.1} parent=11 // pred_fallthru
        _
      // Predicated region
      $region37: #{resnext_inconv_forward.1} parent=11 // pred_check
        %p246 = pneg %p187
      $region38: #{resnext_inconv_forward.1} parent=11 // pred_check_branch
        %248 = sbr.rel (%p246) target = $region40
      $region39: #{resnext_inconv_forward.1} parent=11 // pred_region
        _
      $region40: #{resnext_inconv_forward.1} parent=11 // pred_fallthru
        _
    $region12: #{resnext_inconv_forward.1} parent=5 // pred_fallthru
      _
    %p249 = scmp.lt.s32.totalorder %s14, 2
    // Predicated region
    $region41: #{resnext_inconv_forward.1} parent=5 // pred_check
      %p250 = pneg %p249
    $region42: #{resnext_inconv_forward.1} parent=5 // pred_check_branch
      %252 = sbr.rel (%p250) target = $region44
    $region43: #{resnext_inconv_forward.1} parent=5 // pred_region
      // Predicated region
      $region45: #{resnext_inconv_forward.1} parent=43 // pred_check
        %p253 = pneg %p34
      $region46: #{resnext_inconv_forward.1} parent=43 // pred_check_branch
        %255 = sbr.rel (%p253) target = $region48
      $region47: #{resnext_inconv_forward.1} parent=43 // pred_region
        %p256 = scmp.lt.s32.totalorder %s14, 1
        %s257 = scalar_select %p256, %s14, 1
        %s258 = smul.addr %s257, 41
        %s259 = smul.addr %s258, 4
        %s260 = scalar_lea.vmem %s0, %s259
      $region48: #{resnext_inconv_forward.1} parent=43 // pred_fallthru
        _
    $region44: #{resnext_inconv_forward.1} parent=5 // pred_fallthru
      _
    %p261 = scmp.le.s32.totalorder 1, %s14
    %p262 = scmp.lt.s32.totalorder %s14, 3
    %p263 = pnand %p261, %p262
    %p264 = pneg %p263
    // Predicated region
    $region49: #{resnext_inconv_forward.1} parent=5 // pred_check
      _
    $region50: #{resnext_inconv_forward.1} parent=5 // pred_check_branch
      %266 = sbr.rel (%p263) target = $region52
    $region51: #{resnext_inconv_forward.1} parent=5 // pred_region
      %s267 = ssub.s32 %s14, 1
      %p268 = scmp.lt.s32.totalorder %s19, 1
      %s269 = scalar_select %p268, %s19, 1
      %s270 = smul.addr %s269, 41
      %s271 = smul.addr %s270, 4
      %s272 = scalar_lea.vmem %s0, %s271
      %p273 = pneg %p40
      %p274 = pneg %p37
      %p275 = pneg %p61
      %p276 = pneg %p58
      %p277 = pneg %p82
      %p278 = pneg %p79
      %p279 = pneg %p103
      %p280 = pneg %p100
      %p281 = pneg %p124
      %p282 = pneg %p121
      %p283 = pneg %p145
      %p284 = pneg %p142
      %p285 = pneg %p166
      %p286 = pneg %p163
      %p287 = pneg %p187
      %p288 = pneg %p184
      %p289 = pneg %p213
      %p290 = pneg %p210
      %p291 = scmp.lt.s32.totalorder %s19, 1
      %s292 = scalar_select %p291, %s19, 1
      %s293 = smul.addr %s292, 41
      %s294 = smul.addr %s293, 8
      %s295 = scalar_lea.vmem %s8, %s294
      %p296 = scmp.lt.s32.totalorder %s19, 1
      %s297 = scalar_select %p296, %s19, 1
      %s298 = smul.addr %s297, 41
      %s299 = smul.addr %s298, 4
      %s300 = scalar_lea.vmem %s0, %s299
      %p301 = scmp.lt.s32.totalorder %s19, 1
      %s302 = scalar_select %p301, %s19, 1
      %s303 = smul.addr %s302, 41
      %s304 = smul.addr %s303, 8
      %s305 = scalar_lea.vmem %s8, %s304
      %v307 = vld [vmem:[%s300] sm:$0xf]
      %v308 = vld [vmem:[%s300 + $0x4] sm:$0xf]
      %v309 = vld [vmem:[%s300 + $0x8] sm:$0xf]
      %v310 = vld [vmem:[%s300 + $0xc] sm:$0xf]
      %v311 = vld [vmem:[%s300 + $0x10] sm:$0xf]
      %v312 = vld [vmem:[%s300 + $0x14] sm:$0xf]
      %v313 = vld [vmem:[%s300 + $0x18] sm:$0xf]
      %v314 = vld [vmem:[%s300 + $0x1c] sm:$0xf]
      %v315 = vld [vmem:[%s300 + $0x20] sm:$0xf]
      %v316 = vld [vmem:[%s300 + $0x24] sm:$0xf]
      %v317 = vld [vmem:[%s300 + $0x28] sm:$0xf]
      %v318 = vld [vmem:[%s300 + $0x2c] sm:$0xf]
      %v319 = vld [vmem:[%s300 + $0x30] sm:$0xf]
      %v320 = vld [vmem:[%s300 + $0x34] sm:$0xf]
      %v321 = vld [vmem:[%s300 + $0x38] sm:$0xf]
      %v322 = vld [vmem:[%s300 + $0x3c] sm:$0xf]
      %v323 = vld [vmem:[%s300 + $0x40] sm:$0xf]
      %v324 = vld [vmem:[%s300 + $0x44] sm:$0xf]
      %v325 = vld [vmem:[%s300 + $0x48] sm:$0xf]
      %v326 = vld [vmem:[%s300 + $0x4c] sm:$0xf]
      %v327 = vld [vmem:[%s300 + $0x50] sm:$0xf]
      %v328 = vld [vmem:[%s300 + $0x54] sm:$0xf]
      %v329 = vld [vmem:[%s300 + $0x58] sm:$0xf]
      %v330 = vld [vmem:[%s300 + $0x5c] sm:$0xf]
      %v331 = vld [vmem:[%s300 + $0x60] sm:$0xf]
      %v332 = vld [vmem:[%s300 + $0x64] sm:$0xf]
      %v333 = vld [vmem:[%s300 + $0x68] sm:$0xf]
      %v334 = vld [vmem:[%s300 + $0x6c] sm:$0xf]
      %v335 = vld [vmem:[%s300 + $0x70] sm:$0xf]
      %v336 = vld [vmem:[%s300 + $0x74] sm:$0xf]
      %v337 = vld [vmem:[%s300 + $0x78] sm:$0xf]
      %v338 = vld [vmem:[%s300 + $0x7c] sm:$0xf]
      %v339 = vld [vmem:[%s300 + $0x80] sm:$0xf]
      %v340 = vld [vmem:[%s300 + $0x84] sm:$0xf]
      %v341 = vld [vmem:[%s300 + $0x88] sm:$0xf]
      %v342 = vld [vmem:[%s300 + $0x8c] sm:$0xf]
      %v343 = vld [vmem:[%s300 + $0x90] sm:$0xf]
      %v344 = vld [vmem:[%s300 + $0x94] sm:$0xf]
      %v345 = vld [vmem:[%s300 + $0x98] sm:$0xf]
      %v346 = vld [vmem:[%s300 + $0x9c] sm:$0xf]
      %v347 = vld [vmem:[%s300 + $0xa0] sm:$0x3]
      %v348 = vld [vmem:[%s1] sm:$0xff]
      %v349 = vld [vmem:[%s1 + $0x8] sm:$0xff]
      %v350 = vld [vmem:[%s1 + $0x10] sm:$0xff]
      %v351 = vld [vmem:[%s1 + $0x18] sm:$0xff]
      %v352 = vld [vmem:[%s1 + $0x20] sm:$0xff]
      %v353 = vld [vmem:[%s1 + $0x28] sm:$0xff]
      %v354 = vld [vmem:[%s1 + $0x30] sm:$0xff]
      %v355 = vld [vmem:[%s1 + $0x38] sm:$0xff]
      %v356 = vld [vmem:[%s1 + $0x40] sm:$0xff]
      %v357 = vld [vmem:[%s1 + $0x48] sm:$0xff]
      %v358 = vld [vmem:[%s1 + $0x50] sm:$0xff]
      %v359 = vld [vmem:[%s1 + $0x58] sm:$0xff]
      %v360 = vld [vmem:[%s1 + $0x60] sm:$0xff]
      %v361 = vld [vmem:[%s1 + $0x68] sm:$0xff]
      %v362 = vld [vmem:[%s1 + $0x70] sm:$0xff]
      %v363 = vld [vmem:[%s1 + $0x78] sm:$0xff]
      %v364 = vld [vmem:[%s1 + $0x80] sm:$0xff]
      %v365 = vld [vmem:[%s1 + $0x88] sm:$0xff]
      %v366 = vld [vmem:[%s1 + $0x90] sm:$0xff]
      %v367 = vld [vmem:[%s1 + $0x98] sm:$0xff]
      %v368 = vld [vmem:[%s1 + $0xa0] sm:$0xff]
      %v369 = vld [vmem:[%s1 + $0xa8] sm:$0xff]
      %v370 = vld [vmem:[%s1 + $0xb0] sm:$0xff]
      %v371 = vld [vmem:[%s1 + $0xb8] sm:$0xff]
      %v372 = vld [vmem:[%s1 + $0xc0] sm:$0xff]
      %v373 = vld [vmem:[%s1 + $0xc8] sm:$0xff]
      %v374 = vld [vmem:[%s1 + $0xd0] sm:$0xff]
      %v375 = vld [vmem:[%s1 + $0xd8] sm:$0xff]
      %v376 = vld [vmem:[%s1 + $0xe0] sm:$0xff]
      %v377 = vld [vmem:[%s1 + $0xe8] sm:$0xff]
      %v378 = vld [vmem:[%s1 + $0xf0] sm:$0xff]
      %v379 = vld [vmem:[%s1 + $0xf8] sm:$0xff]
      %v380 = vld [vmem:[%s1 + $0x100] sm:$0xff]
      %v381 = vld [vmem:[%s1 + $0x108] sm:$0xff]
      %v382 = vld [vmem:[%s1 + $0x110] sm:$0xff]
      %v383 = vld [vmem:[%s1 + $0x118] sm:$0xff]
      %v384 = vld [vmem:[%s1 + $0x120] sm:$0xff]
      %v385 = vld [vmem:[%s1 + $0x128] sm:$0xff]
      %v386 = vld [vmem:[%s1 + $0x130] sm:$0xff]
      %v387 = vld [vmem:[%s1 + $0x138] sm:$0xff]
      %v388 = vld [vmem:[%s1 + $0x140] sm:$0xf]
      %v389 = vld [vmem:[%s2] sm:$0xf]
      %v431 = vunpack.c.l.b16 %v307
      %v432 = vunpack.c.l.b16 %v308
      %v433 = vunpack.c.l.b16 %v309
      %v434 = vunpack.c.l.b16 %v310
      %v435 = vunpack.c.l.b16 %v311
      %v436 = vunpack.c.l.b16 %v312
      %v437 = vunpack.c.l.b16 %v313
      %v438 = vunpack.c.l.b16 %v314
      %v439 = vunpack.c.l.b16 %v315
      %v440 = vunpack.c.l.b16 %v316
      %v441 = vunpack.c.l.b16 %v317
      %v442 = vunpack.c.l.b16 %v318
      %v443 = vunpack.c.l.b16 %v319
      %v444 = vunpack.c.l.b16 %v320
      %v445 = vunpack.c.l.b16 %v321
      %v446 = vunpack.c.l.b16 %v322
      %v447 = vunpack.c.l.b16 %v323
      %v448 = vunpack.c.l.b16 %v324
      %v449 = vunpack.c.l.b16 %v325
      %v450 = vunpack.c.l.b16 %v326
      %v451 = vunpack.c.l.b16 %v327
      %v452 = vunpack.c.l.b16 %v328
      %v453 = vunpack.c.l.b16 %v329
      %v454 = vunpack.c.l.b16 %v330
      %v455 = vunpack.c.l.b16 %v331
      %v456 = vunpack.c.l.b16 %v332
      %v457 = vunpack.c.l.b16 %v333
      %v458 = vunpack.c.l.b16 %v334
      %v459 = vunpack.c.l.b16 %v335
      %v460 = vunpack.c.l.b16 %v336
      %v461 = vunpack.c.l.b16 %v337
      %v462 = vunpack.c.l.b16 %v338
      %v463 = vunpack.c.l.b16 %v339
      %v464 = vunpack.c.l.b16 %v340
      %v465 = vunpack.c.l.b16 %v341
      %v466 = vunpack.c.l.b16 %v342
      %v467 = vunpack.c.l.b16 %v343
      %v468 = vunpack.c.l.b16 %v344
      %v469 = vunpack.c.l.b16 %v345
      %v470 = vunpack.c.l.b16 %v346
      %v471 = vunpack.c.l.b16 %v347
      %v472 = vpack.c.b16 %v432, %v431
      %v473 = vpack.c.b16 %v434, %v433
      %v474 = vpack.c.b16 %v436, %v435
      %v475 = vpack.c.b16 %v438, %v437
      %v476 = vpack.c.b16 %v440, %v439
      %v477 = vpack.c.b16 %v442, %v441
      %v478 = vpack.c.b16 %v444, %v443
      %v479 = vpack.c.b16 %v446, %v445
      %v480 = vpack.c.b16 %v448, %v447
      %v481 = vpack.c.b16 %v450, %v449
      %v482 = vpack.c.b16 %v452, %v451
      %v483 = vpack.c.b16 %v454, %v453
      %v484 = vpack.c.b16 %v456, %v455
      %v485 = vpack.c.b16 %v458, %v457
      %v486 = vpack.c.b16 %v460, %v459
      %v487 = vpack.c.b16 %v462, %v461
      %v488 = vpack.c.b16 %v464, %v463
      %v489 = vpack.c.b16 %v466, %v465
      %v490 = vpack.c.b16 %v468, %v467
      %v491 = vpack.c.b16 %v470, %v469
      %v492 = vpack.c.b16 %v471, %v471
      %v495 = vunpack.c.l.s4 1983009808
      %v496 = vunpack.c.0.s8 %v495
      %v497 = vlaneseq
      %v498 = vshrl.u32 %v497, 7
      %v499 = vsub.s32 %v496, %v498
      %v500 = vrot.slane %v389, %v499
      %v501 = vcombine.high %v500, %v500
      %vm502 = vcmask 31744
      %v504 = vsel %vm502, %v472, 0
      %v507 = vsel %vm502, %v473, 0
      %v510 = vsel %vm502, %v474, 0
      %v513 = vsel %vm502, %v475, 0
      %v516 = vsel %vm502, %v476, 0
      %v519 = vsel %vm502, %v477, 0
      %v522 = vsel %vm502, %v478, 0
      %v525 = vsel %vm502, %v479, 0
      %v528 = vsel %vm502, %v480, 0
      %v531 = vsel %vm502, %v481, 0
      %v534 = vsel %vm502, %v482, 0
      %v537 = vsel %vm502, %v483, 0
      %v540 = vsel %vm502, %v484, 0
      %v543 = vsel %vm502, %v485, 0
      %v546 = vsel %vm502, %v486, 0
      %v549 = vsel %vm502, %v487, 0
      %v552 = vsel %vm502, %v488, 0
      %v555 = vsel %vm502, %v489, 0
      %v558 = vsel %vm502, %v490, 0
      %v561 = vsel %vm502, %v491, 0
      %v564 = vsel %vm502, %v492, 0
      %vm566 = vcmask 1041408
      %v568 = vsel %vm566, %v500, 0
      %v571 = vsel %vm566, %v501, 0
      %573 = vmatprep.subr.bf16.mxu0 0
      %574 = vmatpush1.bf16.msra.mxu0 0
      %575 = vmatprep.subr.bf16.mxu0 0
      %576 = vmatpush1.bf16.msra.mxu0 0
      %577 = vmatprep.subr.bf16.mxu0 0
      %578 = vmatpush1.bf16.msra.mxu0 0
      %579 = vmatprep.subr.bf16.mxu0 0
      %580 = vmatpush1.bf16.msra.mxu0 0
      %581 = vmatprep.subr.bf16.mxu0 0
      %582 = vmatpush1.bf16.msra.mxu0 0
      %583 = vmatprep.subr.bf16.mxu0 0
      %584 = vmatpush1.bf16.msra.mxu0 0
      %585 = vmatprep.subr.bf16.mxu0 0
      %586 = vmatpush1.bf16.msra.mxu0 0
      %587 = vmatprep.subr.bf16.mxu0 %v571
      %588 = vmatpush1.bf16.msra.mxu0 %v568
      %589 = vmatprep.subr.bf16.mxu0 0
      %590 = vmatpush2.bf16.msra.mxu0 0
      %591 = vmatprep.subr.bf16.mxu0 0
      %592 = vmatpush2.bf16.msra.mxu0 0
      %593 = vmatprep.subr.bf16.mxu0 0
      %594 = vmatpush2.bf16.msra.mxu0 0
      %595 = vmatprep.subr.bf16.mxu0 0
      %596 = vmatpush2.bf16.msra.mxu0 0
      %597 = vmatprep.subr.bf16.mxu0 0
      %598 = vmatpush2.bf16.msra.mxu0 0
      %599 = vmatprep.subr.bf16.mxu0 0
      %600 = vmatpush2.bf16.msra.mxu0 0
      %601 = vmatprep.subr.bf16.mxu0 0
      %602 = vmatpush2.bf16.msra.mxu0 0
      %603 = vmatprep.subr.bf16.mxu0 0
      %604 = vmatpush2.bf16.msra.mxu0 0
      %605 = vmatprep.mubr.bf16.mxu0 0
      %606 = vmatmul.mubr.bf16.gmra.mxu0 %v504
      %v607 = vpop.f32.mrf.mxu0
      %v608 = vadd.f32 0.0, %v607
      %v609 = vpop.f32.mrf.mxu0
      %v610 = vadd.f32 0.0, %v609
      %v611 = vpop.f32.mrf.mxu0
      %v612 = vadd.f32 0.0, %v611
      %v613 = vpop.f32.mrf.mxu0
      %v614 = vadd.f32 0.0, %v613
      %615 = vmatprep.mubr.bf16.mxu0 0
      %616 = vmatmul.mubr.bf16.gmra.mxu0 %v507
      %v617 = vpop.f32.mrf.mxu0
      %v618 = vadd.f32 0.0, %v617
      %v619 = vpop.f32.mrf.mxu0
      %v620 = vadd.f32 0.0, %v619
      %v621 = vpop.f32.mrf.mxu0
      %v622 = vadd.f32 0.0, %v621
      %v623 = vpop.f32.mrf.mxu0
      %v624 = vadd.f32 0.0, %v623
      %625 = vmatprep.mubr.bf16.mxu0 0
      %626 = vmatmul.mubr.bf16.gmra.mxu0 %v510
      %v627 = vpop.f32.mrf.mxu0
      %v628 = vadd.f32 0.0, %v627
      %v629 = vpop.f32.mrf.mxu0
      %v630 = vadd.f32 0.0, %v629
      %v631 = vpop.f32.mrf.mxu0
      %v632 = vadd.f32 0.0, %v631
      %v633 = vpop.f32.mrf.mxu0
      %v634 = vadd.f32 0.0, %v633
      %635 = vmatprep.mubr.bf16.mxu0 0
      %636 = vmatmul.mubr.bf16.gmra.mxu0 %v513
      %v637 = vpop.f32.mrf.mxu0
      %v638 = vadd.f32 0.0, %v637
      %v639 = vpop.f32.mrf.mxu0
      %v640 = vadd.f32 0.0, %v639
      %v641 = vpop.f32.mrf.mxu0
      %v642 = vadd.f32 0.0, %v641
      %v643 = vpop.f32.mrf.mxu0
      %v644 = vadd.f32 0.0, %v643
      %645 = vmatprep.mubr.bf16.mxu0 0
      %646 = vmatmul.mubr.bf16.gmra.mxu0 %v516
      %v647 = vpop.f32.mrf.mxu0
      %v648 = vadd.f32 0.0, %v647
      %v649 = vpop.f32.mrf.mxu0
      %v650 = vadd.f32 0.0, %v649
      %v651 = vpop.f32.mrf.mxu0
      %v652 = vadd.f32 0.0, %v651
      %v653 = vpop.f32.mrf.mxu0
      %v654 = vadd.f32 0.0, %v653
      %655 = vmatprep.mubr.bf16.mxu0 0
      %656 = vmatmul.mubr.bf16.gmra.mxu0 %v519
      %v657 = vpop.f32.mrf.mxu0
      %v658 = vadd.f32 0.0, %v657
      %v659 = vpop.f32.mrf.mxu0
      %v660 = vadd.f32 0.0, %v659
      %v661 = vpop.f32.mrf.mxu0
      %v662 = vadd.f32 0.0, %v661
      %v663 = vpop.f32.mrf.mxu0
      %v664 = vadd.f32 0.0, %v663
      %665 = vmatprep.mubr.bf16.mxu0 0
      %666 = vmatmul.mubr.bf16.gmra.mxu0 %v522
      %v667 = vpop.f32.mrf.mxu0
      %v668 = vadd.f32 0.0, %v667
      %v669 = vpop.f32.mrf.mxu0
      %v670 = vadd.f32 0.0, %v669
      %v671 = vpop.f32.mrf.mxu0
      %v672 = vadd.f32 0.0, %v671
      %v673 = vpop.f32.mrf.mxu0
      %v674 = vadd.f32 0.0, %v673
      %675 = vmatprep.mubr.bf16.mxu0 0
      %676 = vmatmul.mubr.bf16.gmra.mxu0 %v525
      %v677 = vpop.f32.mrf.mxu0
      %v678 = vadd.f32 0.0, %v677
      %v679 = vpop.f32.mrf.mxu0
      %v680 = vadd.f32 0.0, %v679
      %v681 = vpop.f32.mrf.mxu0
      %v682 = vadd.f32 0.0, %v681
      %v683 = vpop.f32.mrf.mxu0
      %v684 = vadd.f32 0.0, %v683
      %685 = vmatprep.mubr.bf16.mxu0 0
      %686 = vmatmul.mubr.bf16.gmra.mxu0 %v528
      %v687 = vpop.f32.mrf.mxu0
      %v688 = vadd.f32 0.0, %v687
      %v689 = vpop.f32.mrf.mxu0
      %v690 = vadd.f32 0.0, %v689
      %v691 = vpop.f32.mrf.mxu0
      %v692 = vadd.f32 0.0, %v691
      %v693 = vpop.f32.mrf.mxu0
      %v694 = vadd.f32 0.0, %v693
      %695 = vmatprep.mubr.bf16.mxu0 0
      %696 = vmatmul.mubr.bf16.gmra.mxu0 %v531
      %v697 = vpop.f32.mrf.mxu0
      %v698 = vadd.f32 0.0, %v697
      %v699 = vpop.f32.mrf.mxu0
      %v700 = vadd.f32 0.0, %v699
      %v701 = vpop.f32.mrf.mxu0
      %v702 = vadd.f32 0.0, %v701
      %v703 = vpop.f32.mrf.mxu0
      %v704 = vadd.f32 0.0, %v703
      %705 = vmatprep.mubr.bf16.mxu0 0
      %706 = vmatmul.mubr.bf16.gmra.mxu0 %v534
      %v707 = vpop.f32.mrf.mxu0
      %v708 = vadd.f32 0.0, %v707
      %v709 = vpop.f32.mrf.mxu0
      %v710 = vadd.f32 0.0, %v709
      %v711 = vpop.f32.mrf.mxu0
      %v712 = vadd.f32 0.0, %v711
      %v713 = vpop.f32.mrf.mxu0
      %v714 = vadd.f32 0.0, %v713
      %715 = vmatprep.mubr.bf16.mxu0 0
      %716 = vmatmul.mubr.bf16.gmra.mxu0 %v537
      %v717 = vpop.f32.mrf.mxu0
      %v718 = vadd.f32 0.0, %v717
      %v719 = vpop.f32.mrf.mxu0
      %v720 = vadd.f32 0.0, %v719
      %v721 = vpop.f32.mrf.mxu0
      %v722 = vadd.f32 0.0, %v721
      %v723 = vpop.f32.mrf.mxu0
      %v724 = vadd.f32 0.0, %v723
      %725 = vmatprep.mubr.bf16.mxu0 0
      %726 = vmatmul.mubr.bf16.gmra.mxu0 %v540
      %v727 = vpop.f32.mrf.mxu0
      %v728 = vadd.f32 0.0, %v727
      %v729 = vpop.f32.mrf.mxu0
      %v730 = vadd.f32 0.0, %v729
      %v731 = vpop.f32.mrf.mxu0
      %v732 = vadd.f32 0.0, %v731
      %v733 = vpop.f32.mrf.mxu0
      %v734 = vadd.f32 0.0, %v733
      %735 = vmatprep.mubr.bf16.mxu0 0
      %736 = vmatmul.mubr.bf16.gmra.mxu0 %v543
      %v737 = vpop.f32.mrf.mxu0
      %v738 = vadd.f32 0.0, %v737
      %v739 = vpop.f32.mrf.mxu0
      %v740 = vadd.f32 0.0, %v739
      %v741 = vpop.f32.mrf.mxu0
      %v742 = vadd.f32 0.0, %v741
      %v743 = vpop.f32.mrf.mxu0
      %v744 = vadd.f32 0.0, %v743
      %745 = vmatprep.mubr.bf16.mxu0 0
      %746 = vmatmul.mubr.bf16.gmra.mxu0 %v546
      %v747 = vpop.f32.mrf.mxu0
      %v748 = vadd.f32 0.0, %v747
      %v749 = vpop.f32.mrf.mxu0
      %v750 = vadd.f32 0.0, %v749
      %v751 = vpop.f32.mrf.mxu0
      %v752 = vadd.f32 0.0, %v751
      %v753 = vpop.f32.mrf.mxu0
      %v754 = vadd.f32 0.0, %v753
      %755 = vmatprep.mubr.bf16.mxu0 0
      %756 = vmatmul.mubr.bf16.gmra.mxu0 %v549
      %v757 = vpop.f32.mrf.mxu0
      %v758 = vadd.f32 0.0, %v757
      %v759 = vpop.f32.mrf.mxu0
      %v760 = vadd.f32 0.0, %v759
      %v761 = vpop.f32.mrf.mxu0
      %v762 = vadd.f32 0.0, %v761
      %v763 = vpop.f32.mrf.mxu0
      %v764 = vadd.f32 0.0, %v763
      %765 = vmatprep.mubr.bf16.mxu0 0
      %766 = vmatmul.mubr.bf16.gmra.mxu0 %v552
      %v767 = vpop.f32.mrf.mxu0
      %v768 = vadd.f32 0.0, %v767
      %v769 = vpop.f32.mrf.mxu0
      %v770 = vadd.f32 0.0, %v769
      %v771 = vpop.f32.mrf.mxu0
      %v772 = vadd.f32 0.0, %v771
      %v773 = vpop.f32.mrf.mxu0
      %v774 = vadd.f32 0.0, %v773
      %775 = vmatprep.mubr.bf16.mxu0 0
      %776 = vmatmul.mubr.bf16.gmra.mxu0 %v555
      %v777 = vpop.f32.mrf.mxu0
      %v778 = vadd.f32 0.0, %v777
      %v779 = vpop.f32.mrf.mxu0
      %v780 = vadd.f32 0.0, %v779
      %v781 = vpop.f32.mrf.mxu0
      %v782 = vadd.f32 0.0, %v781
      %v783 = vpop.f32.mrf.mxu0
      %v784 = vadd.f32 0.0, %v783
      %785 = vmatprep.mubr.bf16.mxu0 0
      %786 = vmatmul.mubr.bf16.gmra.mxu0 %v558
      %v787 = vpop.f32.mrf.mxu0
      %v788 = vadd.f32 0.0, %v787
      %v789 = vpop.f32.mrf.mxu0
      %v790 = vadd.f32 0.0, %v789
      %v791 = vpop.f32.mrf.mxu0
      %v792 = vadd.f32 0.0, %v791
      %v793 = vpop.f32.mrf.mxu0
      %v794 = vadd.f32 0.0, %v793
      %795 = vmatprep.mubr.bf16.mxu0 0
      %796 = vmatmul.mubr.bf16.gmra.mxu0 %v561
      %v797 = vpop.f32.mrf.mxu0
      %v798 = vadd.f32 0.0, %v797
      %v799 = vpop.f32.mrf.mxu0
      %v800 = vadd.f32 0.0, %v799
      %v801 = vpop.f32.mrf.mxu0
      %v802 = vadd.f32 0.0, %v801
      %v803 = vpop.f32.mrf.mxu0
      %v804 = vadd.f32 0.0, %v803
      %805 = vmatprep.mubr.bf16.mxu0 0
      %806 = vmatmul.mubr.bf16.gmra.mxu0 %v564
      %v807 = vpop.f32.mrf.mxu0
      %v808 = vadd.f32 0.0, %v807
      %v809 = vpop.f32.mrf.mxu0
      %v810 = vadd.f32 0.0, %v809
      %v811 = vpop.f32.mrf.mxu0
      %v812 = vpop.f32.mrf.mxu0
      %813 = vdwg.mxu0
      %v814 = vld [vmem:[%s3] sm:$0x1]
      %v816 = vlaneseq
      %v817 = vshrl.u32 %v816, 7
      %v818 = vsub.s32 0, %v817
      %v819 = vrot.slane %v814, %v818
      %v821 = vadd.f32 %v608, %v819
      %v822 = vadd.f32 %v612, %v819
      %v823 = vadd.f32 %v618, %v819
      %v824 = vadd.f32 %v622, %v819
      %v825 = vadd.f32 %v628, %v819
      %v826 = vadd.f32 %v632, %v819
      %v827 = vadd.f32 %v638, %v819
      %v828 = vadd.f32 %v642, %v819
      %v829 = vadd.f32 %v648, %v819
      %v830 = vadd.f32 %v652, %v819
      %v831 = vadd.f32 %v658, %v819
      %v832 = vadd.f32 %v662, %v819
      %v833 = vadd.f32 %v668, %v819
      %v834 = vadd.f32 %v672, %v819
      %v835 = vadd.f32 %v678, %v819
      %v836 = vadd.f32 %v682, %v819
      %v837 = vadd.f32 %v688, %v819
      %v838 = vadd.f32 %v692, %v819
      %v839 = vadd.f32 %v698, %v819
      %v840 = vadd.f32 %v702, %v819
      %v841 = vadd.f32 %v708, %v819
      %v842 = vadd.f32 %v712, %v819
      %v843 = vadd.f32 %v718, %v819
      %v844 = vadd.f32 %v722, %v819
      %v845 = vadd.f32 %v728, %v819
      %v846 = vadd.f32 %v732, %v819
      %v847 = vadd.f32 %v738, %v819
      %v848 = vadd.f32 %v742, %v819
      %v849 = vadd.f32 %v748, %v819
      %v850 = vadd.f32 %v752, %v819
      %v851 = vadd.f32 %v758, %v819
      %v852 = vadd.f32 %v762, %v819
      %v853 = vadd.f32 %v768, %v819
      %v854 = vadd.f32 %v772, %v819
      %v855 = vadd.f32 %v778, %v819
      %v856 = vadd.f32 %v782, %v819
      %v857 = vadd.f32 %v788, %v819
      %v858 = vadd.f32 %v792, %v819
      %v859 = vadd.f32 %v798, %v819
      %v860 = vadd.f32 %v802, %v819
      %v861 = vadd.f32 %v808, %v819
      %v862 = vmax.f32 %v821, 0.0
      %v863 = vmax.f32 %v822, 0.0
      %v864 = vmax.f32 %v823, 0.0
      %v865 = vmax.f32 %v824, 0.0
      %v866 = vmax.f32 %v825, 0.0
      %v867 = vmax.f32 %v826, 0.0
      %v868 = vmax.f32 %v827, 0.0
      %v869 = vmax.f32 %v828, 0.0
      %v870 = vmax.f32 %v829, 0.0
      %v871 = vmax.f32 %v830, 0.0
      %v872 = vmax.f32 %v831, 0.0
      %v873 = vmax.f32 %v832, 0.0
      %v874 = vmax.f32 %v833, 0.0
      %v875 = vmax.f32 %v834, 0.0
      %v876 = vmax.f32 %v835, 0.0
      %v877 = vmax.f32 %v836, 0.0
      %v878 = vmax.f32 %v837, 0.0
      %v879 = vmax.f32 %v838, 0.0
      %v880 = vmax.f32 %v839, 0.0
      %v881 = vmax.f32 %v840, 0.0
      %v882 = vmax.f32 %v841, 0.0
      %v883 = vmax.f32 %v842, 0.0
      %v884 = vmax.f32 %v843, 0.0
      %v885 = vmax.f32 %v844, 0.0
      %v886 = vmax.f32 %v845, 0.0
      %v887 = vmax.f32 %v846, 0.0
      %v888 = vmax.f32 %v847, 0.0
      %v889 = vmax.f32 %v848, 0.0
      %v890 = vmax.f32 %v849, 0.0
      %v891 = vmax.f32 %v850, 0.0
      %v892 = vmax.f32 %v851, 0.0
      %v893 = vmax.f32 %v852, 0.0
      %v894 = vmax.f32 %v853, 0.0
      %v895 = vmax.f32 %v854, 0.0
      %v896 = vmax.f32 %v855, 0.0
      %v897 = vmax.f32 %v856, 0.0
      %v898 = vmax.f32 %v857, 0.0
      %v899 = vmax.f32 %v858, 0.0
      %v900 = vmax.f32 %v859, 0.0
      %v901 = vmax.f32 %v860, 0.0
      %v902 = vmax.f32 %v861, 0.0
      %904 = vset.pattern.permute.xlu0 0
      %905 = vperm.xlu0 %904, %v348
      %v906 = vpop.permute.xlu0 %905
      %909 = vset.pattern.permute.xlu0 0
      %910 = vperm.xlu0 %909, %v349
      %v911 = vpop.permute.xlu0 %910
      %914 = vset.pattern.permute.xlu0 0
      %915 = vperm.xlu0 %914, %v350
      %v916 = vpop.permute.xlu0 %915
      %919 = vset.pattern.permute.xlu0 0
      %920 = vperm.xlu0 %919, %v351
      %v921 = vpop.permute.xlu0 %920
      %924 = vset.pattern.permute.xlu0 0
      %925 = vperm.xlu0 %924, %v352
      %v926 = vpop.permute.xlu0 %925
      %929 = vset.pattern.permute.xlu0 0
      %930 = vperm.xlu0 %929, %v353
      %v931 = vpop.permute.xlu0 %930
      %934 = vset.pattern.permute.xlu0 0
      %935 = vperm.xlu0 %934, %v354
      %v936 = vpop.permute.xlu0 %935
      %939 = vset.pattern.permute.xlu0 0
      %940 = vperm.xlu0 %939, %v355
      %v941 = vpop.permute.xlu0 %940
      %944 = vset.pattern.permute.xlu0 0
      %945 = vperm.xlu0 %944, %v356
      %v946 = vpop.permute.xlu0 %945
      %949 = vset.pattern.permute.xlu0 0
      %950 = vperm.xlu0 %949, %v357
      %v951 = vpop.permute.xlu0 %950
      %954 = vset.pattern.permute.xlu0 0
      %955 = vperm.xlu0 %954, %v358
      %v956 = vpop.permute.xlu0 %955
      %959 = vset.pattern.permute.xlu0 0
      %960 = vperm.xlu0 %959, %v359
      %v961 = vpop.permute.xlu0 %960
      %964 = vset.pattern.permute.xlu0 0
      %965 = vperm.xlu0 %964, %v360
      %v966 = vpop.permute.xlu0 %965
      %969 = vset.pattern.permute.xlu0 0
      %970 = vperm.xlu0 %969, %v361
      %v971 = vpop.permute.xlu0 %970
      %974 = vset.pattern.permute.xlu0 0
      %975 = vperm.xlu0 %974, %v362
      %v976 = vpop.permute.xlu0 %975
      %979 = vset.pattern.permute.xlu0 0
      %980 = vperm.xlu0 %979, %v363
      %v981 = vpop.permute.xlu0 %980
      %984 = vset.pattern.permute.xlu0 0
      %985 = vperm.xlu0 %984, %v364
      %v986 = vpop.permute.xlu0 %985
      %989 = vset.pattern.permute.xlu0 0
      %990 = vperm.xlu0 %989, %v365
      %v991 = vpop.permute.xlu0 %990
      %994 = vset.pattern.permute.xlu0 0
      %995 = vperm.xlu0 %994, %v366
      %v996 = vpop.permute.xlu0 %995
      %999 = vset.pattern.permute.xlu0 0
      %1000 = vperm.xlu0 %999, %v367
      %v1001 = vpop.permute.xlu0 %1000
      %1004 = vset.pattern.permute.xlu0 0
      %1005 = vperm.xlu0 %1004, %v368
      %v1006 = vpop.permute.xlu0 %1005
      %1009 = vset.pattern.permute.xlu0 0
      %1010 = vperm.xlu0 %1009, %v369
      %v1011 = vpop.permute.xlu0 %1010
      %1014 = vset.pattern.permute.xlu0 0
      %1015 = vperm.xlu0 %1014, %v370
      %v1016 = vpop.permute.xlu0 %1015
      %1019 = vset.pattern.permute.xlu0 0
      %1020 = vperm.xlu0 %1019, %v371
      %v1021 = vpop.permute.xlu0 %1020
      %1024 = vset.pattern.permute.xlu0 0
      %1025 = vperm.xlu0 %1024, %v372
      %v1026 = vpop.permute.xlu0 %1025
      %1029 = vset.pattern.permute.xlu0 0
      %1030 = vperm.xlu0 %1029, %v373
      %v1031 = vpop.permute.xlu0 %1030
      %1034 = vset.pattern.permute.xlu0 0
      %1035 = vperm.xlu0 %1034, %v374
      %v1036 = vpop.permute.xlu0 %1035
      %1039 = vset.pattern.permute.xlu0 0
      %1040 = vperm.xlu0 %1039, %v375
      %v1041 = vpop.permute.xlu0 %1040
      %1044 = vset.pattern.permute.xlu0 0
      %1045 = vperm.xlu0 %1044, %v376
      %v1046 = vpop.permute.xlu0 %1045
      %1049 = vset.pattern.permute.xlu0 0
      %1050 = vperm.xlu0 %1049, %v377
      %v1051 = vpop.permute.xlu0 %1050
      %1054 = vset.pattern.permute.xlu0 0
      %1055 = vperm.xlu0 %1054, %v378
      %v1056 = vpop.permute.xlu0 %1055
      %1059 = vset.pattern.permute.xlu0 0
      %1060 = vperm.xlu0 %1059, %v379
      %v1061 = vpop.permute.xlu0 %1060
      %1064 = vset.pattern.permute.xlu0 0
      %1065 = vperm.xlu0 %1064, %v380
      %v1066 = vpop.permute.xlu0 %1065
      %1069 = vset.pattern.permute.xlu0 0
      %1070 = vperm.xlu0 %1069, %v381
      %v1071 = vpop.permute.xlu0 %1070
      %1074 = vset.pattern.permute.xlu0 0
      %1075 = vperm.xlu0 %1074, %v382
      %v1076 = vpop.permute.xlu0 %1075
      %1079 = vset.pattern.permute.xlu0 0
      %1080 = vperm.xlu0 %1079, %v383
      %v1081 = vpop.permute.xlu0 %1080
      %1084 = vset.pattern.permute.xlu0 0
      %1085 = vperm.xlu0 %1084, %v384
      %v1086 = vpop.permute.xlu0 %1085
      %1089 = vset.pattern.permute.xlu0 0
      %1090 = vperm.xlu0 %1089, %v385
      %v1091 = vpop.permute.xlu0 %1090
      %1094 = vset.pattern.permute.xlu0 0
      %1095 = vperm.xlu0 %1094, %v386
      %v1096 = vpop.permute.xlu0 %1095
      %1099 = vset.pattern.permute.xlu0 0
      %1100 = vperm.xlu0 %1099, %v387
      %v1101 = vpop.permute.xlu0 %1100
      %1104 = vset.pattern.permute.xlu0 0
      %1105 = vperm.xlu0 %1104, %v388
      %v1106 = vpop.permute.xlu0 %1105
      %v1108 = vmul.f32 %v862, %v906
      %v1109 = vmul.f32 %v863, %v911
      %v1110 = vmul.f32 %v864, %v916
      %v1111 = vmul.f32 %v865, %v921
      %v1112 = vmul.f32 %v866, %v926
      %v1113 = vmul.f32 %v867, %v931
      %v1114 = vmul.f32 %v868, %v936
      %v1115 = vmul.f32 %v869, %v941
      %v1116 = vmul.f32 %v870, %v946
      %v1117 = vmul.f32 %v871, %v951
      %v1118 = vmul.f32 %v872, %v956
      %v1119 = vmul.f32 %v873, %v961
      %v1120 = vmul.f32 %v874, %v966
      %v1121 = vmul.f32 %v875, %v971
      %v1122 = vmul.f32 %v876, %v976
      %v1123 = vmul.f32 %v877, %v981
      %v1124 = vmul.f32 %v878, %v986
      %v1125 = vmul.f32 %v879, %v991
      %v1126 = vmul.f32 %v880, %v996
      %v1127 = vmul.f32 %v881, %v1001
      %v1128 = vmul.f32 %v882, %v1006
      %v1129 = vmul.f32 %v883, %v1011
      %v1130 = vmul.f32 %v884, %v1016
      %v1131 = vmul.f32 %v885, %v1021
      %v1132 = vmul.f32 %v886, %v1026
      %v1133 = vmul.f32 %v887, %v1031
      %v1134 = vmul.f32 %v888, %v1036
      %v1135 = vmul.f32 %v889, %v1041
      %v1136 = vmul.f32 %v890, %v1046
      %v1137 = vmul.f32 %v891, %v1051
      %v1138 = vmul.f32 %v892, %v1056
      %v1139 = vmul.f32 %v893, %v1061
      %v1140 = vmul.f32 %v894, %v1066
      %v1141 = vmul.f32 %v895, %v1071
      %v1142 = vmul.f32 %v896, %v1076
      %v1143 = vmul.f32 %v897, %v1081
      %v1144 = vmul.f32 %v898, %v1086
      %v1145 = vmul.f32 %v899, %v1091
      %v1146 = vmul.f32 %v900, %v1096
      %v1147 = vmul.f32 %v901, %v1101
      %v1148 = vmul.f32 %v902, %v1106
      %1149 = vst [vmem:[%s305] sm:$0xff] %v610
      %1150 = vst [vmem:[%s305 + $0x8] sm:$0xff] %v614
      %1151 = vst [vmem:[%s305 + $0x10] sm:$0xff] %v620
      %1152 = vst [vmem:[%s305 + $0x18] sm:$0xff] %v624
      %1153 = vst [vmem:[%s305 + $0x20] sm:$0xff] %v630
      %1154 = vst [vmem:[%s305 + $0x28] sm:$0xff] %v634
      %1155 = vst [vmem:[%s305 + $0x30] sm:$0xff] %v640
      %1156 = vst [vmem:[%s305 + $0x38] sm:$0xff] %v644
      %1157 = vst [vmem:[%s305 + $0x40] sm:$0xff] %v650
      %1158 = vst [vmem:[%s305 + $0x48] sm:$0xff] %v654
      %1159 = vst [vmem:[%s305 + $0x50] sm:$0xff] %v660
      %1160 = vst [vmem:[%s305 + $0x58] sm:$0xff] %v664
      %1161 = vst [vmem:[%s305 + $0x60] sm:$0xff] %v670
      %1162 = vst [vmem:[%s305 + $0x68] sm:$0xff] %v674
      %1163 = vst [vmem:[%s305 + $0x70] sm:$0xff] %v680
      %1164 = vst [vmem:[%s305 + $0x78] sm:$0xff] %v684
      %1165 = vst [vmem:[%s305 + $0x80] sm:$0xff] %v690
      %1166 = vst [vmem:[%s305 + $0x88] sm:$0xff] %v694
      %1167 = vst [vmem:[%s305 + $0x90] sm:$0xff] %v700
      %1168 = vst [vmem:[%s305 + $0x98] sm:$0xff] %v704
      %1169 = vst [vmem:[%s305 + $0xa0] sm:$0xff] %v710
      %1170 = vst [vmem:[%s305 + $0xa8] sm:$0xff] %v714
      %1171 = vst [vmem:[%s305 + $0xb0] sm:$0xff] %v720
      %1172 = vst [vmem:[%s305 + $0xb8] sm:$0xff] %v724
      %1173 = vst [vmem:[%s305 + $0xc0] sm:$0xff] %v730
      %1174 = vst [vmem:[%s305 + $0xc8] sm:$0xff] %v734
      %1175 = vst [vmem:[%s305 + $0xd0] sm:$0xff] %v740
      %1176 = vst [vmem:[%s305 + $0xd8] sm:$0xff] %v744
      %1177 = vst [vmem:[%s305 + $0xe0] sm:$0xff] %v750
      %1178 = vst [vmem:[%s305 + $0xe8] sm:$0xff] %v754
      %1179 = vst [vmem:[%s305 + $0xf0] sm:$0xff] %v760
      %1180 = vst [vmem:[%s305 + $0xf8] sm:$0xff] %v764
      %1181 = vst [vmem:[%s305 + $0x100] sm:$0xff] %v770
      %1182 = vst [vmem:[%s305 + $0x108] sm:$0xff] %v774
      %1183 = vst [vmem:[%s305 + $0x110] sm:$0xff] %v780
      %1184 = vst [vmem:[%s305 + $0x118] sm:$0xff] %v784
      %1185 = vst [vmem:[%s305 + $0x120] sm:$0xff] %v790
      %1186 = vst [vmem:[%s305 + $0x128] sm:$0xff] %v794
      %1187 = vst [vmem:[%s305 + $0x130] sm:$0xff] %v800
      %1188 = vst [vmem:[%s305 + $0x138] sm:$0xff] %v804
      %1189 = vst [vmem:[%s305 + $0x140] sm:$0xf] %v810
      %1190 = vst [vmem:[#allocation2] sm:$0xff] 0.0
      %1191 = vst [vmem:[#allocation2 + $0x8] sm:$0xff] 0.0
      %1192 = vst [vmem:[#allocation2 + $0x10] sm:$0xff] 0.0
      %1193 = vst [vmem:[#allocation2 + $0x15c] sm:$0xff] 0.0
      %1194 = vst [vmem:[#allocation2 + $0x164] sm:$0xff] 0.0
      %1195 = vst [vmem:[#allocation2 + $0x16c] sm:$0xff] 0.0
      %1196 = vst [vmem:[#allocation2 + $0x18] sm:$0xff] %v1108
      %1197 = vst [vmem:[#allocation2 + $0x20] sm:$0xff] %v1109
      %1198 = vst [vmem:[#allocation2 + $0x28] sm:$0xff] %v1110
      %1199 = vst [vmem:[#allocation2 + $0x30] sm:$0xff] %v1111
      %1200 = vst [vmem:[#allocation2 + $0x38] sm:$0xff] %v1112
      %1201 = vst [vmem:[#allocation2 + $0x40] sm:$0xff] %v1113
      %1202 = vst [vmem:[#allocation2 + $0x48] sm:$0xff] %v1114
      %1203 = vst [vmem:[#allocation2 + $0x50] sm:$0xff] %v1115
      %1204 = vst [vmem:[#allocation2 + $0x58] sm:$0xff] %v1116
      %1205 = vst [vmem:[#allocation2 + $0x60] sm:$0xff] %v1117
      %1206 = vst [vmem:[#allocation2 + $0x68] sm:$0xff] %v1118
      %1207 = vst [vmem:[#allocation2 + $0x70] sm:$0xff] %v1119
      %1208 = vst [vmem:[#allocation2 + $0x78] sm:$0xff] %v1120
      %1209 = vst [vmem:[#allocation2 + $0x80] sm:$0xff] %v1121
      %1210 = vst [vmem:[#allocation2 + $0x88] sm:$0xff] %v1122
      %1211 = vst [vmem:[#allocation2 + $0x90] sm:$0xff] %v1123
      %1212 = vst [vmem:[#allocation2 + $0x98] sm:$0xff] %v1124
      %1213 = vst [vmem:[#allocation2 + $0xa0] sm:$0xff] %v1125
      %1214 = vst [vmem:[#allocation2 + $0xa8] sm:$0xff] %v1126
      %1215 = vst [vmem:[#allocation2 + $0xb0] sm:$0xff] %v1127
      %1216 = vst [vmem:[#allocation2 + $0xb8] sm:$0xff] %v1128
      %1217 = vst [vmem:[#allocation2 + $0xc0] sm:$0xff] %v1129
      %1218 = vst [vmem:[#allocation2 + $0xc8] sm:$0xff] %v1130
      %1219 = vst [vmem:[#allocation2 + $0xd0] sm:$0xff] %v1131
      %1220 = vst [vmem:[#allocation2 + $0xd8] sm:$0xff] %v1132
      %1221 = vst [vmem:[#allocation2 + $0xe0] sm:$0xff] %v1133
      %1222 = vst [vmem:[#allocation2 + $0xe8] sm:$0xff] %v1134
      %1223 = vst [vmem:[#allocation2 + $0xf0] sm:$0xff] %v1135
      %1224 = vst [vmem:[#allocation2 + $0xf8] sm:$0xff] %v1136
      %1225 = vst [vmem:[#allocation2 + $0x100] sm:$0xff] %v1137
      %1226 = vst [vmem:[#allocation2 + $0x108] sm:$0xff] %v1138
      %1227 = vst [vmem:[#allocation2 + $0x110] sm:$0xff] %v1139
      %1228 = vst [vmem:[#allocation2 + $0x118] sm:$0xff] %v1140
      %1229 = vst [vmem:[#allocation2 + $0x120] sm:$0xff] %v1141
      %1230 = vst [vmem:[#allocation2 + $0x128] sm:$0xff] %v1142
      %1231 = vst [vmem:[#allocation2 + $0x130] sm:$0xff] %v1143
      %1232 = vst [vmem:[#allocation2 + $0x138] sm:$0xff] %v1144
      %1233 = vst [vmem:[#allocation2 + $0x140] sm:$0xff] %v1145
      %1234 = vst [vmem:[#allocation2 + $0x148] sm:$0xff] %v1146
      %1235 = vst [vmem:[#allocation2 + $0x150] sm:$0xff] %v1147
      %1236 = vst [vmem:[#allocation2 + $0x158] sm:$0xf] %v1148
      %v1237 = vld [vmem:[#allocation2 + $0x5] sm:$0xff]
      %v1238 = vld [vmem:[#allocation2 + $0xd] sm:$0xff]
      %v1239 = vld [vmem:[#allocation2 + $0x15] sm:$0xff]
      %v1240 = vld [vmem:[#allocation2 + $0x1d] sm:$0xff]
      %v1241 = vld [vmem:[#allocation2 + $0x25] sm:$0xff]
      %v1242 = vld [vmem:[#allocation2 + $0x2d] sm:$0xff]
      %v1243 = vld [vmem:[#allocation2 + $0x35] sm:$0xff]
      %v1244 = vld [vmem:[#allocation2 + $0x3d] sm:$0xff]
      %v1245 = vld [vmem:[#allocation2 + $0x45] sm:$0xff]
      %v1246 = vld [vmem:[#allocation2 + $0x4d] sm:$0xff]
      %v1247 = vld [vmem:[#allocation2 + $0x55] sm:$0xff]
      %v1248 = vld [vmem:[#allocation2 + $0x5d] sm:$0xff]
      %v1249 = vld [vmem:[#allocation2 + $0x65] sm:$0xff]
      %v1250 = vld [vmem:[#allocation2 + $0x6d] sm:$0xff]
      %v1251 = vld [vmem:[#allocation2 + $0x75] sm:$0xff]
      %v1252 = vld [vmem:[#allocation2 + $0x7d] sm:$0xff]
      %v1253 = vld [vmem:[#allocation2 + $0x85] sm:$0xff]
      %v1254 = vld [vmem:[#allocation2 + $0x8d] sm:$0xff]
      %v1255 = vld [vmem:[#allocation2 + $0x95] sm:$0xff]
      %v1256 = vld [vmem:[#allocation2 + $0x9d] sm:$0xff]
      %v1257 = vld [vmem:[#allocation2 + $0xa5] sm:$0xff]
      %v1258 = vld [vmem:[#allocation2 + $0xad] sm:$0xff]
      %v1259 = vld [vmem:[#allocation2 + $0xb5] sm:$0xff]
      %v1260 = vld [vmem:[#allocation2 + $0xbd] sm:$0xff]
      %v1261 = vld [vmem:[#allocation2 + $0xc5] sm:$0xff]
      %v1262 = vld [vmem:[#allocation2 + $0xcd] sm:$0xff]
      %v1263 = vld [vmem:[#allocation2 + $0xd5] sm:$0xff]
      %v1264 = vld [vmem:[#allocation2 + $0xdd] sm:$0xff]
      %v1265 = vld [vmem:[#allocation2 + $0xe5] sm:$0xff]
      %v1266 = vld [vmem:[#allocation2 + $0xed] sm:$0xff]
      %v1267 = vld [vmem:[#allocation2 + $0xf5] sm:$0xff]
      %v1268 = vld [vmem:[#allocation2 + $0xfd] sm:$0xff]
      %v1269 = vld [vmem:[#allocation2 + $0x105] sm:$0xff]
      %v1270 = vld [vmem:[#allocation2 + $0x10d] sm:$0xff]
      %v1271 = vld [vmem:[#allocation2 + $0x115] sm:$0xff]
      %v1272 = vld [vmem:[#allocation2 + $0x11d] sm:$0xff]
      %v1273 = vld [vmem:[#allocation2 + $0x125] sm:$0xff]
      %v1274 = vld [vmem:[#allocation2 + $0x12d] sm:$0xff]
      %v1275 = vld [vmem:[#allocation2 + $0x135] sm:$0xff]
      %v1276 = vld [vmem:[#allocation2 + $0x13d] sm:$0xff]
      %v1277 = vld [vmem:[#allocation2 + $0x145] sm:$0xf]
      %v1278 = vpack.c.bf16 %v1238, %v1237
      %v1279 = vpack.c.bf16 %v1240, %v1239
      %v1280 = vpack.c.bf16 %v1242, %v1241
      %v1281 = vpack.c.bf16 %v1244, %v1243
      %v1282 = vpack.c.bf16 %v1246, %v1245
      %v1283 = vpack.c.bf16 %v1248, %v1247
      %v1284 = vpack.c.bf16 %v1250, %v1249
      %v1285 = vpack.c.bf16 %v1252, %v1251
      %v1286 = vpack.c.bf16 %v1254, %v1253
      %v1287 = vpack.c.bf16 %v1256, %v1255
      %v1288 = vpack.c.bf16 %v1258, %v1257
      %v1289 = vpack.c.bf16 %v1260, %v1259
      %v1290 = vpack.c.bf16 %v1262, %v1261
      %v1291 = vpack.c.bf16 %v1264, %v1263
      %v1292 = vpack.c.bf16 %v1266, %v1265
      %v1293 = vpack.c.bf16 %v1268, %v1267
      %v1294 = vpack.c.bf16 %v1270, %v1269
      %v1295 = vpack.c.bf16 %v1272, %v1271
      %v1296 = vpack.c.bf16 %v1274, %v1273
      %v1297 = vpack.c.bf16 %v1276, %v1275
      %v1298 = vpack.c.bf16 %v1277, %v1277
      %v1320 = vunpack.c.l.b16 %v1278
      %v1321 = vunpack.c.h.b16 %v1278
      %v1322 = vunpack.c.l.b16 %v1279
      %v1323 = vunpack.c.h.b16 %v1279
      %v1324 = vunpack.c.l.b16 %v1280
      %v1325 = vunpack.c.h.b16 %v1280
      %v1326 = vunpack.c.l.b16 %v1281
      %v1327 = vunpack.c.h.b16 %v1281
      %v1328 = vunpack.c.l.b16 %v1282
      %v1329 = vunpack.c.h.b16 %v1282
      %v1330 = vunpack.c.l.b16 %v1283
      %v1331 = vunpack.c.h.b16 %v1283
      %v1332 = vunpack.c.l.b16 %v1284
      %v1333 = vunpack.c.h.b16 %v1284
      %v1334 = vunpack.c.l.b16 %v1285
      %v1335 = vunpack.c.h.b16 %v1285
      %v1336 = vunpack.c.l.b16 %v1286
      %v1337 = vunpack.c.h.b16 %v1286
      %v1338 = vunpack.c.l.b16 %v1287
      %v1339 = vunpack.c.h.b16 %v1287
      %v1340 = vunpack.c.l.b16 %v1288
      %v1341 = vunpack.c.h.b16 %v1288
      %v1342 = vunpack.c.l.b16 %v1289
      %v1343 = vunpack.c.h.b16 %v1289
      %v1344 = vunpack.c.l.b16 %v1290
      %v1345 = vunpack.c.h.b16 %v1290
      %v1346 = vunpack.c.l.b16 %v1291
      %v1347 = vunpack.c.h.b16 %v1291
      %v1348 = vunpack.c.l.b16 %v1292
      %v1349 = vunpack.c.h.b16 %v1292
      %v1350 = vunpack.c.l.b16 %v1293
      %v1351 = vunpack.c.h.b16 %v1293
      %v1352 = vunpack.c.l.b16 %v1294
      %v1353 = vunpack.c.h.b16 %v1294
      %v1354 = vunpack.c.l.b16 %v1295
      %v1355 = vunpack.c.h.b16 %v1295
      %v1356 = vunpack.c.l.b16 %v1296
      %v1357 = vunpack.c.h.b16 %v1296
      %v1358 = vunpack.c.l.b16 %v1297
      %v1359 = vunpack.c.h.b16 %v1297
      %v1360 = vunpack.c.l.b16 %v1298
      %v1361 = vpack.c.b16 %v1320, %v1320
      %v1362 = vpack.c.b16 %v1321, %v1321
      %v1363 = vpack.c.b16 %v1322, %v1322
      %v1364 = vpack.c.b16 %v1323, %v1323
      %v1365 = vpack.c.b16 %v1324, %v1324
      %v1366 = vpack.c.b16 %v1325, %v1325
      %v1367 = vpack.c.b16 %v1326, %v1326
      %v1368 = vpack.c.b16 %v1327, %v1327
      %v1369 = vpack.c.b16 %v1328, %v1328
      %v1370 = vpack.c.b16 %v1329, %v1329
      %v1371 = vpack.c.b16 %v1330, %v1330
      %v1372 = vpack.c.b16 %v1331, %v1331
      %v1373 = vpack.c.b16 %v1332, %v1332
      %v1374 = vpack.c.b16 %v1333, %v1333
      %v1375 = vpack.c.b16 %v1334, %v1334
      %v1376 = vpack.c.b16 %v1335, %v1335
      %v1377 = vpack.c.b16 %v1336, %v1336
      %v1378 = vpack.c.b16 %v1337, %v1337
      %v1379 = vpack.c.b16 %v1338, %v1338
      %v1380 = vpack.c.b16 %v1339, %v1339
      %v1381 = vpack.c.b16 %v1340, %v1340
      %v1382 = vpack.c.b16 %v1341, %v1341
      %v1383 = vpack.c.b16 %v1342, %v1342
      %v1384 = vpack.c.b16 %v1343, %v1343
      %v1385 = vpack.c.b16 %v1344, %v1344
      %v1386 = vpack.c.b16 %v1345, %v1345
      %v1387 = vpack.c.b16 %v1346, %v1346
      %v1388 = vpack.c.b16 %v1347, %v1347
      %v1389 = vpack.c.b16 %v1348, %v1348
      %v1390 = vpack.c.b16 %v1349, %v1349
      %v1391 = vpack.c.b16 %v1350, %v1350
      %v1392 = vpack.c.b16 %v1351, %v1351
      %v1393 = vpack.c.b16 %v1352, %v1352
      %v1394 = vpack.c.b16 %v1353, %v1353
      %v1395 = vpack.c.b16 %v1354, %v1354
      %v1396 = vpack.c.b16 %v1355, %v1355
      %v1397 = vpack.c.b16 %v1356, %v1356
      %v1398 = vpack.c.b16 %v1357, %v1357
      %v1399 = vpack.c.b16 %v1358, %v1358
      %v1400 = vpack.c.b16 %v1359, %v1359
      %v1401 = vpack.c.b16 %v1360, %v1360
      %1443 = vst [vmem:[#allocation3] sm:$0xf] %v1361
      %1444 = vst [vmem:[#allocation3 + $0x24] sm:$0xf] %v1362
      %1445 = vst [vmem:[#allocation3 + $0x48] sm:$0xf] %v1363
      %1446 = vst [vmem:[#allocation3 + $0x6c] sm:$0xf] %v1364
      %1447 = vst [vmem:[#allocation3 + $0x90] sm:$0xf] %v1365
      %1448 = vst [vmem:[#allocation3 + $0xb4] sm:$0xf] %v1366
      %1449 = vst [vmem:[#allocation3 + $0xd8] sm:$0xf] %v1367
      %1450 = vst [vmem:[#allocation3 + $0xfc] sm:$0xf] %v1368
      %1451 = vst [vmem:[#allocation3 + $0x120] sm:$0xf] %v1369
      %1452 = vst [vmem:[#allocation3 + $0x144] sm:$0xf] %v1370
      %1453 = vst [vmem:[#allocation3 + $0x168] sm:$0xf] %v1371
      %1454 = vst [vmem:[#allocation3 + $0x18c] sm:$0xf] %v1372
      %1455 = vst [vmem:[#allocation3 + $0x1b0] sm:$0xf] %v1373
      %1456 = vst [vmem:[#allocation3 + $0x1d4] sm:$0xf] %v1374
      %1457 = vst [vmem:[#allocation3 + $0x1f8] sm:$0xf] %v1375
      %1458 = vst [vmem:[#allocation3 + $0x21c] sm:$0xf] %v1376
      %1459 = vst [vmem:[#allocation3 + $0x240] sm:$0xf] %v1377
      %1460 = vst [vmem:[#allocation3 + $0x264] sm:$0xf] %v1378
      %1461 = vst [vmem:[#allocation3 + $0x288] sm:$0xf] %v1379
      %1462 = vst [vmem:[#allocation3 + $0x2ac] sm:$0xf] %v1380
      %1463 = vst [vmem:[#allocation3 + $0x2d0] sm:$0xf] %v1381
      %1464 = vst [vmem:[#allocation3 + $0x2f4] sm:$0xf] %v1382
      %1465 = vst [vmem:[#allocation3 + $0x318] sm:$0xf] %v1383
      %1466 = vst [vmem:[#allocation3 + $0x33c] sm:$0xf] %v1384
      %1467 = vst [vmem:[#allocation3 + $0x360] sm:$0xf] %v1385
      %1468 = vst [vmem:[#allocation3 + $0x384] sm:$0xf] %v1386
      %1469 = vst [vmem:[#allocation3 + $0x3a8] sm:$0xf] %v1387
      %1470 = vst [vmem:[#allocation3 + $0x3cc] sm:$0xf] %v1388
      %1471 = vst [vmem:[#allocation3 + $0x3f0] sm:$0xf] %v1389
      %1472 = vst [vmem:[#allocation3 + $0x414] sm:$0xf] %v1390
      %1473 = vst [vmem:[#allocation3 + $0x438] sm:$0xf] %v1391
      %1474 = vst [vmem:[#allocation3 + $0x45c] sm:$0xf] %v1392
      %1475 = vst [vmem:[#allocation3 + $0x480] sm:$0xf] %v1393
      %1476 = vst [vmem:[#allocation3 + $0x4a4] sm:$0xf] %v1394
      %1477 = vst [vmem:[#allocation3 + $0x4c8] sm:$0xf] %v1395
      %1478 = vst [vmem:[#allocation3 + $0x4ec] sm:$0xf] %v1396
      %1479 = vst [vmem:[#allocation3 + $0x510] sm:$0xf] %v1397
      %1480 = vst [vmem:[#allocation3 + $0x534] sm:$0xf] %v1398
      %1481 = vst [vmem:[#allocation3 + $0x558] sm:$0xf] %v1399
      %1482 = vst [vmem:[#allocation3 + $0x57c] sm:$0xf] %v1400
      %1483 = vst [vmem:[#allocation3 + $0x5a0] sm:$0x3] %v1401
      %v1484 = vld [vmem:[#allocation2 + $0x6] sm:$0xff]
      %v1485 = vld [vmem:[#allocation2 + $0xe] sm:$0xff]
      %v1486 = vld [vmem:[#allocation2 + $0x16] sm:$0xff]
      %v1487 = vld [vmem:[#allocation2 + $0x1e] sm:$0xff]
      %v1488 = vld [vmem:[#allocation2 + $0x26] sm:$0xff]
      %v1489 = vld [vmem:[#allocation2 + $0x2e] sm:$0xff]
      %v1490 = vld [vmem:[#allocation2 + $0x36] sm:$0xff]
      %v1491 = vld [vmem:[#allocation2 + $0x3e] sm:$0xff]
      %v1492 = vld [vmem:[#allocation2 + $0x46] sm:$0xff]
      %v1493 = vld [vmem:[#allocation2 + $0x4e] sm:$0xff]
      %v1494 = vld [vmem:[#allocation2 + $0x56] sm:$0xff]
      %v1495 = vld [vmem:[#allocation2 + $0x5e] sm:$0xff]
      %v1496 = vld [vmem:[#allocation2 + $0x66] sm:$0xff]
      %v1497 = vld [vmem:[#allocation2 + $0x6e] sm:$0xff]
      %v1498 = vld [vmem:[#allocation2 + $0x76] sm:$0xff]
      %v1499 = vld [vmem:[#allocation2 + $0x7e] sm:$0xff]
      %v1500 = vld [vmem:[#allocation2 + $0x86] sm:$0xff]
      %v1501 = vld [vmem:[#allocation2 + $0x8e] sm:$0xff]
      %v1502 = vld [vmem:[#allocation2 + $0x96] sm:$0xff]
      %v1503 = vld [vmem:[#allocation2 + $0x9e] sm:$0xff]
      %v1504 = vld [vmem:[#allocation2 + $0xa6] sm:$0xff]
      %v1505 = vld [vmem:[#allocation2 + $0xae] sm:$0xff]
      %v1506 = vld [vmem:[#allocation2 + $0xb6] sm:$0xff]
      %v1507 = vld [vmem:[#allocation2 + $0xbe] sm:$0xff]
      %v1508 = vld [vmem:[#allocation2 + $0xc6] sm:$0xff]
      %v1509 = vld [vmem:[#allocation2 + $0xce] sm:$0xff]
      %v1510 = vld [vmem:[#allocation2 + $0xd6] sm:$0xff]
      %v1511 = vld [vmem:[#allocation2 + $0xde] sm:$0xff]
      %v1512 = vld [vmem:[#allocation2 + $0xe6] sm:$0xff]
      %v1513 = vld [vmem:[#allocation2 + $0xee] sm:$0xff]
      %v1514 = vld [vmem:[#allocation2 + $0xf6] sm:$0xff]
      %v1515 = vld [vmem:[#allocation2 + $0xfe] sm:$0xff]
      %v1516 = vld [vmem:[#allocation2 + $0x106] sm:$0xff]
      %v1517 = vld [vmem:[#allocation2 + $0x10e] sm:$0xff]
      %v1518 = vld [vmem:[#allocation2 + $0x116] sm:$0xff]
      %v1519 = vld [vmem:[#allocation2 + $0x11e] sm:$0xff]
      %v1520 = vld [vmem:[#allocation2 + $0x126] sm:$0xff]
      %v1521 = vld [vmem:[#allocation2 + $0x12e] sm:$0xff]
      %v1522 = vld [vmem:[#allocation2 + $0x136] sm:$0xff]
      %v1523 = vld [vmem:[#allocation2 + $0x13e] sm:$0xff]
      %v1524 = vld [vmem:[#allocation2 + $0x146] sm:$0xf]
      %v1525 = vpack.c.bf16 %v1485, %v1484
      %v1526 = vpack.c.bf16 %v1487, %v1486
      %v1527 = vpack.c.bf16 %v1489, %v1488
      %v1528 = vpack.c.bf16 %v1491, %v1490
      %v1529 = vpack.c.bf16 %v1493, %v1492
      %v1530 = vpack.c.bf16 %v1495, %v1494
      %v1531 = vpack.c.bf16 %v1497, %v1496
      %v1532 = vpack.c.bf16 %v1499, %v1498
      %v1533 = vpack.c.bf16 %v1501, %v1500
      %v1534 = vpack.c.bf16 %v1503, %v1502
      %v1535 = vpack.c.bf16 %v1505, %v1504
      %v1536 = vpack.c.bf16 %v1507, %v1506
      %v1537 = vpack.c.bf16 %v1509, %v1508
      %v1538 = vpack.c.bf16 %v1511, %v1510
      %v1539 = vpack.c.bf16 %v1513, %v1512
      %v1540 = vpack.c.bf16 %v1515, %v1514
      %v1541 = vpack.c.bf16 %v1517, %v1516
      %v1542 = vpack.c.bf16 %v1519, %v1518
      %v1543 = vpack.c.bf16 %v1521, %v1520
      %v1544 = vpack.c.bf16 %v1523, %v1522
      %v1545 = vpack.c.bf16 %v1524, %v1524
      %v1567 = vunpack.c.l.b16 %v1525
      %v1568 = vunpack.c.h.b16 %v1525
      %v1569 = vunpack.c.l.b16 %v1526
      %v1570 = vunpack.c.h.b16 %v1526
      %v1571 = vunpack.c.l.b16 %v1527
      %v1572 = vunpack.c.h.b16 %v1527
      %v1573 = vunpack.c.l.b16 %v1528
      %v1574 = vunpack.c.h.b16 %v1528
      %v1575 = vunpack.c.l.b16 %v1529
      %v1576 = vunpack.c.h.b16 %v1529
      %v1577 = vunpack.c.l.b16 %v1530
      %v1578 = vunpack.c.h.b16 %v1530
      %v1579 = vunpack.c.l.b16 %v1531
      %v1580 = vunpack.c.h.b16 %v1531
      %v1581 = vunpack.c.l.b16 %v1532
      %v1582 = vunpack.c.h.b16 %v1532
      %v1583 = vunpack.c.l.b16 %v1533
      %v1584 = vunpack.c.h.b16 %v1533
      %v1585 = vunpack.c.l.b16 %v1534
      %v1586 = vunpack.c.h.b16 %v1534
      %v1587 = vunpack.c.l.b16 %v1535
      %v1588 = vunpack.c.h.b16 %v1535
      %v1589 = vunpack.c.l.b16 %v1536
      %v1590 = vunpack.c.h.b16 %v1536
      %v1591 = vunpack.c.l.b16 %v1537
      %v1592 = vunpack.c.h.b16 %v1537
      %v1593 = vunpack.c.l.b16 %v1538
      %v1594 = vunpack.c.h.b16 %v1538
      %v1595 = vunpack.c.l.b16 %v1539
      %v1596 = vunpack.c.h.b16 %v1539
      %v1597 = vunpack.c.l.b16 %v1540
      %v1598 = vunpack.c.h.b16 %v1540
      %v1599 = vunpack.c.l.b16 %v1541
      %v1600 = vunpack.c.h.b16 %v1541
      %v1601 = vunpack.c.l.b16 %v1542
      %v1602 = vunpack.c.h.b16 %v1542
      %v1603 = vunpack.c.l.b16 %v1543
      %v1604 = vunpack.c.h.b16 %v1543
      %v1605 = vunpack.c.l.b16 %v1544
      %v1606 = vunpack.c.h.b16 %v1544
      %v1607 = vunpack.c.l.b16 %v1545
      %v1608 = vpack.c.b16 %v1567, %v1567
      %v1609 = vpack.c.b16 %v1568, %v1568
      %v1610 = vpack.c.b16 %v1569, %v1569
      %v1611 = vpack.c.b16 %v1570, %v1570
      %v1612 = vpack.c.b16 %v1571, %v1571
      %v1613 = vpack.c.b16 %v1572, %v1572
      %v1614 = vpack.c.b16 %v1573, %v1573
      %v1615 = vpack.c.b16 %v1574, %v1574
      %v1616 = vpack.c.b16 %v1575, %v1575
      %v1617 = vpack.c.b16 %v1576, %v1576
      %v1618 = vpack.c.b16 %v1577, %v1577
      %v1619 = vpack.c.b16 %v1578, %v1578
      %v1620 = vpack.c.b16 %v1579, %v1579
      %v1621 = vpack.c.b16 %v1580, %v1580
      %v1622 = vpack.c.b16 %v1581, %v1581
      %v1623 = vpack.c.b16 %v1582, %v1582
      %v1624 = vpack.c.b16 %v1583, %v1583
      %v1625 = vpack.c.b16 %v1584, %v1584
      %v1626 = vpack.c.b16 %v1585, %v1585
      %v1627 = vpack.c.b16 %v1586, %v1586
      %v1628 = vpack.c.b16 %v1587, %v1587
      %v1629 = vpack.c.b16 %v1588, %v1588
      %v1630 = vpack.c.b16 %v1589, %v1589
      %v1631 = vpack.c.b16 %v1590, %v1590
      %v1632 = vpack.c.b16 %v1591, %v1591
      %v1633 = vpack.c.b16 %v1592, %v1592
      %v1634 = vpack.c.b16 %v1593, %v1593
      %v1635 = vpack.c.b16 %v1594, %v1594
      %v1636 = vpack.c.b16 %v1595, %v1595
      %v1637 = vpack.c.b16 %v1596, %v1596
      %v1638 = vpack.c.b16 %v1597, %v1597
      %v1639 = vpack.c.b16 %v1598, %v1598
      %v1640 = vpack.c.b16 %v1599, %v1599
      %v1641 = vpack.c.b16 %v1600, %v1600
      %v1642 = vpack.c.b16 %v1601, %v1601
      %v1643 = vpack.c.b16 %v1602, %v1602
      %v1644 = vpack.c.b16 %v1603, %v1603
      %v1645 = vpack.c.b16 %v1604, %v1604
      %v1646 = vpack.c.b16 %v1605, %v1605
      %v1647 = vpack.c.b16 %v1606, %v1606
      %v1648 = vpack.c.b16 %v1607, %v1607
      %1690 = vst [vmem:[#allocation3 + $0x4] sm:$0xf] %v1608
      %1691 = vst [vmem:[#allocation3 + $0x28] sm:$0xf] %v1609
      %1692 = vst [vmem:[#allocation3 + $0x4c] sm:$0xf] %v1610
      %1693 = vst [vmem:[#allocation3 + $0x70] sm:$0xf] %v1611
      %1694 = vst [vmem:[#allocation3 + $0x94] sm:$0xf] %v1612
      %1695 = vst [vmem:[#allocation3 + $0xb8] sm:$0xf] %v1613
      %1696 = vst [vmem:[#allocation3 + $0xdc] sm:$0xf] %v1614
      %1697 = vst [vmem:[#allocation3 + $0x100] sm:$0xf] %v1615
      %1698 = vst [vmem:[#allocation3 + $0x124] sm:$0xf] %v1616
      %1699 = vst [vmem:[#allocation3 + $0x148] sm:$0xf] %v1617
      %1700 = vst [vmem:[#allocation3 + $0x16c] sm:$0xf] %v1618
      %1701 = vst [vmem:[#allocation3 + $0x190] sm:$0xf] %v1619
      %1702 = vst [vmem:[#allocation3 + $0x1b4] sm:$0xf] %v1620
      %1703 = vst [vmem:[#allocation3 + $0x1d8] sm:$0xf] %v1621
      %1704 = vst [vmem:[#allocation3 + $0x1fc] sm:$0xf] %v1622
      %1705 = vst [vmem:[#allocation3 + $0x220] sm:$0xf] %v1623
      %1706 = vst [vmem:[#allocation3 + $0x244] sm:$0xf] %v1624
      %1707 = vst [vmem:[#allocation3 + $0x268] sm:$0xf] %v1625
      %1708 = vst [vmem:[#allocation3 + $0x28c] sm:$0xf] %v1626
      %1709 = vst [vmem:[#allocation3 + $0x2b0] sm:$0xf] %v1627
      %1710 = vst [vmem:[#allocation3 + $0x2d4] sm:$0xf] %v1628
      %1711 = vst [vmem:[#allocation3 + $0x2f8] sm:$0xf] %v1629
      %1712 = vst [vmem:[#allocation3 + $0x31c] sm:$0xf] %v1630
      %1713 = vst [vmem:[#allocation3 + $0x340] sm:$0xf] %v1631
      %1714 = vst [vmem:[#allocation3 + $0x364] sm:$0xf] %v1632
      %1715 = vst [vmem:[#allocation3 + $0x388] sm:$0xf] %v1633
      %1716 = vst [vmem:[#allocation3 + $0x3ac] sm:$0xf] %v1634
      %1717 = vst [vmem:[#allocation3 + $0x3d0] sm:$0xf] %v1635
      %1718 = vst [vmem:[#allocation3 + $0x3f4] sm:$0xf] %v1636
      %1719 = vst [vmem:[#allocation3 + $0x418] sm:$0xf] %v1637
      %1720 = vst [vmem:[#allocation3 + $0x43c] sm:$0xf] %v1638
      %1721 = vst [vmem:[#allocation3 + $0x460] sm:$0xf] %v1639
      %1722 = vst [vmem:[#allocation3 + $0x484] sm:$0xf] %v1640
      %1723 = vst [vmem:[#allocation3 + $0x4a8] sm:$0xf] %v1641
      %1724 = vst [vmem:[#allocation3 + $0x4cc] sm:$0xf] %v1642
      %1725 = vst [vmem:[#allocation3 + $0x4f0] sm:$0xf] %v1643
      %1726 = vst [vmem:[#allocation3 + $0x514] sm:$0xf] %v1644
      %1727 = vst [vmem:[#allocation3 + $0x538] sm:$0xf] %v1645
      %1728 = vst [vmem:[#allocation3 + $0x55c] sm:$0xf] %v1646
      %1729 = vst [vmem:[#allocation3 + $0x580] sm:$0xf] %v1647
      %1730 = vst [vmem:[#allocation3 + $0x5a4] sm:$0x3] %v1648
      %v1731 = vld [vmem:[#allocation2 + $0x7] sm:$0xff]
      %v1732 = vld [vmem:[#allocation2 + $0xf] sm:$0xff]
      %v1733 = vld [vmem:[#allocation2 + $0x17] sm:$0xff]
      %v1734 = vld [vmem:[#allocation2 + $0x1f] sm:$0xff]
      %v1735 = vld [vmem:[#allocation2 + $0x27] sm:$0xff]
      %v1736 = vld [vmem:[#allocation2 + $0x2f] sm:$0xff]
      %v1737 = vld [vmem:[#allocation2 + $0x37] sm:$0xff]
      %v1738 = vld [vmem:[#allocation2 + $0x3f] sm:$0xff]
      %v1739 = vld [vmem:[#allocation2 + $0x47] sm:$0xff]
      %v1740 = vld [vmem:[#allocation2 + $0x4f] sm:$0xff]
      %v1741 = vld [vmem:[#allocation2 + $0x57] sm:$0xff]
      %v1742 = vld [vmem:[#allocation2 + $0x5f] sm:$0xff]
      %v1743 = vld [vmem:[#allocation2 + $0x67] sm:$0xff]
      %v1744 = vld [vmem:[#allocation2 + $0x6f] sm:$0xff]
      %v1745 = vld [vmem:[#allocation2 + $0x77] sm:$0xff]
      %v1746 = vld [vmem:[#allocation2 + $0x7f] sm:$0xff]
      %v1747 = vld [vmem:[#allocation2 + $0x87] sm:$0xff]
      %v1748 = vld [vmem:[#allocation2 + $0x8f] sm:$0xff]
      %v1749 = vld [vmem:[#allocation2 + $0x97] sm:$0xff]
      %v1750 = vld [vmem:[#allocation2 + $0x9f] sm:$0xff]
      %v1751 = vld [vmem:[#allocation2 + $0xa7] sm:$0xff]
      %v1752 = vld [vmem:[#allocation2 + $0xaf] sm:$0xff]
      %v1753 = vld [vmem:[#allocation2 + $0xb7] sm:$0xff]
      %v1754 = vld [vmem:[#allocation2 + $0xbf] sm:$0xff]
      %v1755 = vld [vmem:[#allocation2 + $0xc7] sm:$0xff]
      %v1756 = vld [vmem:[#allocation2 + $0xcf] sm:$0xff]
      %v1757 = vld [vmem:[#allocation2 + $0xd7] sm:$0xff]
      %v1758 = vld [vmem:[#allocation2 + $0xdf] sm:$0xff]
      %v1759 = vld [vmem:[#allocation2 + $0xe7] sm:$0xff]
      %v1760 = vld [vmem:[#allocation2 + $0xef] sm:$0xff]
      %v1761 = vld [vmem:[#allocation2 + $0xf7] sm:$0xff]
      %v1762 = vld [vmem:[#allocation2 + $0xff] sm:$0xff]
      %v1763 = vld [vmem:[#allocation2 + $0x107] sm:$0xff]
      %v1764 = vld [vmem:[#allocation2 + $0x10f] sm:$0xff]
      %v1765 = vld [vmem:[#allocation2 + $0x117] sm:$0xff]
      %v1766 = vld [vmem:[#allocation2 + $0x11f] sm:$0xff]
      %v1767 = vld [vmem:[#allocation2 + $0x127] sm:$0xff]
      %v1768 = vld [vmem:[#allocation2 + $0x12f] sm:$0xff]
      %v1769 = vld [vmem:[#allocation2 + $0x137] sm:$0xff]
      %v1770 = vld [vmem:[#allocation2 + $0x13f] sm:$0xff]
      %v1771 = vld [vmem:[#allocation2 + $0x147] sm:$0xf]
      %v1772 = vpack.c.bf16 %v1732, %v1731
      %v1773 = vpack.c.bf16 %v1734, %v1733
      %v1774 = vpack.c.bf16 %v1736, %v1735
      %v1775 = vpack.c.bf16 %v1738, %v1737
      %v1776 = vpack.c.bf16 %v1740, %v1739
      %v1777 = vpack.c.bf16 %v1742, %v1741
      %v1778 = vpack.c.bf16 %v1744, %v1743
      %v1779 = vpack.c.bf16 %v1746, %v1745
      %v1780 = vpack.c.bf16 %v1748, %v1747
      %v1781 = vpack.c.bf16 %v1750, %v1749
      %v1782 = vpack.c.bf16 %v1752, %v1751
      %v1783 = vpack.c.bf16 %v1754, %v1753
      %v1784 = vpack.c.bf16 %v1756, %v1755
      %v1785 = vpack.c.bf16 %v1758, %v1757
      %v1786 = vpack.c.bf16 %v1760, %v1759
      %v1787 = vpack.c.bf16 %v1762, %v1761
      %v1788 = vpack.c.bf16 %v1764, %v1763
      %v1789 = vpack.c.bf16 %v1766, %v1765
      %v1790 = vpack.c.bf16 %v1768, %v1767
      %v1791 = vpack.c.bf16 %v1770, %v1769
      %v1792 = vpack.c.bf16 %v1771, %v1771
      %v1814 = vunpack.c.l.b16 %v1772
      %v1815 = vunpack.c.h.b16 %v1772
      %v1816 = vunpack.c.l.b16 %v1773
      %v1817 = vunpack.c.h.b16 %v1773
      %v1818 = vunpack.c.l.b16 %v1774
      %v1819 = vunpack.c.h.b16 %v1774
      %v1820 = vunpack.c.l.b16 %v1775
      %v1821 = vunpack.c.h.b16 %v1775
      %v1822 = vunpack.c.l.b16 %v1776
      %v1823 = vunpack.c.h.b16 %v1776
      %v1824 = vunpack.c.l.b16 %v1777
      %v1825 = vunpack.c.h.b16 %v1777
      %v1826 = vunpack.c.l.b16 %v1778
      %v1827 = vunpack.c.h.b16 %v1778
      %v1828 = vunpack.c.l.b16 %v1779
      %v1829 = vunpack.c.h.b16 %v1779
      %v1830 = vunpack.c.l.b16 %v1780
      %v1831 = vunpack.c.h.b16 %v1780
      %v1832 = vunpack.c.l.b16 %v1781
      %v1833 = vunpack.c.h.b16 %v1781
      %v1834 = vunpack.c.l.b16 %v1782
      %v1835 = vunpack.c.h.b16 %v1782
      %v1836 = vunpack.c.l.b16 %v1783
      %v1837 = vunpack.c.h.b16 %v1783
      %v1838 = vunpack.c.l.b16 %v1784
      %v1839 = vunpack.c.h.b16 %v1784
      %v1840 = vunpack.c.l.b16 %v1785
      %v1841 = vunpack.c.h.b16 %v1785
      %v1842 = vunpack.c.l.b16 %v1786
      %v1843 = vunpack.c.h.b16 %v1786
      %v1844 = vunpack.c.l.b16 %v1787
      %v1845 = vunpack.c.h.b16 %v1787
      %v1846 = vunpack.c.l.b16 %v1788
      %v1847 = vunpack.c.h.b16 %v1788
      %v1848 = vunpack.c.l.b16 %v1789
      %v1849 = vunpack.c.h.b16 %v1789
      %v1850 = vunpack.c.l.b16 %v1790
      %v1851 = vunpack.c.h.b16 %v1790
      %v1852 = vunpack.c.l.b16 %v1791
      %v1853 = vunpack.c.h.b16 %v1791
      %v1854 = vunpack.c.l.b16 %v1792
      %v1855 = vpack.c.b16 %v1814, %v1814
      %v1856 = vpack.c.b16 %v1815, %v1815
      %v1857 = vpack.c.b16 %v1816, %v1816
      %v1858 = vpack.c.b16 %v1817, %v1817
      %v1859 = vpack.c.b16 %v1818, %v1818
      %v1860 = vpack.c.b16 %v1819, %v1819
      %v1861 = vpack.c.b16 %v1820, %v1820
      %v1862 = vpack.c.b16 %v1821, %v1821
      %v1863 = vpack.c.b16 %v1822, %v1822
      %v1864 = vpack.c.b16 %v1823, %v1823
      %v1865 = vpack.c.b16 %v1824, %v1824
      %v1866 = vpack.c.b16 %v1825, %v1825
      %v1867 = vpack.c.b16 %v1826, %v1826
      %v1868 = vpack.c.b16 %v1827, %v1827
      %v1869 = vpack.c.b16 %v1828, %v1828
      %v1870 = vpack.c.b16 %v1829, %v1829
      %v1871 = vpack.c.b16 %v1830, %v1830
      %v1872 = vpack.c.b16 %v1831, %v1831
      %v1873 = vpack.c.b16 %v1832, %v1832
      %v1874 = vpack.c.b16 %v1833, %v1833
      %v1875 = vpack.c.b16 %v1834, %v1834
      %v1876 = vpack.c.b16 %v1835, %v1835
      %v1877 = vpack.c.b16 %v1836, %v1836
      %v1878 = vpack.c.b16 %v1837, %v1837
      %v1879 = vpack.c.b16 %v1838, %v1838
      %v1880 = vpack.c.b16 %v1839, %v1839
      %v1881 = vpack.c.b16 %v1840, %v1840
      %v1882 = vpack.c.b16 %v1841, %v1841
      %v1883 = vpack.c.b16 %v1842, %v1842
      %v1884 = vpack.c.b16 %v1843, %v1843
      %v1885 = vpack.c.b16 %v1844, %v1844
      %v1886 = vpack.c.b16 %v1845, %v1845
      %v1887 = vpack.c.b16 %v1846, %v1846
      %v1888 = vpack.c.b16 %v1847, %v1847
      %v1889 = vpack.c.b16 %v1848, %v1848
      %v1890 = vpack.c.b16 %v1849, %v1849
      %v1891 = vpack.c.b16 %v1850, %v1850
      %v1892 = vpack.c.b16 %v1851, %v1851
      %v1893 = vpack.c.b16 %v1852, %v1852
      %v1894 = vpack.c.b16 %v1853, %v1853
      %v1895 = vpack.c.b16 %v1854, %v1854
      %1937 = vst [vmem:[#allocation3 + $0x8] sm:$0xf] %v1855
      %1938 = vst [vmem:[#allocation3 + $0x2c] sm:$0xf] %v1856
      %1939 = vst [vmem:[#allocation3 + $0x50] sm:$0xf] %v1857
      %1940 = vst [vmem:[#allocation3 + $0x74] sm:$0xf] %v1858
      %1941 = vst [vmem:[#allocation3 + $0x98] sm:$0xf] %v1859
      %1942 = vst [vmem:[#allocation3 + $0xbc] sm:$0xf] %v1860
      %1943 = vst [vmem:[#allocation3 + $0xe0] sm:$0xf] %v1861
      %1944 = vst [vmem:[#allocation3 + $0x104] sm:$0xf] %v1862
      %1945 = vst [vmem:[#allocation3 + $0x128] sm:$0xf] %v1863
      %1946 = vst [vmem:[#allocation3 + $0x14c] sm:$0xf] %v1864
      %1947 = vst [vmem:[#allocation3 + $0x170] sm:$0xf] %v1865
      %1948 = vst [vmem:[#allocation3 + $0x194] sm:$0xf] %v1866
      %1949 = vst [vmem:[#allocation3 + $0x1b8] sm:$0xf] %v1867
      %1950 = vst [vmem:[#allocation3 + $0x1dc] sm:$0xf] %v1868
      %1951 = vst [vmem:[#allocation3 + $0x200] sm:$0xf] %v1869
      %1952 = vst [vmem:[#allocation3 + $0x224] sm:$0xf] %v1870
      %1953 = vst [vmem:[#allocation3 + $0x248] sm:$0xf] %v1871
      %1954 = vst [vmem:[#allocation3 + $0x26c] sm:$0xf] %v1872
      %1955 = vst [vmem:[#allocation3 + $0x290] sm:$0xf] %v1873
      %1956 = vst [vmem:[#allocation3 + $0x2b4] sm:$0xf] %v1874
      %1957 = vst [vmem:[#allocation3 + $0x2d8] sm:$0xf] %v1875
      %1958 = vst [vmem:[#allocation3 + $0x2fc] sm:$0xf] %v1876
      %1959 = vst [vmem:[#allocation3 + $0x320] sm:$0xf] %v1877
      %1960 = vst [vmem:[#allocation3 + $0x344] sm:$0xf] %v1878
      %1961 = vst [vmem:[#allocation3 + $0x368] sm:$0xf] %v1879
      %1962 = vst [vmem:[#allocation3 + $0x38c] sm:$0xf] %v1880
      %1963 = vst [vmem:[#allocation3 + $0x3b0] sm:$0xf] %v1881
      %1964 = vst [vmem:[#allocation3 + $0x3d4] sm:$0xf] %v1882
      %1965 = vst [vmem:[#allocation3 + $0x3f8] sm:$0xf] %v1883
      %1966 = vst [vmem:[#allocation3 + $0x41c] sm:$0xf] %v1884
      %1967 = vst [vmem:[#allocation3 + $0x440] sm:$0xf] %v1885
      %1968 = vst [vmem:[#allocation3 + $0x464] sm:$0xf] %v1886
      %1969 = vst [vmem:[#allocation3 + $0x488] sm:$0xf] %v1887
      %1970 = vst [vmem:[#allocation3 + $0x4ac] sm:$0xf] %v1888
      %1971 = vst [vmem:[#allocation3 + $0x4d0] sm:$0xf] %v1889
      %1972 = vst [vmem:[#allocation3 + $0x4f4] sm:$0xf] %v1890
      %1973 = vst [vmem:[#allocation3 + $0x518] sm:$0xf] %v1891
      %1974 = vst [vmem:[#allocation3 + $0x53c] sm:$0xf] %v1892
      %1975 = vst [vmem:[#allocation3 + $0x560] sm:$0xf] %v1893
      %1976 = vst [vmem:[#allocation3 + $0x584] sm:$0xf] %v1894
      %1977 = vst [vmem:[#allocation3 + $0x5a8] sm:$0x3] %v1895
      %v1978 = vld [vmem:[#allocation2 + $0x17] sm:$0xff]
      %v1979 = vld [vmem:[#allocation2 + $0x1f] sm:$0xff]
      %v1980 = vld [vmem:[#allocation2 + $0x27] sm:$0xff]
      %v1981 = vld [vmem:[#allocation2 + $0x2f] sm:$0xff]
      %v1982 = vld [vmem:[#allocation2 + $0x37] sm:$0xff]
      %v1983 = vld [vmem:[#allocation2 + $0x3f] sm:$0xff]
      %v1984 = vld [vmem:[#allocation2 + $0x47] sm:$0xff]
      %v1985 = vld [vmem:[#allocation2 + $0x4f] sm:$0xff]
      %v1986 = vld [vmem:[#allocation2 + $0x57] sm:$0xff]
      %v1987 = vld [vmem:[#allocation2 + $0x5f] sm:$0xff]
      %v1988 = vld [vmem:[#allocation2 + $0x67] sm:$0xff]
      %v1989 = vld [vmem:[#allocation2 + $0x6f] sm:$0xff]
      %v1990 = vld [vmem:[#allocation2 + $0x77] sm:$0xff]
      %v1991 = vld [vmem:[#allocation2 + $0x7f] sm:$0xff]
      %v1992 = vld [vmem:[#allocation2 + $0x87] sm:$0xff]
      %v1993 = vld [vmem:[#allocation2 + $0x8f] sm:$0xff]
      %v1994 = vld [vmem:[#allocation2 + $0x97] sm:$0xff]
      %v1995 = vld [vmem:[#allocation2 + $0x9f] sm:$0xff]
      %v1996 = vld [vmem:[#allocation2 + $0xa7] sm:$0xff]
      %v1997 = vld [vmem:[#allocation2 + $0xaf] sm:$0xff]
      %v1998 = vld [vmem:[#allocation2 + $0xb7] sm:$0xff]
      %v1999 = vld [vmem:[#allocation2 + $0xbf] sm:$0xff]
      %v2000 = vld [vmem:[#allocation2 + $0xc7] sm:$0xff]
      %v2001 = vld [vmem:[#allocation2 + $0xcf] sm:$0xff]
      %v2002 = vld [vmem:[#allocation2 + $0xd7] sm:$0xff]
      %v2003 = vld [vmem:[#allocation2 + $0xdf] sm:$0xff]
      %v2004 = vld [vmem:[#allocation2 + $0xe7] sm:$0xff]
      %v2005 = vld [vmem:[#allocation2 + $0xef] sm:$0xff]
      %v2006 = vld [vmem:[#allocation2 + $0xf7] sm:$0xff]
      %v2007 = vld [vmem:[#allocation2 + $0xff] sm:$0xff]
      %v2008 = vld [vmem:[#allocation2 + $0x107] sm:$0xff]
      %v2009 = vld [vmem:[#allocation2 + $0x10f] sm:$0xff]
      %v2010 = vld [vmem:[#allocation2 + $0x117] sm:$0xff]
      %v2011 = vld [vmem:[#allocation2 + $0x11f] sm:$0xff]
      %v2012 = vld [vmem:[#allocation2 + $0x127] sm:$0xff]
      %v2013 = vld [vmem:[#allocation2 + $0x12f] sm:$0xff]
      %v2014 = vld [vmem:[#allocation2 + $0x137] sm:$0xff]
      %v2015 = vld [vmem:[#allocation2 + $0x13f] sm:$0xff]
      %v2016 = vld [vmem:[#allocation2 + $0x147] sm:$0xff]
      %v2017 = vld [vmem:[#allocation2 + $0x14f] sm:$0xff]
      %v2018 = vld [vmem:[#allocation2 + $0x157] sm:$0xf]
      %v2019 = vpack.c.bf16 %v1979, %v1978
      %v2020 = vpack.c.bf16 %v1981, %v1980
      %v2021 = vpack.c.bf16 %v1983, %v1982
      %v2022 = vpack.c.bf16 %v1985, %v1984
      %v2023 = vpack.c.bf16 %v1987, %v1986
      %v2024 = vpack.c.bf16 %v1989, %v1988
      %v2025 = vpack.c.bf16 %v1991, %v1990
      %v2026 = vpack.c.bf16 %v1993, %v1992
      %v2027 = vpack.c.bf16 %v1995, %v1994
      %v2028 = vpack.c.bf16 %v1997, %v1996
      %v2029 = vpack.c.bf16 %v1999, %v1998
      %v2030 = vpack.c.bf16 %v2001, %v2000
      %v2031 = vpack.c.bf16 %v2003, %v2002
      %v2032 = vpack.c.bf16 %v2005, %v2004
      %v2033 = vpack.c.bf16 %v2007, %v2006
      %v2034 = vpack.c.bf16 %v2009, %v2008
      %v2035 = vpack.c.bf16 %v2011, %v2010
      %v2036 = vpack.c.bf16 %v2013, %v2012
      %v2037 = vpack.c.bf16 %v2015, %v2014
      %v2038 = vpack.c.bf16 %v2017, %v2016
      %v2039 = vpack.c.bf16 %v2018, %v2018
      %v2061 = vunpack.c.l.b16 %v2019
      %v2062 = vunpack.c.h.b16 %v2019
      %v2063 = vunpack.c.l.b16 %v2020
      %v2064 = vunpack.c.h.b16 %v2020
      %v2065 = vunpack.c.l.b16 %v2021
      %v2066 = vunpack.c.h.b16 %v2021
      %v2067 = vunpack.c.l.b16 %v2022
      %v2068 = vunpack.c.h.b16 %v2022
      %v2069 = vunpack.c.l.b16 %v2023
      %v2070 = vunpack.c.h.b16 %v2023
      %v2071 = vunpack.c.l.b16 %v2024
      %v2072 = vunpack.c.h.b16 %v2024
      %v2073 = vunpack.c.l.b16 %v2025
      %v2074 = vunpack.c.h.b16 %v2025
      %v2075 = vunpack.c.l.b16 %v2026
      %v2076 = vunpack.c.h.b16 %v2026
      %v2077 = vunpack.c.l.b16 %v2027
      %v2078 = vunpack.c.h.b16 %v2027
      %v2079 = vunpack.c.l.b16 %v2028
      %v2080 = vunpack.c.h.b16 %v2028
      %v2081 = vunpack.c.l.b16 %v2029
      %v2082 = vunpack.c.h.b16 %v2029
      %v2083 = vunpack.c.l.b16 %v2030
      %v2084 = vunpack.c.h.b16 %v2030
      %v2085 = vunpack.c.l.b16 %v2031
      %v2086 = vunpack.c.h.b16 %v2031
      %v2087 = vunpack.c.l.b16 %v2032
      %v2088 = vunpack.c.h.b16 %v2032
      %v2089 = vunpack.c.l.b16 %v2033
      %v2090 = vunpack.c.h.b16 %v2033
      %v2091 = vunpack.c.l.b16 %v2034
      %v2092 = vunpack.c.h.b16 %v2034
      %v2093 = vunpack.c.l.b16 %v2035
      %v2094 = vunpack.c.h.b16 %v2035
      %v2095 = vunpack.c.l.b16 %v2036
      %v2096 = vunpack.c.h.b16 %v2036
      %v2097 = vunpack.c.l.b16 %v2037
      %v2098 = vunpack.c.h.b16 %v2037
      %v2099 = vunpack.c.l.b16 %v2038
      %v2100 = vunpack.c.h.b16 %v2038
      %v2101 = vunpack.c.l.b16 %v2039
      %v2102 = vpack.c.b16 %v2061, %v2061
      %v2103 = vpack.c.b16 %v2062, %v2062
      %v2104 = vpack.c.b16 %v2063, %v2063
      %v2105 = vpack.c.b16 %v2064, %v2064
      %v2106 = vpack.c.b16 %v2065, %v2065
      %v2107 = vpack.c.b16 %v2066, %v2066
      %v2108 = vpack.c.b16 %v2067, %v2067
      %v2109 = vpack.c.b16 %v2068, %v2068
      %v2110 = vpack.c.b16 %v2069, %v2069
      %v2111 = vpack.c.b16 %v2070, %v2070
      %v2112 = vpack.c.b16 %v2071, %v2071
      %v2113 = vpack.c.b16 %v2072, %v2072
      %v2114 = vpack.c.b16 %v2073, %v2073
      %v2115 = vpack.c.b16 %v2074, %v2074
      %v2116 = vpack.c.b16 %v2075, %v2075
      %v2117 = vpack.c.b16 %v2076, %v2076
      %v2118 = vpack.c.b16 %v2077, %v2077
      %v2119 = vpack.c.b16 %v2078, %v2078
      %v2120 = vpack.c.b16 %v2079, %v2079
      %v2121 = vpack.c.b16 %v2080, %v2080
      %v2122 = vpack.c.b16 %v2081, %v2081
      %v2123 = vpack.c.b16 %v2082, %v2082
      %v2124 = vpack.c.b16 %v2083, %v2083
      %v2125 = vpack.c.b16 %v2084, %v2084
      %v2126 = vpack.c.b16 %v2085, %v2085
      %v2127 = vpack.c.b16 %v2086, %v2086
      %v2128 = vpack.c.b16 %v2087, %v2087
      %v2129 = vpack.c.b16 %v2088, %v2088
      %v2130 = vpack.c.b16 %v2089, %v2089
      %v2131 = vpack.c.b16 %v2090, %v2090
      %v2132 = vpack.c.b16 %v2091, %v2091
      %v2133 = vpack.c.b16 %v2092, %v2092
      %v2134 = vpack.c.b16 %v2093, %v2093
      %v2135 = vpack.c.b16 %v2094, %v2094
      %v2136 = vpack.c.b16 %v2095, %v2095
      %v2137 = vpack.c.b16 %v2096, %v2096
      %v2138 = vpack.c.b16 %v2097, %v2097
      %v2139 = vpack.c.b16 %v2098, %v2098
      %v2140 = vpack.c.b16 %v2099, %v2099
      %v2141 = vpack.c.b16 %v2100, %v2100
      %v2142 = vpack.c.b16 %v2101, %v2101
      %2184 = vst [vmem:[#allocation3 + $0xc] sm:$0xf] %v2102
      %2185 = vst [vmem:[#allocation3 + $0x30] sm:$0xf] %v2103
      %2186 = vst [vmem:[#allocation3 + $0x54] sm:$0xf] %v2104
      %2187 = vst [vmem:[#allocation3 + $0x78] sm:$0xf] %v2105
      %2188 = vst [vmem:[#allocation3 + $0x9c] sm:$0xf] %v2106
      %2189 = vst [vmem:[#allocation3 + $0xc0] sm:$0xf] %v2107
      %2190 = vst [vmem:[#allocation3 + $0xe4] sm:$0xf] %v2108
      %2191 = vst [vmem:[#allocation3 + $0x108] sm:$0xf] %v2109
      %2192 = vst [vmem:[#allocation3 + $0x12c] sm:$0xf] %v2110
      %2193 = vst [vmem:[#allocation3 + $0x150] sm:$0xf] %v2111
      %2194 = vst [vmem:[#allocation3 + $0x174] sm:$0xf] %v2112
      %2195 = vst [vmem:[#allocation3 + $0x198] sm:$0xf] %v2113
      %2196 = vst [vmem:[#allocation3 + $0x1bc] sm:$0xf] %v2114
      %2197 = vst [vmem:[#allocation3 + $0x1e0] sm:$0xf] %v2115
      %2198 = vst [vmem:[#allocation3 + $0x204] sm:$0xf] %v2116
      %2199 = vst [vmem:[#allocation3 + $0x228] sm:$0xf] %v2117
      %2200 = vst [vmem:[#allocation3 + $0x24c] sm:$0xf] %v2118
      %2201 = vst [vmem:[#allocation3 + $0x270] sm:$0xf] %v2119
      %2202 = vst [vmem:[#allocation3 + $0x294] sm:$0xf] %v2120
      %2203 = vst [vmem:[#allocation3 + $0x2b8] sm:$0xf] %v2121
      %2204 = vst [vmem:[#allocation3 + $0x2dc] sm:$0xf] %v2122
      %2205 = vst [vmem:[#allocation3 + $0x300] sm:$0xf] %v2123
      %2206 = vst [vmem:[#allocation3 + $0x324] sm:$0xf] %v2124
      %2207 = vst [vmem:[#allocation3 + $0x348] sm:$0xf] %v2125
      %2208 = vst [vmem:[#allocation3 + $0x36c] sm:$0xf] %v2126
      %2209 = vst [vmem:[#allocation3 + $0x390] sm:$0xf] %v2127
      %2210 = vst [vmem:[#allocation3 + $0x3b4] sm:$0xf] %v2128
      %2211 = vst [vmem:[#allocation3 + $0x3d8] sm:$0xf] %v2129
      %2212 = vst [vmem:[#allocation3 + $0x3fc] sm:$0xf] %v2130
      %2213 = vst [vmem:[#allocation3 + $0x420] sm:$0xf] %v2131
      %2214 = vst [vmem:[#allocation3 + $0x444] sm:$0xf] %v2132
      %2215 = vst [vmem:[#allocation3 + $0x468] sm:$0xf] %v2133
      %2216 = vst [vmem:[#allocation3 + $0x48c] sm:$0xf] %v2134
      %2217 = vst [vmem:[#allocation3 + $0x4b0] sm:$0xf] %v2135
      %2218 = vst [vmem:[#allocation3 + $0x4d4] sm:$0xf] %v2136
      %2219 = vst [vmem:[#allocation3 + $0x4f8] sm:$0xf] %v2137
      %2220 = vst [vmem:[#allocation3 + $0x51c] sm:$0xf] %v2138
      %2221 = vst [vmem:[#allocation3 + $0x540] sm:$0xf] %v2139
      %2222 = vst [vmem:[#allocation3 + $0x564] sm:$0xf] %v2140
      %2223 = vst [vmem:[#allocation3 + $0x588] sm:$0xf] %v2141
      %2224 = vst [vmem:[#allocation3 + $0x5ac] sm:$0x3] %v2142
      %v2225 = vld [vmem:[#allocation2 + $0x18] sm:$0xff]
      %v2226 = vld [vmem:[#allocation2 + $0x20] sm:$0xff]
      %v2227 = vld [vmem:[#allocation2 + $0x28] sm:$0xff]
      %v2228 = vld [vmem:[#allocation2 + $0x30] sm:$0xff]
      %v2229 = vld [vmem:[#allocation2 + $0x38] sm:$0xff]
      %v2230 = vld [vmem:[#allocation2 + $0x40] sm:$0xff]
      %v2231 = vld [vmem:[#allocation2 + $0x48] sm:$0xff]
      %v2232 = vld [vmem:[#allocation2 + $0x50] sm:$0xff]
      %v2233 = vld [vmem:[#allocation2 + $0x58] sm:$0xff]
      %v2234 = vld [vmem:[#allocation2 + $0x60] sm:$0xff]
      %v2235 = vld [vmem:[#allocation2 + $0x68] sm:$0xff]
      %v2236 = vld [vmem:[#allocation2 + $0x70] sm:$0xff]
      %v2237 = vld [vmem:[#allocation2 + $0x78] sm:$0xff]
      %v2238 = vld [vmem:[#allocation2 + $0x80] sm:$0xff]
      %v2239 = vld [vmem:[#allocation2 + $0x88] sm:$0xff]
      %v2240 = vld [vmem:[#allocation2 + $0x90] sm:$0xff]
      %v2241 = vld [vmem:[#allocation2 + $0x98] sm:$0xff]
      %v2242 = vld [vmem:[#allocation2 + $0xa0] sm:$0xff]
      %v2243 = vld [vmem:[#allocation2 + $0xa8] sm:$0xff]
      %v2244 = vld [vmem:[#allocation2 + $0xb0] sm:$0xff]
      %v2245 = vld [vmem:[#allocation2 + $0xb8] sm:$0xff]
      %v2246 = vld [vmem:[#allocation2 + $0xc0] sm:$0xff]
      %v2247 = vld [vmem:[#allocation2 + $0xc8] sm:$0xff]
      %v2248 = vld [vmem:[#allocation2 + $0xd0] sm:$0xff]
      %v2249 = vld [vmem:[#allocation2 + $0xd8] sm:$0xff]
      %v2250 = vld [vmem:[#allocation2 + $0xe0] sm:$0xff]
      %v2251 = vld [vmem:[#allocation2 + $0xe8] sm:$0xff]
      %v2252 = vld [vmem:[#allocation2 + $0xf0] sm:$0xff]
      %v2253 = vld [vmem:[#allocation2 + $0xf8] sm:$0xff]
      %v2254 = vld [vmem:[#allocation2 + $0x100] sm:$0xff]
      %v2255 = vld [vmem:[#allocation2 + $0x108] sm:$0xff]
      %v2256 = vld [vmem:[#allocation2 + $0x110] sm:$0xff]
      %v2257 = vld [vmem:[#allocation2 + $0x118] sm:$0xff]
      %v2258 = vld [vmem:[#allocation2 + $0x120] sm:$0xff]
      %v2259 = vld [vmem:[#allocation2 + $0x128] sm:$0xff]
      %v2260 = vld [vmem:[#allocation2 + $0x130] sm:$0xff]
      %v2261 = vld [vmem:[#allocation2 + $0x138] sm:$0xff]
      %v2262 = vld [vmem:[#allocation2 + $0x140] sm:$0xff]
      %v2263 = vld [vmem:[#allocation2 + $0x148] sm:$0xff]
      %v2264 = vld [vmem:[#allocation2 + $0x150] sm:$0xff]
      %v2265 = vld [vmem:[#allocation2 + $0x158] sm:$0xf]
      %v2266 = vpack.c.bf16 %v2226, %v2225
      %v2267 = vpack.c.bf16 %v2228, %v2227
      %v2268 = vpack.c.bf16 %v2230, %v2229
      %v2269 = vpack.c.bf16 %v2232, %v2231
      %v2270 = vpack.c.bf16 %v2234, %v2233
      %v2271 = vpack.c.bf16 %v2236, %v2235
      %v2272 = vpack.c.bf16 %v2238, %v2237
      %v2273 = vpack.c.bf16 %v2240, %v2239
      %v2274 = vpack.c.bf16 %v2242, %v2241
      %v2275 = vpack.c.bf16 %v2244, %v2243
      %v2276 = vpack.c.bf16 %v2246, %v2245
      %v2277 = vpack.c.bf16 %v2248, %v2247
      %v2278 = vpack.c.bf16 %v2250, %v2249
      %v2279 = vpack.c.bf16 %v2252, %v2251
      %v2280 = vpack.c.bf16 %v2254, %v2253
      %v2281 = vpack.c.bf16 %v2256, %v2255
      %v2282 = vpack.c.bf16 %v2258, %v2257
      %v2283 = vpack.c.bf16 %v2260, %v2259
      %v2284 = vpack.c.bf16 %v2262, %v2261
      %v2285 = vpack.c.bf16 %v2264, %v2263
      %v2286 = vpack.c.bf16 %v2265, %v2265
      %v2308 = vunpack.c.l.b16 %v2266
      %v2309 = vunpack.c.h.b16 %v2266
      %v2310 = vunpack.c.l.b16 %v2267
      %v2311 = vunpack.c.h.b16 %v2267
      %v2312 = vunpack.c.l.b16 %v2268
      %v2313 = vunpack.c.h.b16 %v2268
      %v2314 = vunpack.c.l.b16 %v2269
      %v2315 = vunpack.c.h.b16 %v2269
      %v2316 = vunpack.c.l.b16 %v2270
      %v2317 = vunpack.c.h.b16 %v2270
      %v2318 = vunpack.c.l.b16 %v2271
      %v2319 = vunpack.c.h.b16 %v2271
      %v2320 = vunpack.c.l.b16 %v2272
      %v2321 = vunpack.c.h.b16 %v2272
      %v2322 = vunpack.c.l.b16 %v2273
      %v2323 = vunpack.c.h.b16 %v2273
      %v2324 = vunpack.c.l.b16 %v2274
      %v2325 = vunpack.c.h.b16 %v2274
      %v2326 = vunpack.c.l.b16 %v2275
      %v2327 = vunpack.c.h.b16 %v2275
      %v2328 = vunpack.c.l.b16 %v2276
      %v2329 = vunpack.c.h.b16 %v2276
      %v2330 = vunpack.c.l.b16 %v2277
      %v2331 = vunpack.c.h.b16 %v2277
      %v2332 = vunpack.c.l.b16 %v2278
      %v2333 = vunpack.c.h.b16 %v2278
      %v2334 = vunpack.c.l.b16 %v2279
      %v2335 = vunpack.c.h.b16 %v2279
      %v2336 = vunpack.c.l.b16 %v2280
      %v2337 = vunpack.c.h.b16 %v2280
      %v2338 = vunpack.c.l.b16 %v2281
      %v2339 = vunpack.c.h.b16 %v2281
      %v2340 = vunpack.c.l.b16 %v2282
      %v2341 = vunpack.c.h.b16 %v2282
      %v2342 = vunpack.c.l.b16 %v2283
      %v2343 = vunpack.c.h.b16 %v2283
      %v2344 = vunpack.c.l.b16 %v2284
      %v2345 = vunpack.c.h.b16 %v2284
      %v2346 = vunpack.c.l.b16 %v2285
      %v2347 = vunpack.c.h.b16 %v2285
      %v2348 = vunpack.c.l.b16 %v2286
      %v2349 = vpack.c.b16 %v2308, %v2308
      %v2350 = vpack.c.b16 %v2309, %v2309
      %v2351 = vpack.c.b16 %v2310, %v2310
      %v2352 = vpack.c.b16 %v2311, %v2311
      %v2353 = vpack.c.b16 %v2312, %v2312
      %v2354 = vpack.c.b16 %v2313, %v2313
      %v2355 = vpack.c.b16 %v2314, %v2314
      %v2356 = vpack.c.b16 %v2315, %v2315
      %v2357 = vpack.c.b16 %v2316, %v2316
      %v2358 = vpack.c.b16 %v2317, %v2317
      %v2359 = vpack.c.b16 %v2318, %v2318
      %v2360 = vpack.c.b16 %v2319, %v2319
      %v2361 = vpack.c.b16 %v2320, %v2320
      %v2362 = vpack.c.b16 %v2321, %v2321
      %v2363 = vpack.c.b16 %v2322, %v2322
      %v2364 = vpack.c.b16 %v2323, %v2323
      %v2365 = vpack.c.b16 %v2324, %v2324
      %v2366 = vpack.c.b16 %v2325, %v2325
      %v2367 = vpack.c.b16 %v2326, %v2326
      %v2368 = vpack.c.b16 %v2327, %v2327
      %v2369 = vpack.c.b16 %v2328, %v2328
      %v2370 = vpack.c.b16 %v2329, %v2329
      %v2371 = vpack.c.b16 %v2330, %v2330
      %v2372 = vpack.c.b16 %v2331, %v2331
      %v2373 = vpack.c.b16 %v2332, %v2332
      %v2374 = vpack.c.b16 %v2333, %v2333
      %v2375 = vpack.c.b16 %v2334, %v2334
      %v2376 = vpack.c.b16 %v2335, %v2335
      %v2377 = vpack.c.b16 %v2336, %v2336
      %v2378 = vpack.c.b16 %v2337, %v2337
      %v2379 = vpack.c.b16 %v2338, %v2338
      %v2380 = vpack.c.b16 %v2339, %v2339
      %v2381 = vpack.c.b16 %v2340, %v2340
      %v2382 = vpack.c.b16 %v2341, %v2341
      %v2383 = vpack.c.b16 %v2342, %v2342
      %v2384 = vpack.c.b16 %v2343, %v2343
      %v2385 = vpack.c.b16 %v2344, %v2344
      %v2386 = vpack.c.b16 %v2345, %v2345
      %v2387 = vpack.c.b16 %v2346, %v2346
      %v2388 = vpack.c.b16 %v2347, %v2347
      %v2389 = vpack.c.b16 %v2348, %v2348
      %2431 = vst [vmem:[#allocation3 + $0x10] sm:$0xf] %v2349
      %2432 = vst [vmem:[#allocation3 + $0x34] sm:$0xf] %v2350
      %2433 = vst [vmem:[#allocation3 + $0x58] sm:$0xf] %v2351
      %2434 = vst [vmem:[#allocation3 + $0x7c] sm:$0xf] %v2352
      %2435 = vst [vmem:[#allocation3 + $0xa0] sm:$0xf] %v2353
      %2436 = vst [vmem:[#allocation3 + $0xc4] sm:$0xf] %v2354
      %2437 = vst [vmem:[#allocation3 + $0xe8] sm:$0xf] %v2355
      %2438 = vst [vmem:[#allocation3 + $0x10c] sm:$0xf] %v2356
      %2439 = vst [vmem:[#allocation3 + $0x130] sm:$0xf] %v2357
      %2440 = vst [vmem:[#allocation3 + $0x154] sm:$0xf] %v2358
      %2441 = vst [vmem:[#allocation3 + $0x178] sm:$0xf] %v2359
      %2442 = vst [vmem:[#allocation3 + $0x19c] sm:$0xf] %v2360
      %2443 = vst [vmem:[#allocation3 + $0x1c0] sm:$0xf] %v2361
      %2444 = vst [vmem:[#allocation3 + $0x1e4] sm:$0xf] %v2362
      %2445 = vst [vmem:[#allocation3 + $0x208] sm:$0xf] %v2363
      %2446 = vst [vmem:[#allocation3 + $0x22c] sm:$0xf] %v2364
      %2447 = vst [vmem:[#allocation3 + $0x250] sm:$0xf] %v2365
      %2448 = vst [vmem:[#allocation3 + $0x274] sm:$0xf] %v2366
      %2449 = vst [vmem:[#allocation3 + $0x298] sm:$0xf] %v2367
      %2450 = vst [vmem:[#allocation3 + $0x2bc] sm:$0xf] %v2368
      %2451 = vst [vmem:[#allocation3 + $0x2e0] sm:$0xf] %v2369
      %2452 = vst [vmem:[#allocation3 + $0x304] sm:$0xf] %v2370
      %2453 = vst [vmem:[#allocation3 + $0x328] sm:$0xf] %v2371
      %2454 = vst [vmem:[#allocation3 + $0x34c] sm:$0xf] %v2372
      %2455 = vst [vmem:[#allocation3 + $0x370] sm:$0xf] %v2373
      %2456 = vst [vmem:[#allocation3 + $0x394] sm:$0xf] %v2374
      %2457 = vst [vmem:[#allocation3 + $0x3b8] sm:$0xf] %v2375
      %2458 = vst [vmem:[#allocation3 + $0x3dc] sm:$0xf] %v2376
      %2459 = vst [vmem:[#allocation3 + $0x400] sm:$0xf] %v2377
      %2460 = vst [vmem:[#allocation3 + $0x424] sm:$0xf] %v2378
      %2461 = vst [vmem:[#allocation3 + $0x448] sm:$0xf] %v2379
      %2462 = vst [vmem:[#allocation3 + $0x46c] sm:$0xf] %v2380
      %2463 = vst [vmem:[#allocation3 + $0x490] sm:$0xf] %v2381
      %2464 = vst [vmem:[#allocation3 + $0x4b4] sm:$0xf] %v2382
      %2465 = vst [vmem:[#allocation3 + $0x4d8] sm:$0xf] %v2383
      %2466 = vst [vmem:[#allocation3 + $0x4fc] sm:$0xf] %v2384
      %2467 = vst [vmem:[#allocation3 + $0x520] sm:$0xf] %v2385
      %2468 = vst [vmem:[#allocation3 + $0x544] sm:$0xf] %v2386
      %2469 = vst [vmem:[#allocation3 + $0x568] sm:$0xf] %v2387
      %2470 = vst [vmem:[#allocation3 + $0x58c] sm:$0xf] %v2388
      %2471 = vst [vmem:[#allocation3 + $0x5b0] sm:$0x3] %v2389
      %v2472 = vld [vmem:[#allocation2 + $0x19] sm:$0xff]
      %v2473 = vld [vmem:[#allocation2 + $0x21] sm:$0xff]
      %v2474 = vld [vmem:[#allocation2 + $0x29] sm:$0xff]
      %v2475 = vld [vmem:[#allocation2 + $0x31] sm:$0xff]
      %v2476 = vld [vmem:[#allocation2 + $0x39] sm:$0xff]
      %v2477 = vld [vmem:[#allocation2 + $0x41] sm:$0xff]
      %v2478 = vld [vmem:[#allocation2 + $0x49] sm:$0xff]
      %v2479 = vld [vmem:[#allocation2 + $0x51] sm:$0xff]
      %v2480 = vld [vmem:[#allocation2 + $0x59] sm:$0xff]
      %v2481 = vld [vmem:[#allocation2 + $0x61] sm:$0xff]
      %v2482 = vld [vmem:[#allocation2 + $0x69] sm:$0xff]
      %v2483 = vld [vmem:[#allocation2 + $0x71] sm:$0xff]
      %v2484 = vld [vmem:[#allocation2 + $0x79] sm:$0xff]
      %v2485 = vld [vmem:[#allocation2 + $0x81] sm:$0xff]
      %v2486 = vld [vmem:[#allocation2 + $0x89] sm:$0xff]
      %v2487 = vld [vmem:[#allocation2 + $0x91] sm:$0xff]
      %v2488 = vld [vmem:[#allocation2 + $0x99] sm:$0xff]
      %v2489 = vld [vmem:[#allocation2 + $0xa1] sm:$0xff]
      %v2490 = vld [vmem:[#allocation2 + $0xa9] sm:$0xff]
      %v2491 = vld [vmem:[#allocation2 + $0xb1] sm:$0xff]
      %v2492 = vld [vmem:[#allocation2 + $0xb9] sm:$0xff]
      %v2493 = vld [vmem:[#allocation2 + $0xc1] sm:$0xff]
      %v2494 = vld [vmem:[#allocation2 + $0xc9] sm:$0xff]
      %v2495 = vld [vmem:[#allocation2 + $0xd1] sm:$0xff]
      %v2496 = vld [vmem:[#allocation2 + $0xd9] sm:$0xff]
      %v2497 = vld [vmem:[#allocation2 + $0xe1] sm:$0xff]
      %v2498 = vld [vmem:[#allocation2 + $0xe9] sm:$0xff]
      %v2499 = vld [vmem:[#allocation2 + $0xf1] sm:$0xff]
      %v2500 = vld [vmem:[#allocation2 + $0xf9] sm:$0xff]
      %v2501 = vld [vmem:[#allocation2 + $0x101] sm:$0xff]
      %v2502 = vld [vmem:[#allocation2 + $0x109] sm:$0xff]
      %v2503 = vld [vmem:[#allocation2 + $0x111] sm:$0xff]
      %v2504 = vld [vmem:[#allocation2 + $0x119] sm:$0xff]
      %v2505 = vld [vmem:[#allocation2 + $0x121] sm:$0xff]
      %v2506 = vld [vmem:[#allocation2 + $0x129] sm:$0xff]
      %v2507 = vld [vmem:[#allocation2 + $0x131] sm:$0xff]
      %v2508 = vld [vmem:[#allocation2 + $0x139] sm:$0xff]
      %v2509 = vld [vmem:[#allocation2 + $0x141] sm:$0xff]
      %v2510 = vld [vmem:[#allocation2 + $0x149] sm:$0xff]
      %v2511 = vld [vmem:[#allocation2 + $0x151] sm:$0xff]
      %v2512 = vld [vmem:[#allocation2 + $0x159] sm:$0xf]
      %v2513 = vpack.c.bf16 %v2473, %v2472
      %v2514 = vpack.c.bf16 %v2475, %v2474
      %v2515 = vpack.c.bf16 %v2477, %v2476
      %v2516 = vpack.c.bf16 %v2479, %v2478
      %v2517 = vpack.c.bf16 %v2481, %v2480
      %v2518 = vpack.c.bf16 %v2483, %v2482
      %v2519 = vpack.c.bf16 %v2485, %v2484
      %v2520 = vpack.c.bf16 %v2487, %v2486
      %v2521 = vpack.c.bf16 %v2489, %v2488
      %v2522 = vpack.c.bf16 %v2491, %v2490
      %v2523 = vpack.c.bf16 %v2493, %v2492
      %v2524 = vpack.c.bf16 %v2495, %v2494
      %v2525 = vpack.c.bf16 %v2497, %v2496
      %v2526 = vpack.c.bf16 %v2499, %v2498
      %v2527 = vpack.c.bf16 %v2501, %v2500
      %v2528 = vpack.c.bf16 %v2503, %v2502
      %v2529 = vpack.c.bf16 %v2505, %v2504
      %v2530 = vpack.c.bf16 %v2507, %v2506
      %v2531 = vpack.c.bf16 %v2509, %v2508
      %v2532 = vpack.c.bf16 %v2511, %v2510
      %v2533 = vpack.c.bf16 %v2512, %v2512
      %v2555 = vunpack.c.l.b16 %v2513
      %v2556 = vunpack.c.h.b16 %v2513
      %v2557 = vunpack.c.l.b16 %v2514
      %v2558 = vunpack.c.h.b16 %v2514
      %v2559 = vunpack.c.l.b16 %v2515
      %v2560 = vunpack.c.h.b16 %v2515
      %v2561 = vunpack.c.l.b16 %v2516
      %v2562 = vunpack.c.h.b16 %v2516
      %v2563 = vunpack.c.l.b16 %v2517
      %v2564 = vunpack.c.h.b16 %v2517
      %v2565 = vunpack.c.l.b16 %v2518
      %v2566 = vunpack.c.h.b16 %v2518
      %v2567 = vunpack.c.l.b16 %v2519
      %v2568 = vunpack.c.h.b16 %v2519
      %v2569 = vunpack.c.l.b16 %v2520
      %v2570 = vunpack.c.h.b16 %v2520
      %v2571 = vunpack.c.l.b16 %v2521
      %v2572 = vunpack.c.h.b16 %v2521
      %v2573 = vunpack.c.l.b16 %v2522
      %v2574 = vunpack.c.h.b16 %v2522
      %v2575 = vunpack.c.l.b16 %v2523
      %v2576 = vunpack.c.h.b16 %v2523
      %v2577 = vunpack.c.l.b16 %v2524
      %v2578 = vunpack.c.h.b16 %v2524
      %v2579 = vunpack.c.l.b16 %v2525
      %v2580 = vunpack.c.h.b16 %v2525
      %v2581 = vunpack.c.l.b16 %v2526
      %v2582 = vunpack.c.h.b16 %v2526
      %v2583 = vunpack.c.l.b16 %v2527
      %v2584 = vunpack.c.h.b16 %v2527
      %v2585 = vunpack.c.l.b16 %v2528
      %v2586 = vunpack.c.h.b16 %v2528
      %v2587 = vunpack.c.l.b16 %v2529
      %v2588 = vunpack.c.h.b16 %v2529
      %v2589 = vunpack.c.l.b16 %v2530
      %v2590 = vunpack.c.h.b16 %v2530
      %v2591 = vunpack.c.l.b16 %v2531
      %v2592 = vunpack.c.h.b16 %v2531
      %v2593 = vunpack.c.l.b16 %v2532
      %v2594 = vunpack.c.h.b16 %v2532
      %v2595 = vunpack.c.l.b16 %v2533
      %v2596 = vpack.c.b16 %v2555, %v2555
      %v2597 = vpack.c.b16 %v2556, %v2556
      %v2598 = vpack.c.b16 %v2557, %v2557
      %v2599 = vpack.c.b16 %v2558, %v2558
      %v2600 = vpack.c.b16 %v2559, %v2559
      %v2601 = vpack.c.b16 %v2560, %v2560
      %v2602 = vpack.c.b16 %v2561, %v2561
      %v2603 = vpack.c.b16 %v2562, %v2562
      %v2604 = vpack.c.b16 %v2563, %v2563
      %v2605 = vpack.c.b16 %v2564, %v2564
      %v2606 = vpack.c.b16 %v2565, %v2565
      %v2607 = vpack.c.b16 %v2566, %v2566
      %v2608 = vpack.c.b16 %v2567, %v2567
      %v2609 = vpack.c.b16 %v2568, %v2568
      %v2610 = vpack.c.b16 %v2569, %v2569
      %v2611 = vpack.c.b16 %v2570, %v2570
      %v2612 = vpack.c.b16 %v2571, %v2571
      %v2613 = vpack.c.b16 %v2572, %v2572
      %v2614 = vpack.c.b16 %v2573, %v2573
      %v2615 = vpack.c.b16 %v2574, %v2574
      %v2616 = vpack.c.b16 %v2575, %v2575
      %v2617 = vpack.c.b16 %v2576, %v2576
      %v2618 = vpack.c.b16 %v2577, %v2577
      %v2619 = vpack.c.b16 %v2578, %v2578
      %v2620 = vpack.c.b16 %v2579, %v2579
      %v2621 = vpack.c.b16 %v2580, %v2580
      %v2622 = vpack.c.b16 %v2581, %v2581
      %v2623 = vpack.c.b16 %v2582, %v2582
      %v2624 = vpack.c.b16 %v2583, %v2583
      %v2625 = vpack.c.b16 %v2584, %v2584
      %v2626 = vpack.c.b16 %v2585, %v2585
      %v2627 = vpack.c.b16 %v2586, %v2586
      %v2628 = vpack.c.b16 %v2587, %v2587
      %v2629 = vpack.c.b16 %v2588, %v2588
      %v2630 = vpack.c.b16 %v2589, %v2589
      %v2631 = vpack.c.b16 %v2590, %v2590
      %v2632 = vpack.c.b16 %v2591, %v2591
      %v2633 = vpack.c.b16 %v2592, %v2592
      %v2634 = vpack.c.b16 %v2593, %v2593
      %v2635 = vpack.c.b16 %v2594, %v2594
      %v2636 = vpack.c.b16 %v2595, %v2595
      %2678 = vst [vmem:[#allocation3 + $0x14] sm:$0xf] %v2596
      %2679 = vst [vmem:[#allocation3 + $0x38] sm:$0xf] %v2597
      %2680 = vst [vmem:[#allocation3 + $0x5c] sm:$0xf] %v2598
      %2681 = vst [vmem:[#allocation3 + $0x80] sm:$0xf] %v2599
      %2682 = vst [vmem:[#allocation3 + $0xa4] sm:$0xf] %v2600
      %2683 = vst [vmem:[#allocation3 + $0xc8] sm:$0xf] %v2601
      %2684 = vst [vmem:[#allocation3 + $0xec] sm:$0xf] %v2602
      %2685 = vst [vmem:[#allocation3 + $0x110] sm:$0xf] %v2603
      %2686 = vst [vmem:[#allocation3 + $0x134] sm:$0xf] %v2604
      %2687 = vst [vmem:[#allocation3 + $0x158] sm:$0xf] %v2605
      %2688 = vst [vmem:[#allocation3 + $0x17c] sm:$0xf] %v2606
      %2689 = vst [vmem:[#allocation3 + $0x1a0] sm:$0xf] %v2607
      %2690 = vst [vmem:[#allocation3 + $0x1c4] sm:$0xf] %v2608
      %2691 = vst [vmem:[#allocation3 + $0x1e8] sm:$0xf] %v2609
      %2692 = vst [vmem:[#allocation3 + $0x20c] sm:$0xf] %v2610
      %2693 = vst [vmem:[#allocation3 + $0x230] sm:$0xf] %v2611
      %2694 = vst [vmem:[#allocation3 + $0x254] sm:$0xf] %v2612
      %2695 = vst [vmem:[#allocation3 + $0x278] sm:$0xf] %v2613
      %2696 = vst [vmem:[#allocation3 + $0x29c] sm:$0xf] %v2614
      %2697 = vst [vmem:[#allocation3 + $0x2c0] sm:$0xf] %v2615
      %2698 = vst [vmem:[#allocation3 + $0x2e4] sm:$0xf] %v2616
      %2699 = vst [vmem:[#allocation3 + $0x308] sm:$0xf] %v2617
      %2700 = vst [vmem:[#allocation3 + $0x32c] sm:$0xf] %v2618
      %2701 = vst [vmem:[#allocation3 + $0x350] sm:$0xf] %v2619
      %2702 = vst [vmem:[#allocation3 + $0x374] sm:$0xf] %v2620
      %2703 = vst [vmem:[#allocation3 + $0x398] sm:$0xf] %v2621
      %2704 = vst [vmem:[#allocation3 + $0x3bc] sm:$0xf] %v2622
      %2705 = vst [vmem:[#allocation3 + $0x3e0] sm:$0xf] %v2623
      %2706 = vst [vmem:[#allocation3 + $0x404] sm:$0xf] %v2624
      %2707 = vst [vmem:[#allocation3 + $0x428] sm:$0xf] %v2625
      %2708 = vst [vmem:[#allocation3 + $0x44c] sm:$0xf] %v2626
      %2709 = vst [vmem:[#allocation3 + $0x470] sm:$0xf] %v2627
      %2710 = vst [vmem:[#allocation3 + $0x494] sm:$0xf] %v2628
      %2711 = vst [vmem:[#allocation3 + $0x4b8] sm:$0xf] %v2629
      %2712 = vst [vmem:[#allocation3 + $0x4dc] sm:$0xf] %v2630
      %2713 = vst [vmem:[#allocation3 + $0x500] sm:$0xf] %v2631
      %2714 = vst [vmem:[#allocation3 + $0x524] sm:$0xf] %v2632
      %2715 = vst [vmem:[#allocation3 + $0x548] sm:$0xf] %v2633
      %2716 = vst [vmem:[#allocation3 + $0x56c] sm:$0xf] %v2634
      %2717 = vst [vmem:[#allocation3 + $0x590] sm:$0xf] %v2635
      %2718 = vst [vmem:[#allocation3 + $0x5b4] sm:$0x3] %v2636
      %v2719 = vld [vmem:[#allocation2 + $0x29] sm:$0xff]
      %v2720 = vld [vmem:[#allocation2 + $0x31] sm:$0xff]
      %v2721 = vld [vmem:[#allocation2 + $0x39] sm:$0xff]
      %v2722 = vld [vmem:[#allocation2 + $0x41] sm:$0xff]
      %v2723 = vld [vmem:[#allocation2 + $0x49] sm:$0xff]
      %v2724 = vld [vmem:[#allocation2 + $0x51] sm:$0xff]
      %v2725 = vld [vmem:[#allocation2 + $0x59] sm:$0xff]
      %v2726 = vld [vmem:[#allocation2 + $0x61] sm:$0xff]
      %v2727 = vld [vmem:[#allocation2 + $0x69] sm:$0xff]
      %v2728 = vld [vmem:[#allocation2 + $0x71] sm:$0xff]
      %v2729 = vld [vmem:[#allocation2 + $0x79] sm:$0xff]
      %v2730 = vld [vmem:[#allocation2 + $0x81] sm:$0xff]
      %v2731 = vld [vmem:[#allocation2 + $0x89] sm:$0xff]
      %v2732 = vld [vmem:[#allocation2 + $0x91] sm:$0xff]
      %v2733 = vld [vmem:[#allocation2 + $0x99] sm:$0xff]
      %v2734 = vld [vmem:[#allocation2 + $0xa1] sm:$0xff]
      %v2735 = vld [vmem:[#allocation2 + $0xa9] sm:$0xff]
      %v2736 = vld [vmem:[#allocation2 + $0xb1] sm:$0xff]
      %v2737 = vld [vmem:[#allocation2 + $0xb9] sm:$0xff]
      %v2738 = vld [vmem:[#allocation2 + $0xc1] sm:$0xff]
      %v2739 = vld [vmem:[#allocation2 + $0xc9] sm:$0xff]
      %v2740 = vld [vmem:[#allocation2 + $0xd1] sm:$0xff]
      %v2741 = vld [vmem:[#allocation2 + $0xd9] sm:$0xff]
      %v2742 = vld [vmem:[#allocation2 + $0xe1] sm:$0xff]
      %v2743 = vld [vmem:[#allocation2 + $0xe9] sm:$0xff]
      %v2744 = vld [vmem:[#allocation2 + $0xf1] sm:$0xff]
      %v2745 = vld [vmem:[#allocation2 + $0xf9] sm:$0xff]
      %v2746 = vld [vmem:[#allocation2 + $0x101] sm:$0xff]
      %v2747 = vld [vmem:[#allocation2 + $0x109] sm:$0xff]
      %v2748 = vld [vmem:[#allocation2 + $0x111] sm:$0xff]
      %v2749 = vld [vmem:[#allocation2 + $0x119] sm:$0xff]
      %v2750 = vld [vmem:[#allocation2 + $0x121] sm:$0xff]
      %v2751 = vld [vmem:[#allocation2 + $0x129] sm:$0xff]
      %v2752 = vld [vmem:[#allocation2 + $0x131] sm:$0xff]
      %v2753 = vld [vmem:[#allocation2 + $0x139] sm:$0xff]
      %v2754 = vld [vmem:[#allocation2 + $0x141] sm:$0xff]
      %v2755 = vld [vmem:[#allocation2 + $0x149] sm:$0xff]
      %v2756 = vld [vmem:[#allocation2 + $0x151] sm:$0xff]
      %v2757 = vld [vmem:[#allocation2 + $0x159] sm:$0xff]
      %v2758 = vld [vmem:[#allocation2 + $0x161] sm:$0xff]
      %v2759 = vld [vmem:[#allocation2 + $0x169] sm:$0xf]
      %v2760 = vpack.c.bf16 %v2720, %v2719
      %v2761 = vpack.c.bf16 %v2722, %v2721
      %v2762 = vpack.c.bf16 %v2724, %v2723
      %v2763 = vpack.c.bf16 %v2726, %v2725
      %v2764 = vpack.c.bf16 %v2728, %v2727
      %v2765 = vpack.c.bf16 %v2730, %v2729
      %v2766 = vpack.c.bf16 %v2732, %v2731
      %v2767 = vpack.c.bf16 %v2734, %v2733
      %v2768 = vpack.c.bf16 %v2736, %v2735
      %v2769 = vpack.c.bf16 %v2738, %v2737
      %v2770 = vpack.c.bf16 %v2740, %v2739
      %v2771 = vpack.c.bf16 %v2742, %v2741
      %v2772 = vpack.c.bf16 %v2744, %v2743
      %v2773 = vpack.c.bf16 %v2746, %v2745
      %v2774 = vpack.c.bf16 %v2748, %v2747
      %v2775 = vpack.c.bf16 %v2750, %v2749
      %v2776 = vpack.c.bf16 %v2752, %v2751
      %v2777 = vpack.c.bf16 %v2754, %v2753
      %v2778 = vpack.c.bf16 %v2756, %v2755
      %v2779 = vpack.c.bf16 %v2758, %v2757
      %v2780 = vpack.c.bf16 %v2759, %v2759
      %v2802 = vunpack.c.l.b16 %v2760
      %v2803 = vunpack.c.h.b16 %v2760
      %v2804 = vunpack.c.l.b16 %v2761
      %v2805 = vunpack.c.h.b16 %v2761
      %v2806 = vunpack.c.l.b16 %v2762
      %v2807 = vunpack.c.h.b16 %v2762
      %v2808 = vunpack.c.l.b16 %v2763
      %v2809 = vunpack.c.h.b16 %v2763
      %v2810 = vunpack.c.l.b16 %v2764
      %v2811 = vunpack.c.h.b16 %v2764
      %v2812 = vunpack.c.l.b16 %v2765
      %v2813 = vunpack.c.h.b16 %v2765
      %v2814 = vunpack.c.l.b16 %v2766
      %v2815 = vunpack.c.h.b16 %v2766
      %v2816 = vunpack.c.l.b16 %v2767
      %v2817 = vunpack.c.h.b16 %v2767
      %v2818 = vunpack.c.l.b16 %v2768
      %v2819 = vunpack.c.h.b16 %v2768
      %v2820 = vunpack.c.l.b16 %v2769
      %v2821 = vunpack.c.h.b16 %v2769
      %v2822 = vunpack.c.l.b16 %v2770
      %v2823 = vunpack.c.h.b16 %v2770
      %v2824 = vunpack.c.l.b16 %v2771
      %v2825 = vunpack.c.h.b16 %v2771
      %v2826 = vunpack.c.l.b16 %v2772
      %v2827 = vunpack.c.h.b16 %v2772
      %v2828 = vunpack.c.l.b16 %v2773
      %v2829 = vunpack.c.h.b16 %v2773
      %v2830 = vunpack.c.l.b16 %v2774
      %v2831 = vunpack.c.h.b16 %v2774
      %v2832 = vunpack.c.l.b16 %v2775
      %v2833 = vunpack.c.h.b16 %v2775
      %v2834 = vunpack.c.l.b16 %v2776
      %v2835 = vunpack.c.h.b16 %v2776
      %v2836 = vunpack.c.l.b16 %v2777
      %v2837 = vunpack.c.h.b16 %v2777
      %v2838 = vunpack.c.l.b16 %v2778
      %v2839 = vunpack.c.h.b16 %v2778
      %v2840 = vunpack.c.l.b16 %v2779
      %v2841 = vunpack.c.h.b16 %v2779
      %v2842 = vunpack.c.l.b16 %v2780
      %v2843 = vpack.c.b16 %v2802, %v2802
      %v2844 = vpack.c.b16 %v2803, %v2803
      %v2845 = vpack.c.b16 %v2804, %v2804
      %v2846 = vpack.c.b16 %v2805, %v2805
      %v2847 = vpack.c.b16 %v2806, %v2806
      %v2848 = vpack.c.b16 %v2807, %v2807
      %v2849 = vpack.c.b16 %v2808, %v2808
      %v2850 = vpack.c.b16 %v2809, %v2809
      %v2851 = vpack.c.b16 %v2810, %v2810
      %v2852 = vpack.c.b16 %v2811, %v2811
      %v2853 = vpack.c.b16 %v2812, %v2812
      %v2854 = vpack.c.b16 %v2813, %v2813
      %v2855 = vpack.c.b16 %v2814, %v2814
      %v2856 = vpack.c.b16 %v2815, %v2815
      %v2857 = vpack.c.b16 %v2816, %v2816
      %v2858 = vpack.c.b16 %v2817, %v2817
      %v2859 = vpack.c.b16 %v2818, %v2818
      %v2860 = vpack.c.b16 %v2819, %v2819
      %v2861 = vpack.c.b16 %v2820, %v2820
      %v2862 = vpack.c.b16 %v2821, %v2821
      %v2863 = vpack.c.b16 %v2822, %v2822
      %v2864 = vpack.c.b16 %v2823, %v2823
      %v2865 = vpack.c.b16 %v2824, %v2824
      %v2866 = vpack.c.b16 %v2825, %v2825
      %v2867 = vpack.c.b16 %v2826, %v2826
      %v2868 = vpack.c.b16 %v2827, %v2827
      %v2869 = vpack.c.b16 %v2828, %v2828
      %v2870 = vpack.c.b16 %v2829, %v2829
      %v2871 = vpack.c.b16 %v2830, %v2830
      %v2872 = vpack.c.b16 %v2831, %v2831
      %v2873 = vpack.c.b16 %v2832, %v2832
      %v2874 = vpack.c.b16 %v2833, %v2833
      %v2875 = vpack.c.b16 %v2834, %v2834
      %v2876 = vpack.c.b16 %v2835, %v2835
      %v2877 = vpack.c.b16 %v2836, %v2836
      %v2878 = vpack.c.b16 %v2837, %v2837
      %v2879 = vpack.c.b16 %v2838, %v2838
      %v2880 = vpack.c.b16 %v2839, %v2839
      %v2881 = vpack.c.b16 %v2840, %v2840
      %v2882 = vpack.c.b16 %v2841, %v2841
      %v2883 = vpack.c.b16 %v2842, %v2842
      %2925 = vst [vmem:[#allocation3 + $0x18] sm:$0xf] %v2843
      %2926 = vst [vmem:[#allocation3 + $0x3c] sm:$0xf] %v2844
      %2927 = vst [vmem:[#allocation3 + $0x60] sm:$0xf] %v2845
      %2928 = vst [vmem:[#allocation3 + $0x84] sm:$0xf] %v2846
      %2929 = vst [vmem:[#allocation3 + $0xa8] sm:$0xf] %v2847
      %2930 = vst [vmem:[#allocation3 + $0xcc] sm:$0xf] %v2848
      %2931 = vst [vmem:[#allocation3 + $0xf0] sm:$0xf] %v2849
      %2932 = vst [vmem:[#allocation3 + $0x114] sm:$0xf] %v2850
      %2933 = vst [vmem:[#allocation3 + $0x138] sm:$0xf] %v2851
      %2934 = vst [vmem:[#allocation3 + $0x15c] sm:$0xf] %v2852
      %2935 = vst [vmem:[#allocation3 + $0x180] sm:$0xf] %v2853
      %2936 = vst [vmem:[#allocation3 + $0x1a4] sm:$0xf] %v2854
      %2937 = vst [vmem:[#allocation3 + $0x1c8] sm:$0xf] %v2855
      %2938 = vst [vmem:[#allocation3 + $0x1ec] sm:$0xf] %v2856
      %2939 = vst [vmem:[#allocation3 + $0x210] sm:$0xf] %v2857
      %2940 = vst [vmem:[#allocation3 + $0x234] sm:$0xf] %v2858
      %2941 = vst [vmem:[#allocation3 + $0x258] sm:$0xf] %v2859
      %2942 = vst [vmem:[#allocation3 + $0x27c] sm:$0xf] %v2860
      %2943 = vst [vmem:[#allocation3 + $0x2a0] sm:$0xf] %v2861
      %2944 = vst [vmem:[#allocation3 + $0x2c4] sm:$0xf] %v2862
      %2945 = vst [vmem:[#allocation3 + $0x2e8] sm:$0xf] %v2863
      %2946 = vst [vmem:[#allocation3 + $0x30c] sm:$0xf] %v2864
      %2947 = vst [vmem:[#allocation3 + $0x330] sm:$0xf] %v2865
      %2948 = vst [vmem:[#allocation3 + $0x354] sm:$0xf] %v2866
      %2949 = vst [vmem:[#allocation3 + $0x378] sm:$0xf] %v2867
      %2950 = vst [vmem:[#allocation3 + $0x39c] sm:$0xf] %v2868
      %2951 = vst [vmem:[#allocation3 + $0x3c0] sm:$0xf] %v2869
      %2952 = vst [vmem:[#allocation3 + $0x3e4] sm:$0xf] %v2870
      %2953 = vst [vmem:[#allocation3 + $0x408] sm:$0xf] %v2871
      %2954 = vst [vmem:[#allocation3 + $0x42c] sm:$0xf] %v2872
      %2955 = vst [vmem:[#allocation3 + $0x450] sm:$0xf] %v2873
      %2956 = vst [vmem:[#allocation3 + $0x474] sm:$0xf] %v2874
      %2957 = vst [vmem:[#allocation3 + $0x498] sm:$0xf] %v2875
      %2958 = vst [vmem:[#allocation3 + $0x4bc] sm:$0xf] %v2876
      %2959 = vst [vmem:[#allocation3 + $0x4e0] sm:$0xf] %v2877
      %2960 = vst [vmem:[#allocation3 + $0x504] sm:$0xf] %v2878
      %2961 = vst [vmem:[#allocation3 + $0x528] sm:$0xf] %v2879
      %2962 = vst [vmem:[#allocation3 + $0x54c] sm:$0xf] %v2880
      %2963 = vst [vmem:[#allocation3 + $0x570] sm:$0xf] %v2881
      %2964 = vst [vmem:[#allocation3 + $0x594] sm:$0xf] %v2882
      %2965 = vst [vmem:[#allocation3 + $0x5b8] sm:$0x3] %v2883
      %v2966 = vld [vmem:[#allocation2 + $0x2a] sm:$0xff]
      %v2967 = vld [vmem:[#allocation2 + $0x32] sm:$0xff]
      %v2968 = vld [vmem:[#allocation2 + $0x3a] sm:$0xff]
      %v2969 = vld [vmem:[#allocation2 + $0x42] sm:$0xff]
      %v2970 = vld [vmem:[#allocation2 + $0x4a] sm:$0xff]
      %v2971 = vld [vmem:[#allocation2 + $0x52] sm:$0xff]
      %v2972 = vld [vmem:[#allocation2 + $0x5a] sm:$0xff]
      %v2973 = vld [vmem:[#allocation2 + $0x62] sm:$0xff]
      %v2974 = vld [vmem:[#allocation2 + $0x6a] sm:$0xff]
      %v2975 = vld [vmem:[#allocation2 + $0x72] sm:$0xff]
      %v2976 = vld [vmem:[#allocation2 + $0x7a] sm:$0xff]
      %v2977 = vld [vmem:[#allocation2 + $0x82] sm:$0xff]
      %v2978 = vld [vmem:[#allocation2 + $0x8a] sm:$0xff]
      %v2979 = vld [vmem:[#allocation2 + $0x92] sm:$0xff]
      %v2980 = vld [vmem:[#allocation2 + $0x9a] sm:$0xff]
      %v2981 = vld [vmem:[#allocation2 + $0xa2] sm:$0xff]
      %v2982 = vld [vmem:[#allocation2 + $0xaa] sm:$0xff]
      %v2983 = vld [vmem:[#allocation2 + $0xb2] sm:$0xff]
      %v2984 = vld [vmem:[#allocation2 + $0xba] sm:$0xff]
      %v2985 = vld [vmem:[#allocation2 + $0xc2] sm:$0xff]
      %v2986 = vld [vmem:[#allocation2 + $0xca] sm:$0xff]
      %v2987 = vld [vmem:[#allocation2 + $0xd2] sm:$0xff]
      %v2988 = vld [vmem:[#allocation2 + $0xda] sm:$0xff]
      %v2989 = vld [vmem:[#allocation2 + $0xe2] sm:$0xff]
      %v2990 = vld [vmem:[#allocation2 + $0xea] sm:$0xff]
      %v2991 = vld [vmem:[#allocation2 + $0xf2] sm:$0xff]
      %v2992 = vld [vmem:[#allocation2 + $0xfa] sm:$0xff]
      %v2993 = vld [vmem:[#allocation2 + $0x102] sm:$0xff]
      %v2994 = vld [vmem:[#allocation2 + $0x10a] sm:$0xff]
      %v2995 = vld [vmem:[#allocation2 + $0x112] sm:$0xff]
      %v2996 = vld [vmem:[#allocation2 + $0x11a] sm:$0xff]
      %v2997 = vld [vmem:[#allocation2 + $0x122] sm:$0xff]
      %v2998 = vld [vmem:[#allocation2 + $0x12a] sm:$0xff]
      %v2999 = vld [vmem:[#allocation2 + $0x132] sm:$0xff]
      %v3000 = vld [vmem:[#allocation2 + $0x13a] sm:$0xff]
      %v3001 = vld [vmem:[#allocation2 + $0x142] sm:$0xff]
      %v3002 = vld [vmem:[#allocation2 + $0x14a] sm:$0xff]
      %v3003 = vld [vmem:[#allocation2 + $0x152] sm:$0xff]
      %v3004 = vld [vmem:[#allocation2 + $0x15a] sm:$0xff]
      %v3005 = vld [vmem:[#allocation2 + $0x162] sm:$0xff]
      %v3006 = vld [vmem:[#allocation2 + $0x16a] sm:$0xf]
      %v3007 = vpack.c.bf16 %v2967, %v2966
      %v3008 = vpack.c.bf16 %v2969, %v2968
      %v3009 = vpack.c.bf16 %v2971, %v2970
      %v3010 = vpack.c.bf16 %v2973, %v2972
      %v3011 = vpack.c.bf16 %v2975, %v2974
      %v3012 = vpack.c.bf16 %v2977, %v2976
      %v3013 = vpack.c.bf16 %v2979, %v2978
      %v3014 = vpack.c.bf16 %v2981, %v2980
      %v3015 = vpack.c.bf16 %v2983, %v2982
      %v3016 = vpack.c.bf16 %v2985, %v2984
      %v3017 = vpack.c.bf16 %v2987, %v2986
      %v3018 = vpack.c.bf16 %v2989, %v2988
      %v3019 = vpack.c.bf16 %v2991, %v2990
      %v3020 = vpack.c.bf16 %v2993, %v2992
      %v3021 = vpack.c.bf16 %v2995, %v2994
      %v3022 = vpack.c.bf16 %v2997, %v2996
      %v3023 = vpack.c.bf16 %v2999, %v2998
      %v3024 = vpack.c.bf16 %v3001, %v3000
      %v3025 = vpack.c.bf16 %v3003, %v3002
      %v3026 = vpack.c.bf16 %v3005, %v3004
      %v3027 = vpack.c.bf16 %v3006, %v3006
      %v3049 = vunpack.c.l.b16 %v3007
      %v3050 = vunpack.c.h.b16 %v3007
      %v3051 = vunpack.c.l.b16 %v3008
      %v3052 = vunpack.c.h.b16 %v3008
      %v3053 = vunpack.c.l.b16 %v3009
      %v3054 = vunpack.c.h.b16 %v3009
      %v3055 = vunpack.c.l.b16 %v3010
      %v3056 = vunpack.c.h.b16 %v3010
      %v3057 = vunpack.c.l.b16 %v3011
      %v3058 = vunpack.c.h.b16 %v3011
      %v3059 = vunpack.c.l.b16 %v3012
      %v3060 = vunpack.c.h.b16 %v3012
      %v3061 = vunpack.c.l.b16 %v3013
      %v3062 = vunpack.c.h.b16 %v3013
      %v3063 = vunpack.c.l.b16 %v3014
      %v3064 = vunpack.c.h.b16 %v3014
      %v3065 = vunpack.c.l.b16 %v3015
      %v3066 = vunpack.c.h.b16 %v3015
      %v3067 = vunpack.c.l.b16 %v3016
      %v3068 = vunpack.c.h.b16 %v3016
      %v3069 = vunpack.c.l.b16 %v3017
      %v3070 = vunpack.c.h.b16 %v3017
      %v3071 = vunpack.c.l.b16 %v3018
      %v3072 = vunpack.c.h.b16 %v3018
      %v3073 = vunpack.c.l.b16 %v3019
      %v3074 = vunpack.c.h.b16 %v3019
      %v3075 = vunpack.c.l.b16 %v3020
      %v3076 = vunpack.c.h.b16 %v3020
      %v3077 = vunpack.c.l.b16 %v3021
      %v3078 = vunpack.c.h.b16 %v3021
      %v3079 = vunpack.c.l.b16 %v3022
      %v3080 = vunpack.c.h.b16 %v3022
      %v3081 = vunpack.c.l.b16 %v3023
      %v3082 = vunpack.c.h.b16 %v3023
      %v3083 = vunpack.c.l.b16 %v3024
      %v3084 = vunpack.c.h.b16 %v3024
      %v3085 = vunpack.c.l.b16 %v3025
      %v3086 = vunpack.c.h.b16 %v3025
      %v3087 = vunpack.c.l.b16 %v3026
      %v3088 = vunpack.c.h.b16 %v3026
      %v3089 = vunpack.c.l.b16 %v3027
      %v3090 = vpack.c.b16 %v3049, %v3049
      %v3091 = vpack.c.b16 %v3050, %v3050
      %v3092 = vpack.c.b16 %v3051, %v3051
      %v3093 = vpack.c.b16 %v3052, %v3052
      %v3094 = vpack.c.b16 %v3053, %v3053
      %v3095 = vpack.c.b16 %v3054, %v3054
      %v3096 = vpack.c.b16 %v3055, %v3055
      %v3097 = vpack.c.b16 %v3056, %v3056
      %v3098 = vpack.c.b16 %v3057, %v3057
      %v3099 = vpack.c.b16 %v3058, %v3058
      %v3100 = vpack.c.b16 %v3059, %v3059
      %v3101 = vpack.c.b16 %v3060, %v3060
      %v3102 = vpack.c.b16 %v3061, %v3061
      %v3103 = vpack.c.b16 %v3062, %v3062
      %v3104 = vpack.c.b16 %v3063, %v3063
      %v3105 = vpack.c.b16 %v3064, %v3064
      %v3106 = vpack.c.b16 %v3065, %v3065
      %v3107 = vpack.c.b16 %v3066, %v3066
      %v3108 = vpack.c.b16 %v3067, %v3067
      %v3109 = vpack.c.b16 %v3068, %v3068
      %v3110 = vpack.c.b16 %v3069, %v3069
      %v3111 = vpack.c.b16 %v3070, %v3070
      %v3112 = vpack.c.b16 %v3071, %v3071
      %v3113 = vpack.c.b16 %v3072, %v3072
      %v3114 = vpack.c.b16 %v3073, %v3073
      %v3115 = vpack.c.b16 %v3074, %v3074
      %v3116 = vpack.c.b16 %v3075, %v3075
      %v3117 = vpack.c.b16 %v3076, %v3076
      %v3118 = vpack.c.b16 %v3077, %v3077
      %v3119 = vpack.c.b16 %v3078, %v3078
      %v3120 = vpack.c.b16 %v3079, %v3079
      %v3121 = vpack.c.b16 %v3080, %v3080
      %v3122 = vpack.c.b16 %v3081, %v3081
      %v3123 = vpack.c.b16 %v3082, %v3082
      %v3124 = vpack.c.b16 %v3083, %v3083
      %v3125 = vpack.c.b16 %v3084, %v3084
      %v3126 = vpack.c.b16 %v3085, %v3085
      %v3127 = vpack.c.b16 %v3086, %v3086
      %v3128 = vpack.c.b16 %v3087, %v3087
      %v3129 = vpack.c.b16 %v3088, %v3088
      %v3130 = vpack.c.b16 %v3089, %v3089
      %3172 = vst [vmem:[#allocation3 + $0x1c] sm:$0xf] %v3090
      %3173 = vst [vmem:[#allocation3 + $0x40] sm:$0xf] %v3091
      %3174 = vst [vmem:[#allocation3 + $0x64] sm:$0xf] %v3092
      %3175 = vst [vmem:[#allocation3 + $0x88] sm:$0xf] %v3093
      %3176 = vst [vmem:[#allocation3 + $0xac] sm:$0xf] %v3094
      %3177 = vst [vmem:[#allocation3 + $0xd0] sm:$0xf] %v3095
      %3178 = vst [vmem:[#allocation3 + $0xf4] sm:$0xf] %v3096
      %3179 = vst [vmem:[#allocation3 + $0x118] sm:$0xf] %v3097
      %3180 = vst [vmem:[#allocation3 + $0x13c] sm:$0xf] %v3098
      %3181 = vst [vmem:[#allocation3 + $0x160] sm:$0xf] %v3099
      %3182 = vst [vmem:[#allocation3 + $0x184] sm:$0xf] %v3100
      %3183 = vst [vmem:[#allocation3 + $0x1a8] sm:$0xf] %v3101
      %3184 = vst [vmem:[#allocation3 + $0x1cc] sm:$0xf] %v3102
      %3185 = vst [vmem:[#allocation3 + $0x1f0] sm:$0xf] %v3103
      %3186 = vst [vmem:[#allocation3 + $0x214] sm:$0xf] %v3104
      %3187 = vst [vmem:[#allocation3 + $0x238] sm:$0xf] %v3105
      %3188 = vst [vmem:[#allocation3 + $0x25c] sm:$0xf] %v3106
      %3189 = vst [vmem:[#allocation3 + $0x280] sm:$0xf] %v3107
      %3190 = vst [vmem:[#allocation3 + $0x2a4] sm:$0xf] %v3108
      %3191 = vst [vmem:[#allocation3 + $0x2c8] sm:$0xf] %v3109
      %3192 = vst [vmem:[#allocation3 + $0x2ec] sm:$0xf] %v3110
      %3193 = vst [vmem:[#allocation3 + $0x310] sm:$0xf] %v3111
      %3194 = vst [vmem:[#allocation3 + $0x334] sm:$0xf] %v3112
      %3195 = vst [vmem:[#allocation3 + $0x358] sm:$0xf] %v3113
      %3196 = vst [vmem:[#allocation3 + $0x37c] sm:$0xf] %v3114
      %3197 = vst [vmem:[#allocation3 + $0x3a0] sm:$0xf] %v3115
      %3198 = vst [vmem:[#allocation3 + $0x3c4] sm:$0xf] %v3116
      %3199 = vst [vmem:[#allocation3 + $0x3e8] sm:$0xf] %v3117
      %3200 = vst [vmem:[#allocation3 + $0x40c] sm:$0xf] %v3118
      %3201 = vst [vmem:[#allocation3 + $0x430] sm:$0xf] %v3119
      %3202 = vst [vmem:[#allocation3 + $0x454] sm:$0xf] %v3120
      %3203 = vst [vmem:[#allocation3 + $0x478] sm:$0xf] %v3121
      %3204 = vst [vmem:[#allocation3 + $0x49c] sm:$0xf] %v3122
      %3205 = vst [vmem:[#allocation3 + $0x4c0] sm:$0xf] %v3123
      %3206 = vst [vmem:[#allocation3 + $0x4e4] sm:$0xf] %v3124
      %3207 = vst [vmem:[#allocation3 + $0x508] sm:$0xf] %v3125
      %3208 = vst [vmem:[#allocation3 + $0x52c] sm:$0xf] %v3126
      %3209 = vst [vmem:[#allocation3 + $0x550] sm:$0xf] %v3127
      %3210 = vst [vmem:[#allocation3 + $0x574] sm:$0xf] %v3128
      %3211 = vst [vmem:[#allocation3 + $0x598] sm:$0xf] %v3129
      %3212 = vst [vmem:[#allocation3 + $0x5bc] sm:$0x3] %v3130
      %v3213 = vld [vmem:[#allocation2 + $0x2b] sm:$0xff]
      %v3214 = vld [vmem:[#allocation2 + $0x33] sm:$0xff]
      %v3215 = vld [vmem:[#allocation2 + $0x3b] sm:$0xff]
      %v3216 = vld [vmem:[#allocation2 + $0x43] sm:$0xff]
      %v3217 = vld [vmem:[#allocation2 + $0x4b] sm:$0xff]
      %v3218 = vld [vmem:[#allocation2 + $0x53] sm:$0xff]
      %v3219 = vld [vmem:[#allocation2 + $0x5b] sm:$0xff]
      %v3220 = vld [vmem:[#allocation2 + $0x63] sm:$0xff]
      %v3221 = vld [vmem:[#allocation2 + $0x6b] sm:$0xff]
      %v3222 = vld [vmem:[#allocation2 + $0x73] sm:$0xff]
      %v3223 = vld [vmem:[#allocation2 + $0x7b] sm:$0xff]
      %v3224 = vld [vmem:[#allocation2 + $0x83] sm:$0xff]
      %v3225 = vld [vmem:[#allocation2 + $0x8b] sm:$0xff]
      %v3226 = vld [vmem:[#allocation2 + $0x93] sm:$0xff]
      %v3227 = vld [vmem:[#allocation2 + $0x9b] sm:$0xff]
      %v3228 = vld [vmem:[#allocation2 + $0xa3] sm:$0xff]
      %v3229 = vld [vmem:[#allocation2 + $0xab] sm:$0xff]
      %v3230 = vld [vmem:[#allocation2 + $0xb3] sm:$0xff]
      %v3231 = vld [vmem:[#allocation2 + $0xbb] sm:$0xff]
      %v3232 = vld [vmem:[#allocation2 + $0xc3] sm:$0xff]
      %v3233 = vld [vmem:[#allocation2 + $0xcb] sm:$0xff]
      %v3234 = vld [vmem:[#allocation2 + $0xd3] sm:$0xff]
      %v3235 = vld [vmem:[#allocation2 + $0xdb] sm:$0xff]
      %v3236 = vld [vmem:[#allocation2 + $0xe3] sm:$0xff]
      %v3237 = vld [vmem:[#allocation2 + $0xeb] sm:$0xff]
      %v3238 = vld [vmem:[#allocation2 + $0xf3] sm:$0xff]
      %v3239 = vld [vmem:[#allocation2 + $0xfb] sm:$0xff]
      %v3240 = vld [vmem:[#allocation2 + $0x103] sm:$0xff]
      %v3241 = vld [vmem:[#allocation2 + $0x10b] sm:$0xff]
      %v3242 = vld [vmem:[#allocation2 + $0x113] sm:$0xff]
      %v3243 = vld [vmem:[#allocation2 + $0x11b] sm:$0xff]
      %v3244 = vld [vmem:[#allocation2 + $0x123] sm:$0xff]
      %v3245 = vld [vmem:[#allocation2 + $0x12b] sm:$0xff]
      %v3246 = vld [vmem:[#allocation2 + $0x133] sm:$0xff]
      %v3247 = vld [vmem:[#allocation2 + $0x13b] sm:$0xff]
      %v3248 = vld [vmem:[#allocation2 + $0x143] sm:$0xff]
      %v3249 = vld [vmem:[#allocation2 + $0x14b] sm:$0xff]
      %v3250 = vld [vmem:[#allocation2 + $0x153] sm:$0xff]
      %v3251 = vld [vmem:[#allocation2 + $0x15b] sm:$0xff]
      %v3252 = vld [vmem:[#allocation2 + $0x163] sm:$0xff]
      %v3253 = vld [vmem:[#allocation2 + $0x16b] sm:$0xf]
      %v3254 = vpack.c.bf16 %v3214, %v3213
      %v3255 = vpack.c.bf16 %v3216, %v3215
      %v3256 = vpack.c.bf16 %v3218, %v3217
      %v3257 = vpack.c.bf16 %v3220, %v3219
      %v3258 = vpack.c.bf16 %v3222, %v3221
      %v3259 = vpack.c.bf16 %v3224, %v3223
      %v3260 = vpack.c.bf16 %v3226, %v3225
      %v3261 = vpack.c.bf16 %v3228, %v3227
      %v3262 = vpack.c.bf16 %v3230, %v3229
      %v3263 = vpack.c.bf16 %v3232, %v3231
      %v3264 = vpack.c.bf16 %v3234, %v3233
      %v3265 = vpack.c.bf16 %v3236, %v3235
      %v3266 = vpack.c.bf16 %v3238, %v3237
      %v3267 = vpack.c.bf16 %v3240, %v3239
      %v3268 = vpack.c.bf16 %v3242, %v3241
      %v3269 = vpack.c.bf16 %v3244, %v3243
      %v3270 = vpack.c.bf16 %v3246, %v3245
      %v3271 = vpack.c.bf16 %v3248, %v3247
      %v3272 = vpack.c.bf16 %v3250, %v3249
      %v3273 = vpack.c.bf16 %v3252, %v3251
      %v3274 = vpack.c.bf16 %v3253, %v3253
      %v3296 = vunpack.c.l.b16 %v3254
      %v3297 = vunpack.c.h.b16 %v3254
      %v3298 = vunpack.c.l.b16 %v3255
      %v3299 = vunpack.c.h.b16 %v3255
      %v3300 = vunpack.c.l.b16 %v3256
      %v3301 = vunpack.c.h.b16 %v3256
      %v3302 = vunpack.c.l.b16 %v3257
      %v3303 = vunpack.c.h.b16 %v3257
      %v3304 = vunpack.c.l.b16 %v3258
      %v3305 = vunpack.c.h.b16 %v3258
      %v3306 = vunpack.c.l.b16 %v3259
      %v3307 = vunpack.c.h.b16 %v3259
      %v3308 = vunpack.c.l.b16 %v3260
      %v3309 = vunpack.c.h.b16 %v3260
      %v3310 = vunpack.c.l.b16 %v3261
      %v3311 = vunpack.c.h.b16 %v3261
      %v3312 = vunpack.c.l.b16 %v3262
      %v3313 = vunpack.c.h.b16 %v3262
      %v3314 = vunpack.c.l.b16 %v3263
      %v3315 = vunpack.c.h.b16 %v3263
      %v3316 = vunpack.c.l.b16 %v3264
      %v3317 = vunpack.c.h.b16 %v3264
      %v3318 = vunpack.c.l.b16 %v3265
      %v3319 = vunpack.c.h.b16 %v3265
      %v3320 = vunpack.c.l.b16 %v3266
      %v3321 = vunpack.c.h.b16 %v3266
      %v3322 = vunpack.c.l.b16 %v3267
      %v3323 = vunpack.c.h.b16 %v3267
      %v3324 = vunpack.c.l.b16 %v3268
      %v3325 = vunpack.c.h.b16 %v3268
      %v3326 = vunpack.c.l.b16 %v3269
      %v3327 = vunpack.c.h.b16 %v3269
      %v3328 = vunpack.c.l.b16 %v3270
      %v3329 = vunpack.c.h.b16 %v3270
      %v3330 = vunpack.c.l.b16 %v3271
      %v3331 = vunpack.c.h.b16 %v3271
      %v3332 = vunpack.c.l.b16 %v3272
      %v3333 = vunpack.c.h.b16 %v3272
      %v3334 = vunpack.c.l.b16 %v3273
      %v3335 = vunpack.c.h.b16 %v3273
      %v3336 = vunpack.c.l.b16 %v3274
      %v3337 = vpack.c.b16 %v3296, %v3296
      %v3338 = vpack.c.b16 %v3297, %v3297
      %v3339 = vpack.c.b16 %v3298, %v3298
      %v3340 = vpack.c.b16 %v3299, %v3299
      %v3341 = vpack.c.b16 %v3300, %v3300
      %v3342 = vpack.c.b16 %v3301, %v3301
      %v3343 = vpack.c.b16 %v3302, %v3302
      %v3344 = vpack.c.b16 %v3303, %v3303
      %v3345 = vpack.c.b16 %v3304, %v3304
      %v3346 = vpack.c.b16 %v3305, %v3305
      %v3347 = vpack.c.b16 %v3306, %v3306
      %v3348 = vpack.c.b16 %v3307, %v3307
      %v3349 = vpack.c.b16 %v3308, %v3308
      %v3350 = vpack.c.b16 %v3309, %v3309
      %v3351 = vpack.c.b16 %v3310, %v3310
      %v3352 = vpack.c.b16 %v3311, %v3311
      %v3353 = vpack.c.b16 %v3312, %v3312
      %v3354 = vpack.c.b16 %v3313, %v3313
      %v3355 = vpack.c.b16 %v3314, %v3314
      %v3356 = vpack.c.b16 %v3315, %v3315
      %v3357 = vpack.c.b16 %v3316, %v3316
      %v3358 = vpack.c.b16 %v3317, %v3317
      %v3359 = vpack.c.b16 %v3318, %v3318
      %v3360 = vpack.c.b16 %v3319, %v3319
      %v3361 = vpack.c.b16 %v3320, %v3320
      %v3362 = vpack.c.b16 %v3321, %v3321
      %v3363 = vpack.c.b16 %v3322, %v3322
      %v3364 = vpack.c.b16 %v3323, %v3323
      %v3365 = vpack.c.b16 %v3324, %v3324
      %v3366 = vpack.c.b16 %v3325, %v3325
      %v3367 = vpack.c.b16 %v3326, %v3326
      %v3368 = vpack.c.b16 %v3327, %v3327
      %v3369 = vpack.c.b16 %v3328, %v3328
      %v3370 = vpack.c.b16 %v3329, %v3329
      %v3371 = vpack.c.b16 %v3330, %v3330
      %v3372 = vpack.c.b16 %v3331, %v3331
      %v3373 = vpack.c.b16 %v3332, %v3332
      %v3374 = vpack.c.b16 %v3333, %v3333
      %v3375 = vpack.c.b16 %v3334, %v3334
      %v3376 = vpack.c.b16 %v3335, %v3335
      %v3377 = vpack.c.b16 %v3336, %v3336
      %3419 = vst [vmem:[#allocation3 + $0x20] sm:$0xf] %v3337
      %3420 = vst [vmem:[#allocation3 + $0x44] sm:$0xf] %v3338
      %3421 = vst [vmem:[#allocation3 + $0x68] sm:$0xf] %v3339
      %3422 = vst [vmem:[#allocation3 + $0x8c] sm:$0xf] %v3340
      %3423 = vst [vmem:[#allocation3 + $0xb0] sm:$0xf] %v3341
      %3424 = vst [vmem:[#allocation3 + $0xd4] sm:$0xf] %v3342
      %3425 = vst [vmem:[#allocation3 + $0xf8] sm:$0xf] %v3343
      %3426 = vst [vmem:[#allocation3 + $0x11c] sm:$0xf] %v3344
      %3427 = vst [vmem:[#allocation3 + $0x140] sm:$0xf] %v3345
      %3428 = vst [vmem:[#allocation3 + $0x164] sm:$0xf] %v3346
      %3429 = vst [vmem:[#allocation3 + $0x188] sm:$0xf] %v3347
      %3430 = vst [vmem:[#allocation3 + $0x1ac] sm:$0xf] %v3348
      %3431 = vst [vmem:[#allocation3 + $0x1d0] sm:$0xf] %v3349
      %3432 = vst [vmem:[#allocation3 + $0x1f4] sm:$0xf] %v3350
      %3433 = vst [vmem:[#allocation3 + $0x218] sm:$0xf] %v3351
      %3434 = vst [vmem:[#allocation3 + $0x23c] sm:$0xf] %v3352
      %3435 = vst [vmem:[#allocation3 + $0x260] sm:$0xf] %v3353
      %3436 = vst [vmem:[#allocation3 + $0x284] sm:$0xf] %v3354
      %3437 = vst [vmem:[#allocation3 + $0x2a8] sm:$0xf] %v3355
      %3438 = vst [vmem:[#allocation3 + $0x2cc] sm:$0xf] %v3356
      %3439 = vst [vmem:[#allocation3 + $0x2f0] sm:$0xf] %v3357
      %3440 = vst [vmem:[#allocation3 + $0x314] sm:$0xf] %v3358
      %3441 = vst [vmem:[#allocation3 + $0x338] sm:$0xf] %v3359
      %3442 = vst [vmem:[#allocation3 + $0x35c] sm:$0xf] %v3360
      %3443 = vst [vmem:[#allocation3 + $0x380] sm:$0xf] %v3361
      %3444 = vst [vmem:[#allocation3 + $0x3a4] sm:$0xf] %v3362
      %3445 = vst [vmem:[#allocation3 + $0x3c8] sm:$0xf] %v3363
      %3446 = vst [vmem:[#allocation3 + $0x3ec] sm:$0xf] %v3364
      %3447 = vst [vmem:[#allocation3 + $0x410] sm:$0xf] %v3365
      %3448 = vst [vmem:[#allocation3 + $0x434] sm:$0xf] %v3366
      %3449 = vst [vmem:[#allocation3 + $0x458] sm:$0xf] %v3367
      %3450 = vst [vmem:[#allocation3 + $0x47c] sm:$0xf] %v3368
      %3451 = vst [vmem:[#allocation3 + $0x4a0] sm:$0xf] %v3369
      %3452 = vst [vmem:[#allocation3 + $0x4c4] sm:$0xf] %v3370
      %3453 = vst [vmem:[#allocation3 + $0x4e8] sm:$0xf] %v3371
      %3454 = vst [vmem:[#allocation3 + $0x50c] sm:$0xf] %v3372
      %3455 = vst [vmem:[#allocation3 + $0x530] sm:$0xf] %v3373
      %3456 = vst [vmem:[#allocation3 + $0x554] sm:$0xf] %v3374
      %3457 = vst [vmem:[#allocation3 + $0x578] sm:$0xf] %v3375
      %3458 = vst [vmem:[#allocation3 + $0x59c] sm:$0xf] %v3376
      %3459 = vst [vmem:[#allocation3 + $0x5c0] sm:$0x3] %v3377
      %v3460 = vld [vmem:[#allocation3] sm:$0xff]
      %v3461 = vld [vmem:[#allocation3 + $0x8] sm:$0xff]
      %v3462 = vld [vmem:[#allocation3 + $0x10] sm:$0xff]
      %v3463 = vld [vmem:[#allocation3 + $0x18] sm:$0xff]
      %v3464 = vld [vmem:[#allocation3 + $0x20] sm:$0xf]
      %v3465 = vld [vmem:[#allocation3 + $0x24] sm:$0xff]
      %v3466 = vld [vmem:[#allocation3 + $0x2c] sm:$0xff]
      %v3467 = vld [vmem:[#allocation3 + $0x34] sm:$0xff]
      %v3468 = vld [vmem:[#allocation3 + $0x3c] sm:$0xff]
      %v3469 = vld [vmem:[#allocation3 + $0x44] sm:$0xf]
      %v3470 = vld [vmem:[#allocation3 + $0x48] sm:$0xff]
      %v3471 = vld [vmem:[#allocation3 + $0x50] sm:$0xff]
      %v3472 = vld [vmem:[#allocation3 + $0x58] sm:$0xff]
      %v3473 = vld [vmem:[#allocation3 + $0x60] sm:$0xff]
      %v3474 = vld [vmem:[#allocation3 + $0x68] sm:$0xf]
      %v3475 = vld [vmem:[#allocation3 + $0x6c] sm:$0xff]
      %v3476 = vld [vmem:[#allocation3 + $0x74] sm:$0xff]
      %v3477 = vld [vmem:[#allocation3 + $0x7c] sm:$0xff]
      %v3478 = vld [vmem:[#allocation3 + $0x84] sm:$0xff]
      %v3479 = vld [vmem:[#allocation3 + $0x8c] sm:$0xf]
      %v3480 = vld [vmem:[#allocation3 + $0x90] sm:$0xff]
      %v3481 = vld [vmem:[#allocation3 + $0x98] sm:$0xff]
      %v3482 = vld [vmem:[#allocation3 + $0xa0] sm:$0xff]
      %v3483 = vld [vmem:[#allocation3 + $0xa8] sm:$0xff]
      %v3484 = vld [vmem:[#allocation3 + $0xb0] sm:$0xf]
      %v3485 = vld [vmem:[#allocation3 + $0xb4] sm:$0xff]
      %v3486 = vld [vmem:[#allocation3 + $0xbc] sm:$0xff]
      %v3487 = vld [vmem:[#allocation3 + $0xc4] sm:$0xff]
      %v3488 = vld [vmem:[#allocation3 + $0xcc] sm:$0xff]
      %v3489 = vld [vmem:[#allocation3 + $0xd4] sm:$0xf]
      %v3490 = vld [vmem:[#allocation3 + $0xd8] sm:$0xff]
      %v3491 = vld [vmem:[#allocation3 + $0xe0] sm:$0xff]
      %v3492 = vld [vmem:[#allocation3 + $0xe8] sm:$0xff]
      %v3493 = vld [vmem:[#allocation3 + $0xf0] sm:$0xff]
      %v3494 = vld [vmem:[#allocation3 + $0xf8] sm:$0xf]
      %v3495 = vld [vmem:[#allocation3 + $0xfc] sm:$0xff]
      %v3496 = vld [vmem:[#allocation3 + $0x104] sm:$0xff]
      %v3497 = vld [vmem:[#allocation3 + $0x10c] sm:$0xff]
      %v3498 = vld [vmem:[#allocation3 + $0x114] sm:$0xff]
      %v3499 = vld [vmem:[#allocation3 + $0x11c] sm:$0xf]
      %v3500 = vld [vmem:[#allocation3 + $0x120] sm:$0xff]
      %v3501 = vld [vmem:[#allocation3 + $0x128] sm:$0xff]
      %v3502 = vld [vmem:[#allocation3 + $0x130] sm:$0xff]
      %v3503 = vld [vmem:[#allocation3 + $0x138] sm:$0xff]
      %v3504 = vld [vmem:[#allocation3 + $0x140] sm:$0xf]
      %v3505 = vld [vmem:[#allocation3 + $0x144] sm:$0xff]
      %v3506 = vld [vmem:[#allocation3 + $0x14c] sm:$0xff]
      %v3507 = vld [vmem:[#allocation3 + $0x154] sm:$0xff]
      %v3508 = vld [vmem:[#allocation3 + $0x15c] sm:$0xff]
      %v3509 = vld [vmem:[#allocation3 + $0x164] sm:$0xf]
      %v3510 = vld [vmem:[#allocation3 + $0x168] sm:$0xff]
      %v3511 = vld [vmem:[#allocation3 + $0x170] sm:$0xff]
      %v3512 = vld [vmem:[#allocation3 + $0x178] sm:$0xff]
      %v3513 = vld [vmem:[#allocation3 + $0x180] sm:$0xff]
      %v3514 = vld [vmem:[#allocation3 + $0x188] sm:$0xf]
      %v3515 = vld [vmem:[#allocation3 + $0x18c] sm:$0xff]
      %v3516 = vld [vmem:[#allocation3 + $0x194] sm:$0xff]
      %v3517 = vld [vmem:[#allocation3 + $0x19c] sm:$0xff]
      %v3518 = vld [vmem:[#allocation3 + $0x1a4] sm:$0xff]
      %v3519 = vld [vmem:[#allocation3 + $0x1ac] sm:$0xf]
      %v3520 = vld [vmem:[#allocation3 + $0x1b0] sm:$0xff]
      %v3521 = vld [vmem:[#allocation3 + $0x1b8] sm:$0xff]
      %v3522 = vld [vmem:[#allocation3 + $0x1c0] sm:$0xff]
      %v3523 = vld [vmem:[#allocation3 + $0x1c8] sm:$0xff]
      %v3524 = vld [vmem:[#allocation3 + $0x1d0] sm:$0xf]
      %v3525 = vld [vmem:[#allocation3 + $0x1d4] sm:$0xff]
      %v3526 = vld [vmem:[#allocation3 + $0x1dc] sm:$0xff]
      %v3527 = vld [vmem:[#allocation3 + $0x1e4] sm:$0xff]
      %v3528 = vld [vmem:[#allocation3 + $0x1ec] sm:$0xff]
      %v3529 = vld [vmem:[#allocation3 + $0x1f4] sm:$0xf]
      %v3530 = vld [vmem:[#allocation3 + $0x1f8] sm:$0xff]
      %v3531 = vld [vmem:[#allocation3 + $0x200] sm:$0xff]
      %v3532 = vld [vmem:[#allocation3 + $0x208] sm:$0xff]
      %v3533 = vld [vmem:[#allocation3 + $0x210] sm:$0xff]
      %v3534 = vld [vmem:[#allocation3 + $0x218] sm:$0xf]
      %v3535 = vld [vmem:[#allocation3 + $0x21c] sm:$0xff]
      %v3536 = vld [vmem:[#allocation3 + $0x224] sm:$0xff]
      %v3537 = vld [vmem:[#allocation3 + $0x22c] sm:$0xff]
      %v3538 = vld [vmem:[#allocation3 + $0x234] sm:$0xff]
      %v3539 = vld [vmem:[#allocation3 + $0x23c] sm:$0xf]
      %v3540 = vld [vmem:[#allocation3 + $0x240] sm:$0xff]
      %v3541 = vld [vmem:[#allocation3 + $0x248] sm:$0xff]
      %v3542 = vld [vmem:[#allocation3 + $0x250] sm:$0xff]
      %v3543 = vld [vmem:[#allocation3 + $0x258] sm:$0xff]
      %v3544 = vld [vmem:[#allocation3 + $0x260] sm:$0xf]
      %v3545 = vld [vmem:[#allocation3 + $0x264] sm:$0xff]
      %v3546 = vld [vmem:[#allocation3 + $0x26c] sm:$0xff]
      %v3547 = vld [vmem:[#allocation3 + $0x274] sm:$0xff]
      %v3548 = vld [vmem:[#allocation3 + $0x27c] sm:$0xff]
      %v3549 = vld [vmem:[#allocation3 + $0x284] sm:$0xf]
      %v3550 = vld [vmem:[#allocation3 + $0x288] sm:$0xff]
      %v3551 = vld [vmem:[#allocation3 + $0x290] sm:$0xff]
      %v3552 = vld [vmem:[#allocation3 + $0x298] sm:$0xff]
      %v3553 = vld [vmem:[#allocation3 + $0x2a0] sm:$0xff]
      %v3554 = vld [vmem:[#allocation3 + $0x2a8] sm:$0xf]
      %v3555 = vld [vmem:[#allocation3 + $0x2ac] sm:$0xff]
      %v3556 = vld [vmem:[#allocation3 + $0x2b4] sm:$0xff]
      %v3557 = vld [vmem:[#allocation3 + $0x2bc] sm:$0xff]
      %v3558 = vld [vmem:[#allocation3 + $0x2c4] sm:$0xff]
      %v3559 = vld [vmem:[#allocation3 + $0x2cc] sm:$0xf]
      %v3560 = vld [vmem:[#allocation3 + $0x2d0] sm:$0xff]
      %v3561 = vld [vmem:[#allocation3 + $0x2d8] sm:$0xff]
      %v3562 = vld [vmem:[#allocation3 + $0x2e0] sm:$0xff]
      %v3563 = vld [vmem:[#allocation3 + $0x2e8] sm:$0xff]
      %v3564 = vld [vmem:[#allocation3 + $0x2f0] sm:$0xf]
      %v3565 = vld [vmem:[#allocation3 + $0x2f4] sm:$0xff]
      %v3566 = vld [vmem:[#allocation3 + $0x2fc] sm:$0xff]
      %v3567 = vld [vmem:[#allocation3 + $0x304] sm:$0xff]
      %v3568 = vld [vmem:[#allocation3 + $0x30c] sm:$0xff]
      %v3569 = vld [vmem:[#allocation3 + $0x314] sm:$0xf]
      %v3570 = vld [vmem:[#allocation3 + $0x318] sm:$0xff]
      %v3571 = vld [vmem:[#allocation3 + $0x320] sm:$0xff]
      %v3572 = vld [vmem:[#allocation3 + $0x328] sm:$0xff]
      %v3573 = vld [vmem:[#allocation3 + $0x330] sm:$0xff]
      %v3574 = vld [vmem:[#allocation3 + $0x338] sm:$0xf]
      %v3575 = vld [vmem:[#allocation3 + $0x33c] sm:$0xff]
      %v3576 = vld [vmem:[#allocation3 + $0x344] sm:$0xff]
      %v3577 = vld [vmem:[#allocation3 + $0x34c] sm:$0xff]
      %v3578 = vld [vmem:[#allocation3 + $0x354] sm:$0xff]
      %v3579 = vld [vmem:[#allocation3 + $0x35c] sm:$0xf]
      %v3580 = vld [vmem:[#allocation3 + $0x360] sm:$0xff]
      %v3581 = vld [vmem:[#allocation3 + $0x368] sm:$0xff]
      %v3582 = vld [vmem:[#allocation3 + $0x370] sm:$0xff]
      %v3583 = vld [vmem:[#allocation3 + $0x378] sm:$0xff]
      %v3584 = vld [vmem:[#allocation3 + $0x380] sm:$0xf]
      %v3585 = vld [vmem:[#allocation3 + $0x384] sm:$0xff]
      %v3586 = vld [vmem:[#allocation3 + $0x38c] sm:$0xff]
      %v3587 = vld [vmem:[#allocation3 + $0x394] sm:$0xff]
      %v3588 = vld [vmem:[#allocation3 + $0x39c] sm:$0xff]
      %v3589 = vld [vmem:[#allocation3 + $0x3a4] sm:$0xf]
      %v3590 = vld [vmem:[#allocation3 + $0x3a8] sm:$0xff]
      %v3591 = vld [vmem:[#allocation3 + $0x3b0] sm:$0xff]
      %v3592 = vld [vmem:[#allocation3 + $0x3b8] sm:$0xff]
      %v3593 = vld [vmem:[#allocation3 + $0x3c0] sm:$0xff]
      %v3594 = vld [vmem:[#allocation3 + $0x3c8] sm:$0xf]
      %v3595 = vld [vmem:[#allocation3 + $0x3cc] sm:$0xff]
      %v3596 = vld [vmem:[#allocation3 + $0x3d4] sm:$0xff]
      %v3597 = vld [vmem:[#allocation3 + $0x3dc] sm:$0xff]
      %v3598 = vld [vmem:[#allocation3 + $0x3e4] sm:$0xff]
      %v3599 = vld [vmem:[#allocation3 + $0x3ec] sm:$0xf]
      %v3600 = vld [vmem:[#allocation3 + $0x3f0] sm:$0xff]
      %v3601 = vld [vmem:[#allocation3 + $0x3f8] sm:$0xff]
      %v3602 = vld [vmem:[#allocation3 + $0x400] sm:$0xff]
      %v3603 = vld [vmem:[#allocation3 + $0x408] sm:$0xff]
      %v3604 = vld [vmem:[#allocation3 + $0x410] sm:$0xf]
      %v3605 = vld [vmem:[#allocation3 + $0x414] sm:$0xff]
      %v3606 = vld [vmem:[#allocation3 + $0x41c] sm:$0xff]
      %v3607 = vld [vmem:[#allocation3 + $0x424] sm:$0xff]
      %v3608 = vld [vmem:[#allocation3 + $0x42c] sm:$0xff]
      %v3609 = vld [vmem:[#allocation3 + $0x434] sm:$0xf]
      %v3610 = vld [vmem:[#allocation3 + $0x438] sm:$0xff]
      %v3611 = vld [vmem:[#allocation3 + $0x440] sm:$0xff]
      %v3612 = vld [vmem:[#allocation3 + $0x448] sm:$0xff]
      %v3613 = vld [vmem:[#allocation3 + $0x450] sm:$0xff]
      %v3614 = vld [vmem:[#allocation3 + $0x458] sm:$0xf]
      %v3615 = vld [vmem:[#allocation3 + $0x45c] sm:$0xff]
      %v3616 = vld [vmem:[#allocation3 + $0x464] sm:$0xff]
      %v3617 = vld [vmem:[#allocation3 + $0x46c] sm:$0xff]
      %v3618 = vld [vmem:[#allocation3 + $0x474] sm:$0xff]
      %v3619 = vld [vmem:[#allocation3 + $0x47c] sm:$0xf]
      %v3620 = vld [vmem:[#allocation3 + $0x480] sm:$0xff]
      %v3621 = vld [vmem:[#allocation3 + $0x488] sm:$0xff]
      %v3622 = vld [vmem:[#allocation3 + $0x490] sm:$0xff]
      %v3623 = vld [vmem:[#allocation3 + $0x498] sm:$0xff]
      %v3624 = vld [vmem:[#allocation3 + $0x4a0] sm:$0xf]
      %v3625 = vld [vmem:[#allocation3 + $0x4a4] sm:$0xff]
      %v3626 = vld [vmem:[#allocation3 + $0x4ac] sm:$0xff]
      %v3627 = vld [vmem:[#allocation3 + $0x4b4] sm:$0xff]
      %v3628 = vld [vmem:[#allocation3 + $0x4bc] sm:$0xff]
      %v3629 = vld [vmem:[#allocation3 + $0x4c4] sm:$0xf]
      %v3630 = vld [vmem:[#allocation3 + $0x4c8] sm:$0xff]
      %v3631 = vld [vmem:[#allocation3 + $0x4d0] sm:$0xff]
      %v3632 = vld [vmem:[#allocation3 + $0x4d8] sm:$0xff]
      %v3633 = vld [vmem:[#allocation3 + $0x4e0] sm:$0xff]
      %v3634 = vld [vmem:[#allocation3 + $0x4e8] sm:$0xf]
      %v3635 = vld [vmem:[#allocation3 + $0x4ec] sm:$0xff]
      %v3636 = vld [vmem:[#allocation3 + $0x4f4] sm:$0xff]
      %v3637 = vld [vmem:[#allocation3 + $0x4fc] sm:$0xff]
      %v3638 = vld [vmem:[#allocation3 + $0x504] sm:$0xff]
      %v3639 = vld [vmem:[#allocation3 + $0x50c] sm:$0xf]
      %v3640 = vld [vmem:[#allocation3 + $0x510] sm:$0xff]
      %v3641 = vld [vmem:[#allocation3 + $0x518] sm:$0xff]
      %v3642 = vld [vmem:[#allocation3 + $0x520] sm:$0xff]
      %v3643 = vld [vmem:[#allocation3 + $0x528] sm:$0xff]
      %v3644 = vld [vmem:[#allocation3 + $0x530] sm:$0xf]
      %v3645 = vld [vmem:[#allocation3 + $0x534] sm:$0xff]
      %v3646 = vld [vmem:[#allocation3 + $0x53c] sm:$0xff]
      %v3647 = vld [vmem:[#allocation3 + $0x544] sm:$0xff]
      %v3648 = vld [vmem:[#allocation3 + $0x54c] sm:$0xff]
      %v3649 = vld [vmem:[#allocation3 + $0x554] sm:$0xf]
      %v3650 = vld [vmem:[#allocation3 + $0x558] sm:$0xff]
      %v3651 = vld [vmem:[#allocation3 + $0x560] sm:$0xff]
      %v3652 = vld [vmem:[#allocation3 + $0x568] sm:$0xff]
      %v3653 = vld [vmem:[#allocation3 + $0x570] sm:$0xff]
      %v3654 = vld [vmem:[#allocation3 + $0x578] sm:$0xf]
      %v3655 = vld [vmem:[#allocation3 + $0x57c] sm:$0xff]
      %v3656 = vld [vmem:[#allocation3 + $0x584] sm:$0xff]
      %v3657 = vld [vmem:[#allocation3 + $0x58c] sm:$0xff]
      %v3658 = vld [vmem:[#allocation3 + $0x594] sm:$0xff]
      %v3659 = vld [vmem:[#allocation3 + $0x59c] sm:$0xf]
      %v3660 = vld [vmem:[#allocation3 + $0x5a0] sm:$0x33]
      %v3661 = vld [vmem:[#allocation3 + $0x5a8] sm:$0x33]
      %v3662 = vld [vmem:[#allocation3 + $0x5b0] sm:$0x33]
      %v3663 = vld [vmem:[#allocation3 + $0x5b8] sm:$0x33]
      %v3664 = vld [vmem:[#allocation3 + $0x5c0] sm:$0x3]
      %v3665 = vld [vmem:[%s4] sm:$0xf]
      %v3666 = vld [vmem:[%s4 + $0x4] sm:$0xf]
      %v3667 = vld [vmem:[%s4 + $0x8] sm:$0xf]
      %v3668 = vld [vmem:[%s4 + $0xc] sm:$0xf]
      %v3669 = vld [vmem:[%s4 + $0x10] sm:$0xf]
      %v3670 = vld [vmem:[%s4 + $0x14] sm:$0xf]
      %v3671 = vld [vmem:[%s4 + $0x18] sm:$0xf]
      %v3672 = vld [vmem:[%s4 + $0x1c] sm:$0xf]
      %v3673 = vld [vmem:[%s4 + $0x20] sm:$0xf]
      %v3674 = vld [vmem:[%s4 + $0x24] sm:$0xf]
      %v3675 = vld [vmem:[%s4 + $0x28] sm:$0xf]
      %v3676 = vld [vmem:[%s4 + $0x2c] sm:$0xf]
      %v3677 = vld [vmem:[%s4 + $0x30] sm:$0xf]
      %v3678 = vld [vmem:[%s4 + $0x34] sm:$0xf]
      %v3679 = vld [vmem:[%s4 + $0x38] sm:$0xf]
      %v3680 = vld [vmem:[%s4 + $0x3c] sm:$0xf]
      %v3681 = vld [vmem:[%s4 + $0x40] sm:$0xf]
      %v3682 = vld [vmem:[%s4 + $0x44] sm:$0xf]
      %v3683 = vld [vmem:[%s4 + $0x48] sm:$0xf]
      %v3684 = vld [vmem:[%s4 + $0x4c] sm:$0xf]
      %v3685 = vld [vmem:[%s4 + $0x50] sm:$0xf]
      %v3686 = vld [vmem:[%s4 + $0x54] sm:$0xf]
      %v3687 = vld [vmem:[%s4 + $0x58] sm:$0xf]
      %v3688 = vld [vmem:[%s4 + $0x5c] sm:$0xf]
      %v3689 = vld [vmem:[%s4 + $0x60] sm:$0xf]
      %v3690 = vld [vmem:[%s4 + $0x64] sm:$0xf]
      %v3691 = vld [vmem:[%s4 + $0x68] sm:$0xf]
      %v3692 = vld [vmem:[%s4 + $0x6c] sm:$0xf]
      %v3693 = vld [vmem:[%s4 + $0x70] sm:$0xf]
      %v3694 = vld [vmem:[%s4 + $0x74] sm:$0xf]
      %v3695 = vld [vmem:[%s4 + $0x78] sm:$0xf]
      %v3696 = vld [vmem:[%s4 + $0x7c] sm:$0xf]
      %v3697 = vld [vmem:[%s4 + $0x80] sm:$0xf]
      %v3698 = vld [vmem:[%s4 + $0x84] sm:$0xf]
      %v3699 = vld [vmem:[%s4 + $0x88] sm:$0xf]
      %v3700 = vld [vmem:[%s4 + $0x8c] sm:$0xf]
      %v3701 = vld [vmem:[%s4 + $0x90] sm:$0xf]
      %v3702 = vld [vmem:[%s4 + $0x94] sm:$0xf]
      %v3703 = vld [vmem:[%s4 + $0x98] sm:$0xf]
      %v3704 = vld [vmem:[%s4 + $0x9c] sm:$0xf]
      %v3705 = vld [vmem:[%s4 + $0xa0] sm:$0xf]
      %v3706 = vld [vmem:[%s4 + $0xa4] sm:$0xf]
      %v3707 = vld [vmem:[%s4 + $0xa8] sm:$0xf]
      %v3708 = vld [vmem:[%s4 + $0xac] sm:$0xf]
      %v3709 = vld [vmem:[%s4 + $0xb0] sm:$0xf]
      %v3710 = vld [vmem:[%s4 + $0xb4] sm:$0xf]
      %v3711 = vld [vmem:[%s4 + $0xb8] sm:$0xf]
      %v3712 = vld [vmem:[%s4 + $0xbc] sm:$0xf]
      %v3713 = vld [vmem:[%s4 + $0xc0] sm:$0xf]
      %v3714 = vld [vmem:[%s4 + $0xc4] sm:$0xf]
      %v3715 = vld [vmem:[%s4 + $0xc8] sm:$0xf]
      %v3716 = vld [vmem:[%s4 + $0xcc] sm:$0xf]
      %v3717 = vld [vmem:[%s4 + $0xd0] sm:$0xf]
      %v3718 = vld [vmem:[%s4 + $0xd4] sm:$0xf]
      %v3719 = vld [vmem:[%s4 + $0xd8] sm:$0xf]
      %v3720 = vld [vmem:[%s4 + $0xdc] sm:$0xf]
      %v3721 = vld [vmem:[%s4 + $0xe0] sm:$0xf]
      %v3722 = vld [vmem:[%s4 + $0xe4] sm:$0xf]
      %v3723 = vld [vmem:[%s4 + $0xe8] sm:$0xf]
      %v3724 = vld [vmem:[%s4 + $0xec] sm:$0xf]
      %v3725 = vld [vmem:[%s4 + $0xf0] sm:$0xf]
      %v3726 = vld [vmem:[%s4 + $0xf4] sm:$0xf]
      %v3727 = vld [vmem:[%s4 + $0xf8] sm:$0xf]
      %v3728 = vld [vmem:[%s4 + $0xfc] sm:$0xf]
      %v3729 = vld [vmem:[%s4 + $0x100] sm:$0xf]
      %v3730 = vld [vmem:[%s4 + $0x104] sm:$0xf]
      %v3731 = vld [vmem:[%s4 + $0x108] sm:$0xf]
      %v3732 = vld [vmem:[%s4 + $0x10c] sm:$0xf]
      %v3733 = vld [vmem:[%s4 + $0x110] sm:$0xf]
      %v3734 = vld [vmem:[%s4 + $0x114] sm:$0xf]
      %v3735 = vld [vmem:[%s4 + $0x118] sm:$0xf]
      %v3736 = vld [vmem:[%s4 + $0x11c] sm:$0xf]
      %v3737 = vld [vmem:[%s4 + $0x120] sm:$0xf]
      %v3738 = vld [vmem:[%s4 + $0x124] sm:$0xf]
      %v3739 = vld [vmem:[%s4 + $0x128] sm:$0xf]
      %v3740 = vld [vmem:[%s4 + $0x12c] sm:$0xf]
      %v3741 = vld [vmem:[%s4 + $0x130] sm:$0xf]
      %v3742 = vld [vmem:[%s4 + $0x134] sm:$0xf]
      %v3743 = vld [vmem:[%s4 + $0x138] sm:$0xf]
      %v3744 = vld [vmem:[%s4 + $0x13c] sm:$0xf]
      %v3745 = vld [vmem:[%s4 + $0x140] sm:$0xf]
      %v3746 = vld [vmem:[%s4 + $0x144] sm:$0xf]
      %v3747 = vld [vmem:[%s4 + $0x148] sm:$0xf]
      %v3748 = vld [vmem:[%s4 + $0x14c] sm:$0xf]
      %v3749 = vld [vmem:[%s4 + $0x150] sm:$0xf]
      %v3750 = vld [vmem:[%s4 + $0x154] sm:$0xf]
      %v3751 = vld [vmem:[%s4 + $0x158] sm:$0xf]
      %v3752 = vld [vmem:[%s4 + $0x15c] sm:$0xf]
      %v3753 = vld [vmem:[%s4 + $0x160] sm:$0xf]
      %v3754 = vld [vmem:[%s4 + $0x164] sm:$0xf]
      %v3755 = vld [vmem:[%s4 + $0x168] sm:$0xf]
      %v3756 = vld [vmem:[%s4 + $0x16c] sm:$0xf]
      %v3757 = vld [vmem:[%s4 + $0x170] sm:$0xf]
      %v3758 = vld [vmem:[%s4 + $0x174] sm:$0xf]
      %v3759 = vld [vmem:[%s4 + $0x178] sm:$0xf]
      %v3760 = vld [vmem:[%s4 + $0x17c] sm:$0xf]
      %v3761 = vld [vmem:[%s4 + $0x180] sm:$0xf]
      %v3762 = vld [vmem:[%s4 + $0x184] sm:$0xf]
      %v3763 = vld [vmem:[%s4 + $0x188] sm:$0xf]
      %v3764 = vld [vmem:[%s4 + $0x18c] sm:$0xf]
      %v3765 = vld [vmem:[%s4 + $0x190] sm:$0xf]
      %v3766 = vld [vmem:[%s4 + $0x194] sm:$0xf]
      %v3767 = vld [vmem:[%s4 + $0x198] sm:$0xf]
      %v3768 = vld [vmem:[%s4 + $0x19c] sm:$0xf]
      %v3769 = vld [vmem:[%s4 + $0x1a0] sm:$0xf]
      %v3770 = vld [vmem:[%s4 + $0x1a4] sm:$0xf]
      %v3771 = vld [vmem:[%s4 + $0x1a8] sm:$0xf]
      %v3772 = vld [vmem:[%s4 + $0x1ac] sm:$0xf]
      %v3773 = vld [vmem:[%s4 + $0x1b0] sm:$0xf]
      %v3774 = vld [vmem:[%s4 + $0x1b4] sm:$0xf]
      %v3775 = vld [vmem:[%s4 + $0x1b8] sm:$0xf]
      %v3776 = vld [vmem:[%s4 + $0x1bc] sm:$0xf]
      %v3777 = vld [vmem:[%s4 + $0x1c0] sm:$0xf]
      %v3778 = vld [vmem:[%s4 + $0x1c4] sm:$0xf]
      %v3779 = vld [vmem:[%s4 + $0x1c8] sm:$0xf]
      %v3780 = vld [vmem:[%s4 + $0x1cc] sm:$0xf]
      %v3781 = vld [vmem:[%s4 + $0x1d0] sm:$0xf]
      %v3782 = vld [vmem:[%s4 + $0x1d4] sm:$0xf]
      %v3783 = vld [vmem:[%s4 + $0x1d8] sm:$0xf]
      %v3784 = vld [vmem:[%s4 + $0x1dc] sm:$0xf]
      %v3785 = vld [vmem:[%s4 + $0x1e0] sm:$0xf]
      %v3786 = vld [vmem:[%s4 + $0x1e4] sm:$0xf]
      %v3787 = vld [vmem:[%s4 + $0x1e8] sm:$0xf]
      %v3788 = vld [vmem:[%s4 + $0x1ec] sm:$0xf]
      %v3789 = vld [vmem:[%s4 + $0x1f0] sm:$0xf]
      %v3790 = vld [vmem:[%s4 + $0x1f4] sm:$0xf]
      %v3791 = vld [vmem:[%s4 + $0x1f8] sm:$0xf]
      %v3792 = vld [vmem:[%s4 + $0x1fc] sm:$0xf]
      %v3793 = vld [vmem:[%s4 + $0x200] sm:$0xf]
      %v3794 = vld [vmem:[%s4 + $0x204] sm:$0xf]
      %v3795 = vld [vmem:[%s4 + $0x208] sm:$0xf]
      %v3796 = vld [vmem:[%s4 + $0x20c] sm:$0xf]
      %v3797 = vld [vmem:[%s4 + $0x210] sm:$0xf]
      %v3798 = vld [vmem:[%s4 + $0x214] sm:$0xf]
      %v3799 = vld [vmem:[%s4 + $0x218] sm:$0xf]
      %v3800 = vld [vmem:[%s4 + $0x21c] sm:$0xf]
      %v3801 = vld [vmem:[%s4 + $0x220] sm:$0xf]
      %v3802 = vld [vmem:[%s4 + $0x224] sm:$0xf]
      %v3803 = vld [vmem:[%s4 + $0x228] sm:$0xf]
      %v3804 = vld [vmem:[%s4 + $0x22c] sm:$0xf]
      %v3805 = vld [vmem:[%s4 + $0x230] sm:$0xf]
      %v3806 = vld [vmem:[%s4 + $0x234] sm:$0xf]
      %v3807 = vld [vmem:[%s4 + $0x238] sm:$0xf]
      %v3808 = vld [vmem:[%s4 + $0x23c] sm:$0xf]
      %v3809 = vld [vmem:[%s5] sm:$0x1]
      %v3811 = vlaneseq
      %v3812 = vshrl.u32 %v3811, 7
      %v3813 = vsub.s32 0, %v3812
      %v3814 = vrot.slane %v3809, %v3813
      %v4021 = vunpack.c.l.b16 %v3460
      %v4022 = vunpack.c.h.b16 %v3460
      %v4023 = vunpack.c.l.b16 %v3461
      %v4024 = vunpack.c.h.b16 %v3461
      %v4025 = vunpack.c.l.b16 %v3462
      %v4026 = vunpack.c.h.b16 %v3462
      %v4027 = vunpack.c.l.b16 %v3463
      %v4028 = vunpack.c.h.b16 %v3463
      %v4029 = vunpack.c.l.b16 %v3464
      %v4030 = vunpack.c.l.b16 %v3465
      %v4031 = vunpack.c.h.b16 %v3465
      %v4032 = vunpack.c.l.b16 %v3466
      %v4033 = vunpack.c.h.b16 %v3466
      %v4034 = vunpack.c.l.b16 %v3467
      %v4035 = vunpack.c.h.b16 %v3467
      %v4036 = vunpack.c.l.b16 %v3468
      %v4037 = vunpack.c.h.b16 %v3468
      %v4038 = vunpack.c.l.b16 %v3469
      %v4039 = vunpack.c.l.b16 %v3470
      %v4040 = vunpack.c.h.b16 %v3470
      %v4041 = vunpack.c.l.b16 %v3471
      %v4042 = vunpack.c.h.b16 %v3471
      %v4043 = vunpack.c.l.b16 %v3472
      %v4044 = vunpack.c.h.b16 %v3472
      %v4045 = vunpack.c.l.b16 %v3473
      %v4046 = vunpack.c.h.b16 %v3473
      %v4047 = vunpack.c.l.b16 %v3474
      %v4048 = vunpack.c.l.b16 %v3475
      %v4049 = vunpack.c.h.b16 %v3475
      %v4050 = vunpack.c.l.b16 %v3476
      %v4051 = vunpack.c.h.b16 %v3476
      %v4052 = vunpack.c.l.b16 %v3477
      %v4053 = vunpack.c.h.b16 %v3477
      %v4054 = vunpack.c.l.b16 %v3478
      %v4055 = vunpack.c.h.b16 %v3478
      %v4056 = vunpack.c.l.b16 %v3479
      %v4057 = vunpack.c.l.b16 %v3480
      %v4058 = vunpack.c.h.b16 %v3480
      %v4059 = vunpack.c.l.b16 %v3481
      %v4060 = vunpack.c.h.b16 %v3481
      %v4061 = vunpack.c.l.b16 %v3482
      %v4062 = vunpack.c.h.b16 %v3482
      %v4063 = vunpack.c.l.b16 %v3483
      %v4064 = vunpack.c.h.b16 %v3483
      %v4065 = vunpack.c.l.b16 %v3484
      %v4066 = vunpack.c.l.b16 %v3485
      %v4067 = vunpack.c.h.b16 %v3485
      %v4068 = vunpack.c.l.b16 %v3486
      %v4069 = vunpack.c.h.b16 %v3486
      %v4070 = vunpack.c.l.b16 %v3487
      %v4071 = vunpack.c.h.b16 %v3487
      %v4072 = vunpack.c.l.b16 %v3488
      %v4073 = vunpack.c.h.b16 %v3488
      %v4074 = vunpack.c.l.b16 %v3489
      %v4075 = vunpack.c.l.b16 %v3490
      %v4076 = vunpack.c.h.b16 %v3490
      %v4077 = vunpack.c.l.b16 %v3491
      %v4078 = vunpack.c.h.b16 %v3491
      %v4079 = vunpack.c.l.b16 %v3492
      %v4080 = vunpack.c.h.b16 %v3492
      %v4081 = vunpack.c.l.b16 %v3493
      %v4082 = vunpack.c.h.b16 %v3493
      %v4083 = vunpack.c.l.b16 %v3494
      %v4084 = vunpack.c.l.b16 %v3495
      %v4085 = vunpack.c.h.b16 %v3495
      %v4086 = vunpack.c.l.b16 %v3496
      %v4087 = vunpack.c.h.b16 %v3496
      %v4088 = vunpack.c.l.b16 %v3497
      %v4089 = vunpack.c.h.b16 %v3497
      %v4090 = vunpack.c.l.b16 %v3498
      %v4091 = vunpack.c.h.b16 %v3498
      %v4092 = vunpack.c.l.b16 %v3499
      %v4093 = vunpack.c.l.b16 %v3500
      %v4094 = vunpack.c.h.b16 %v3500
      %v4095 = vunpack.c.l.b16 %v3501
      %v4096 = vunpack.c.h.b16 %v3501
      %v4097 = vunpack.c.l.b16 %v3502
      %v4098 = vunpack.c.h.b16 %v3502
      %v4099 = vunpack.c.l.b16 %v3503
      %v4100 = vunpack.c.h.b16 %v3503
      %v4101 = vunpack.c.l.b16 %v3504
      %v4102 = vunpack.c.l.b16 %v3505
      %v4103 = vunpack.c.h.b16 %v3505
      %v4104 = vunpack.c.l.b16 %v3506
      %v4105 = vunpack.c.h.b16 %v3506
      %v4106 = vunpack.c.l.b16 %v3507
      %v4107 = vunpack.c.h.b16 %v3507
      %v4108 = vunpack.c.l.b16 %v3508
      %v4109 = vunpack.c.h.b16 %v3508
      %v4110 = vunpack.c.l.b16 %v3509
      %v4111 = vunpack.c.l.b16 %v3510
      %v4112 = vunpack.c.h.b16 %v3510
      %v4113 = vunpack.c.l.b16 %v3511
      %v4114 = vunpack.c.h.b16 %v3511
      %v4115 = vunpack.c.l.b16 %v3512
      %v4116 = vunpack.c.h.b16 %v3512
      %v4117 = vunpack.c.l.b16 %v3513
      %v4118 = vunpack.c.h.b16 %v3513
      %v4119 = vunpack.c.l.b16 %v3514
      %v4120 = vunpack.c.l.b16 %v3515
      %v4121 = vunpack.c.h.b16 %v3515
      %v4122 = vunpack.c.l.b16 %v3516
      %v4123 = vunpack.c.h.b16 %v3516
      %v4124 = vunpack.c.l.b16 %v3517
      %v4125 = vunpack.c.h.b16 %v3517
      %v4126 = vunpack.c.l.b16 %v3518
      %v4127 = vunpack.c.h.b16 %v3518
      %v4128 = vunpack.c.l.b16 %v3519
      %v4129 = vunpack.c.l.b16 %v3520
      %v4130 = vunpack.c.h.b16 %v3520
      %v4131 = vunpack.c.l.b16 %v3521
      %v4132 = vunpack.c.h.b16 %v3521
      %v4133 = vunpack.c.l.b16 %v3522
      %v4134 = vunpack.c.h.b16 %v3522
      %v4135 = vunpack.c.l.b16 %v3523
      %v4136 = vunpack.c.h.b16 %v3523
      %v4137 = vunpack.c.l.b16 %v3524
      %v4138 = vunpack.c.l.b16 %v3525
      %v4139 = vunpack.c.h.b16 %v3525
      %v4140 = vunpack.c.l.b16 %v3526
      %v4141 = vunpack.c.h.b16 %v3526
      %v4142 = vunpack.c.l.b16 %v3527
      %v4143 = vunpack.c.h.b16 %v3527
      %v4144 = vunpack.c.l.b16 %v3528
      %v4145 = vunpack.c.h.b16 %v3528
      %v4146 = vunpack.c.l.b16 %v3529
      %v4147 = vunpack.c.l.b16 %v3530
      %v4148 = vunpack.c.h.b16 %v3530
      %v4149 = vunpack.c.l.b16 %v3531
      %v4150 = vunpack.c.h.b16 %v3531
      %v4151 = vunpack.c.l.b16 %v3532
      %v4152 = vunpack.c.h.b16 %v3532
      %v4153 = vunpack.c.l.b16 %v3533
      %v4154 = vunpack.c.h.b16 %v3533
      %v4155 = vunpack.c.l.b16 %v3534
      %v4156 = vunpack.c.l.b16 %v3535
      %v4157 = vunpack.c.h.b16 %v3535
      %v4158 = vunpack.c.l.b16 %v3536
      %v4159 = vunpack.c.h.b16 %v3536
      %v4160 = vunpack.c.l.b16 %v3537
      %v4161 = vunpack.c.h.b16 %v3537
      %v4162 = vunpack.c.l.b16 %v3538
      %v4163 = vunpack.c.h.b16 %v3538
      %v4164 = vunpack.c.l.b16 %v3539
      %v4165 = vunpack.c.l.b16 %v3540
      %v4166 = vunpack.c.h.b16 %v3540
      %v4167 = vunpack.c.l.b16 %v3541
      %v4168 = vunpack.c.h.b16 %v3541
      %v4169 = vunpack.c.l.b16 %v3542
      %v4170 = vunpack.c.h.b16 %v3542
      %v4171 = vunpack.c.l.b16 %v3543
      %v4172 = vunpack.c.h.b16 %v3543
      %v4173 = vunpack.c.l.b16 %v3544
      %v4174 = vunpack.c.l.b16 %v3545
      %v4175 = vunpack.c.h.b16 %v3545
      %v4176 = vunpack.c.l.b16 %v3546
      %v4177 = vunpack.c.h.b16 %v3546
      %v4178 = vunpack.c.l.b16 %v3547
      %v4179 = vunpack.c.h.b16 %v3547
      %v4180 = vunpack.c.l.b16 %v3548
      %v4181 = vunpack.c.h.b16 %v3548
      %v4182 = vunpack.c.l.b16 %v3549
      %v4183 = vunpack.c.l.b16 %v3550
      %v4184 = vunpack.c.h.b16 %v3550
      %v4185 = vunpack.c.l.b16 %v3551
      %v4186 = vunpack.c.h.b16 %v3551
      %v4187 = vunpack.c.l.b16 %v3552
      %v4188 = vunpack.c.h.b16 %v3552
      %v4189 = vunpack.c.l.b16 %v3553
      %v4190 = vunpack.c.h.b16 %v3553
      %v4191 = vunpack.c.l.b16 %v3554
      %v4192 = vunpack.c.l.b16 %v3555
      %v4193 = vunpack.c.h.b16 %v3555
      %v4194 = vunpack.c.l.b16 %v3556
      %v4195 = vunpack.c.h.b16 %v3556
      %v4196 = vunpack.c.l.b16 %v3557
      %v4197 = vunpack.c.h.b16 %v3557
      %v4198 = vunpack.c.l.b16 %v3558
      %v4199 = vunpack.c.h.b16 %v3558
      %v4200 = vunpack.c.l.b16 %v3559
      %v4201 = vunpack.c.l.b16 %v3560
      %v4202 = vunpack.c.h.b16 %v3560
      %v4203 = vunpack.c.l.b16 %v3561
      %v4204 = vunpack.c.h.b16 %v3561
      %v4205 = vunpack.c.l.b16 %v3562
      %v4206 = vunpack.c.h.b16 %v3562
      %v4207 = vunpack.c.l.b16 %v3563
      %v4208 = vunpack.c.h.b16 %v3563
      %v4209 = vunpack.c.l.b16 %v3564
      %v4210 = vunpack.c.l.b16 %v3565
      %v4211 = vunpack.c.h.b16 %v3565
      %v4212 = vunpack.c.l.b16 %v3566
      %v4213 = vunpack.c.h.b16 %v3566
      %v4214 = vunpack.c.l.b16 %v3567
      %v4215 = vunpack.c.h.b16 %v3567
      %v4216 = vunpack.c.l.b16 %v3568
      %v4217 = vunpack.c.h.b16 %v3568
      %v4218 = vunpack.c.l.b16 %v3569
      %v4219 = vunpack.c.l.b16 %v3570
      %v4220 = vunpack.c.h.b16 %v3570
      %v4221 = vunpack.c.l.b16 %v3571
      %v4222 = vunpack.c.h.b16 %v3571
      %v4223 = vunpack.c.l.b16 %v3572
      %v4224 = vunpack.c.h.b16 %v3572
      %v4225 = vunpack.c.l.b16 %v3573
      %v4226 = vunpack.c.h.b16 %v3573
      %v4227 = vunpack.c.l.b16 %v3574
      %v4228 = vunpack.c.l.b16 %v3575
      %v4229 = vunpack.c.h.b16 %v3575
      %v4230 = vunpack.c.l.b16 %v3576
      %v4231 = vunpack.c.h.b16 %v3576
      %v4232 = vunpack.c.l.b16 %v3577
      %v4233 = vunpack.c.h.b16 %v3577
      %v4234 = vunpack.c.l.b16 %v3578
      %v4235 = vunpack.c.h.b16 %v3578
      %v4236 = vunpack.c.l.b16 %v3579
      %v4237 = vunpack.c.l.b16 %v3580
      %v4238 = vunpack.c.h.b16 %v3580
      %v4239 = vunpack.c.l.b16 %v3581
      %v4240 = vunpack.c.h.b16 %v3581
      %v4241 = vunpack.c.l.b16 %v3582
      %v4242 = vunpack.c.h.b16 %v3582
      %v4243 = vunpack.c.l.b16 %v3583
      %v4244 = vunpack.c.h.b16 %v3583
      %v4245 = vunpack.c.l.b16 %v3584
      %v4246 = vunpack.c.l.b16 %v3585
      %v4247 = vunpack.c.h.b16 %v3585
      %v4248 = vunpack.c.l.b16 %v3586
      %v4249 = vunpack.c.h.b16 %v3586
      %v4250 = vunpack.c.l.b16 %v3587
      %v4251 = vunpack.c.h.b16 %v3587
      %v4252 = vunpack.c.l.b16 %v3588
      %v4253 = vunpack.c.h.b16 %v3588
      %v4254 = vunpack.c.l.b16 %v3589
      %v4255 = vunpack.c.l.b16 %v3590
      %v4256 = vunpack.c.h.b16 %v3590
      %v4257 = vunpack.c.l.b16 %v3591
      %v4258 = vunpack.c.h.b16 %v3591
      %v4259 = vunpack.c.l.b16 %v3592
      %v4260 = vunpack.c.h.b16 %v3592
      %v4261 = vunpack.c.l.b16 %v3593
      %v4262 = vunpack.c.h.b16 %v3593
      %v4263 = vunpack.c.l.b16 %v3594
      %v4264 = vunpack.c.l.b16 %v3595
      %v4265 = vunpack.c.h.b16 %v3595
      %v4266 = vunpack.c.l.b16 %v3596
      %v4267 = vunpack.c.h.b16 %v3596
      %v4268 = vunpack.c.l.b16 %v3597
      %v4269 = vunpack.c.h.b16 %v3597
      %v4270 = vunpack.c.l.b16 %v3598
      %v4271 = vunpack.c.h.b16 %v3598
      %v4272 = vunpack.c.l.b16 %v3599
      %v4273 = vunpack.c.l.b16 %v3600
      %v4274 = vunpack.c.h.b16 %v3600
      %v4275 = vunpack.c.l.b16 %v3601
      %v4276 = vunpack.c.h.b16 %v3601
      %v4277 = vunpack.c.l.b16 %v3602
      %v4278 = vunpack.c.h.b16 %v3602
      %v4279 = vunpack.c.l.b16 %v3603
      %v4280 = vunpack.c.h.b16 %v3603
      %v4281 = vunpack.c.l.b16 %v3604
      %v4282 = vunpack.c.l.b16 %v3605
      %v4283 = vunpack.c.h.b16 %v3605
      %v4284 = vunpack.c.l.b16 %v3606
      %v4285 = vunpack.c.h.b16 %v3606
      %v4286 = vunpack.c.l.b16 %v3607
      %v4287 = vunpack.c.h.b16 %v3607
      %v4288 = vunpack.c.l.b16 %v3608
      %v4289 = vunpack.c.h.b16 %v3608
      %v4290 = vunpack.c.l.b16 %v3609
      %v4291 = vunpack.c.l.b16 %v3610
      %v4292 = vunpack.c.h.b16 %v3610
      %v4293 = vunpack.c.l.b16 %v3611
      %v4294 = vunpack.c.h.b16 %v3611
      %v4295 = vunpack.c.l.b16 %v3612
      %v4296 = vunpack.c.h.b16 %v3612
      %v4297 = vunpack.c.l.b16 %v3613
      %v4298 = vunpack.c.h.b16 %v3613
      %v4299 = vunpack.c.l.b16 %v3614
      %v4300 = vunpack.c.l.b16 %v3615
      %v4301 = vunpack.c.h.b16 %v3615
      %v4302 = vunpack.c.l.b16 %v3616
      %v4303 = vunpack.c.h.b16 %v3616
      %v4304 = vunpack.c.l.b16 %v3617
      %v4305 = vunpack.c.h.b16 %v3617
      %v4306 = vunpack.c.l.b16 %v3618
      %v4307 = vunpack.c.h.b16 %v3618
      %v4308 = vunpack.c.l.b16 %v3619
      %v4309 = vunpack.c.l.b16 %v3620
      %v4310 = vunpack.c.h.b16 %v3620
      %v4311 = vunpack.c.l.b16 %v3621
      %v4312 = vunpack.c.h.b16 %v3621
      %v4313 = vunpack.c.l.b16 %v3622
      %v4314 = vunpack.c.h.b16 %v3622
      %v4315 = vunpack.c.l.b16 %v3623
      %v4316 = vunpack.c.h.b16 %v3623
      %v4317 = vunpack.c.l.b16 %v3624
      %v4318 = vunpack.c.l.b16 %v3625
      %v4319 = vunpack.c.h.b16 %v3625
      %v4320 = vunpack.c.l.b16 %v3626
      %v4321 = vunpack.c.h.b16 %v3626
      %v4322 = vunpack.c.l.b16 %v3627
      %v4323 = vunpack.c.h.b16 %v3627
      %v4324 = vunpack.c.l.b16 %v3628
      %v4325 = vunpack.c.h.b16 %v3628
      %v4326 = vunpack.c.l.b16 %v3629
      %v4327 = vunpack.c.l.b16 %v3630
      %v4328 = vunpack.c.h.b16 %v3630
      %v4329 = vunpack.c.l.b16 %v3631
      %v4330 = vunpack.c.h.b16 %v3631
      %v4331 = vunpack.c.l.b16 %v3632
      %v4332 = vunpack.c.h.b16 %v3632
      %v4333 = vunpack.c.l.b16 %v3633
      %v4334 = vunpack.c.h.b16 %v3633
      %v4335 = vunpack.c.l.b16 %v3634
      %v4336 = vunpack.c.l.b16 %v3635
      %v4337 = vunpack.c.h.b16 %v3635
      %v4338 = vunpack.c.l.b16 %v3636
      %v4339 = vunpack.c.h.b16 %v3636
      %v4340 = vunpack.c.l.b16 %v3637
      %v4341 = vunpack.c.h.b16 %v3637
      %v4342 = vunpack.c.l.b16 %v3638
      %v4343 = vunpack.c.h.b16 %v3638
      %v4344 = vunpack.c.l.b16 %v3639
      %v4345 = vunpack.c.l.b16 %v3640
      %v4346 = vunpack.c.h.b16 %v3640
      %v4347 = vunpack.c.l.b16 %v3641
      %v4348 = vunpack.c.h.b16 %v3641
      %v4349 = vunpack.c.l.b16 %v3642
      %v4350 = vunpack.c.h.b16 %v3642
      %v4351 = vunpack.c.l.b16 %v3643
      %v4352 = vunpack.c.h.b16 %v3643
      %v4353 = vunpack.c.l.b16 %v3644
      %v4354 = vunpack.c.l.b16 %v3645
      %v4355 = vunpack.c.h.b16 %v3645
      %v4356 = vunpack.c.l.b16 %v3646
      %v4357 = vunpack.c.h.b16 %v3646
      %v4358 = vunpack.c.l.b16 %v3647
      %v4359 = vunpack.c.h.b16 %v3647
      %v4360 = vunpack.c.l.b16 %v3648
      %v4361 = vunpack.c.h.b16 %v3648
      %v4362 = vunpack.c.l.b16 %v3649
      %v4363 = vunpack.c.l.b16 %v3650
      %v4364 = vunpack.c.h.b16 %v3650
      %v4365 = vunpack.c.l.b16 %v3651
      %v4366 = vunpack.c.h.b16 %v3651
      %v4367 = vunpack.c.l.b16 %v3652
      %v4368 = vunpack.c.h.b16 %v3652
      %v4369 = vunpack.c.l.b16 %v3653
      %v4370 = vunpack.c.h.b16 %v3653
      %v4371 = vunpack.c.l.b16 %v3654
      %v4372 = vunpack.c.l.b16 %v3655
      %v4373 = vunpack.c.h.b16 %v3655
      %v4374 = vunpack.c.l.b16 %v3656
      %v4375 = vunpack.c.h.b16 %v3656
      %v4376 = vunpack.c.l.b16 %v3657
      %v4377 = vunpack.c.h.b16 %v3657
      %v4378 = vunpack.c.l.b16 %v3658
      %v4379 = vunpack.c.h.b16 %v3658
      %v4380 = vunpack.c.l.b16 %v3659
      %v4381 = vunpack.c.l.b16 %v3660
      %v4382 = vunpack.c.h.b16 %v3660
      %v4383 = vunpack.c.l.b16 %v3661
      %v4384 = vunpack.c.h.b16 %v3661
      %v4385 = vunpack.c.l.b16 %v3662
      %v4386 = vunpack.c.h.b16 %v3662
      %v4387 = vunpack.c.l.b16 %v3663
      %v4388 = vunpack.c.h.b16 %v3663
      %v4389 = vunpack.c.l.b16 %v3664
      %v4390 = vpack.c.b16 %v4030, %v4021
      %v4391 = vpack.c.b16 %v4031, %v4022
      %v4392 = vpack.c.b16 %v4032, %v4023
      %v4393 = vpack.c.b16 %v4033, %v4024
      %v4394 = vpack.c.b16 %v4034, %v4025
      %v4395 = vpack.c.b16 %v4035, %v4026
      %v4396 = vpack.c.b16 %v4036, %v4027
      %v4397 = vpack.c.b16 %v4037, %v4028
      %v4398 = vpack.c.b16 %v4038, %v4029
      %v4399 = vpack.c.b16 %v4048, %v4039
      %v4400 = vpack.c.b16 %v4049, %v4040
      %v4401 = vpack.c.b16 %v4050, %v4041
      %v4402 = vpack.c.b16 %v4051, %v4042
      %v4403 = vpack.c.b16 %v4052, %v4043
      %v4404 = vpack.c.b16 %v4053, %v4044
      %v4405 = vpack.c.b16 %v4054, %v4045
      %v4406 = vpack.c.b16 %v4055, %v4046
      %v4407 = vpack.c.b16 %v4056, %v4047
      %v4408 = vpack.c.b16 %v4066, %v4057
      %v4409 = vpack.c.b16 %v4067, %v4058
      %v4410 = vpack.c.b16 %v4068, %v4059
      %v4411 = vpack.c.b16 %v4069, %v4060
      %v4412 = vpack.c.b16 %v4070, %v4061
      %v4413 = vpack.c.b16 %v4071, %v4062
      %v4414 = vpack.c.b16 %v4072, %v4063
      %v4415 = vpack.c.b16 %v4073, %v4064
      %v4416 = vpack.c.b16 %v4074, %v4065
      %v4417 = vpack.c.b16 %v4084, %v4075
      %v4418 = vpack.c.b16 %v4085, %v4076
      %v4419 = vpack.c.b16 %v4086, %v4077
      %v4420 = vpack.c.b16 %v4087, %v4078
      %v4421 = vpack.c.b16 %v4088, %v4079
      %v4422 = vpack.c.b16 %v4089, %v4080
      %v4423 = vpack.c.b16 %v4090, %v4081
      %v4424 = vpack.c.b16 %v4091, %v4082
      %v4425 = vpack.c.b16 %v4092, %v4083
      %v4426 = vpack.c.b16 %v4102, %v4093
      %v4427 = vpack.c.b16 %v4103, %v4094
      %v4428 = vpack.c.b16 %v4104, %v4095
      %v4429 = vpack.c.b16 %v4105, %v4096
      %v4430 = vpack.c.b16 %v4106, %v4097
      %v4431 = vpack.c.b16 %v4107, %v4098
      %v4432 = vpack.c.b16 %v4108, %v4099
      %v4433 = vpack.c.b16 %v4109, %v4100
      %v4434 = vpack.c.b16 %v4110, %v4101
      %v4435 = vpack.c.b16 %v4120, %v4111
      %v4436 = vpack.c.b16 %v4121, %v4112
      %v4437 = vpack.c.b16 %v4122, %v4113
      %v4438 = vpack.c.b16 %v4123, %v4114
      %v4439 = vpack.c.b16 %v4124, %v4115
      %v4440 = vpack.c.b16 %v4125, %v4116
      %v4441 = vpack.c.b16 %v4126, %v4117
      %v4442 = vpack.c.b16 %v4127, %v4118
      %v4443 = vpack.c.b16 %v4128, %v4119
      %v4444 = vpack.c.b16 %v4138, %v4129
      %v4445 = vpack.c.b16 %v4139, %v4130
      %v4446 = vpack.c.b16 %v4140, %v4131
      %v4447 = vpack.c.b16 %v4141, %v4132
      %v4448 = vpack.c.b16 %v4142, %v4133
      %v4449 = vpack.c.b16 %v4143, %v4134
      %v4450 = vpack.c.b16 %v4144, %v4135
      %v4451 = vpack.c.b16 %v4145, %v4136
      %v4452 = vpack.c.b16 %v4146, %v4137
      %v4453 = vpack.c.b16 %v4156, %v4147
      %v4454 = vpack.c.b16 %v4157, %v4148
      %v4455 = vpack.c.b16 %v4158, %v4149
      %v4456 = vpack.c.b16 %v4159, %v4150
      %v4457 = vpack.c.b16 %v4160, %v4151
      %v4458 = vpack.c.b16 %v4161, %v4152
      %v4459 = vpack.c.b16 %v4162, %v4153
      %v4460 = vpack.c.b16 %v4163, %v4154
      %v4461 = vpack.c.b16 %v4164, %v4155
      %v4462 = vpack.c.b16 %v4174, %v4165
      %v4463 = vpack.c.b16 %v4175, %v4166
      %v4464 = vpack.c.b16 %v4176, %v4167
      %v4465 = vpack.c.b16 %v4177, %v4168
      %v4466 = vpack.c.b16 %v4178, %v4169
      %v4467 = vpack.c.b16 %v4179, %v4170
      %v4468 = vpack.c.b16 %v4180, %v4171
      %v4469 = vpack.c.b16 %v4181, %v4172
      %v4470 = vpack.c.b16 %v4182, %v4173
      %v4471 = vpack.c.b16 %v4192, %v4183
      %v4472 = vpack.c.b16 %v4193, %v4184
      %v4473 = vpack.c.b16 %v4194, %v4185
      %v4474 = vpack.c.b16 %v4195, %v4186
      %v4475 = vpack.c.b16 %v4196, %v4187
      %v4476 = vpack.c.b16 %v4197, %v4188
      %v4477 = vpack.c.b16 %v4198, %v4189
      %v4478 = vpack.c.b16 %v4199, %v4190
      %v4479 = vpack.c.b16 %v4200, %v4191
      %v4480 = vpack.c.b16 %v4210, %v4201
      %v4481 = vpack.c.b16 %v4211, %v4202
      %v4482 = vpack.c.b16 %v4212, %v4203
      %v4483 = vpack.c.b16 %v4213, %v4204
      %v4484 = vpack.c.b16 %v4214, %v4205
      %v4485 = vpack.c.b16 %v4215, %v4206
      %v4486 = vpack.c.b16 %v4216, %v4207
      %v4487 = vpack.c.b16 %v4217, %v4208
      %v4488 = vpack.c.b16 %v4218, %v4209
      %v4489 = vpack.c.b16 %v4228, %v4219
      %v4490 = vpack.c.b16 %v4229, %v4220
      %v4491 = vpack.c.b16 %v4230, %v4221
      %v4492 = vpack.c.b16 %v4231, %v4222
      %v4493 = vpack.c.b16 %v4232, %v4223
      %v4494 = vpack.c.b16 %v4233, %v4224
      %v4495 = vpack.c.b16 %v4234, %v4225
      %v4496 = vpack.c.b16 %v4235, %v4226
      %v4497 = vpack.c.b16 %v4236, %v4227
      %v4498 = vpack.c.b16 %v4246, %v4237
      %v4499 = vpack.c.b16 %v4247, %v4238
      %v4500 = vpack.c.b16 %v4248, %v4239
      %v4501 = vpack.c.b16 %v4249, %v4240
      %v4502 = vpack.c.b16 %v4250, %v4241
      %v4503 = vpack.c.b16 %v4251, %v4242
      %v4504 = vpack.c.b16 %v4252, %v4243
      %v4505 = vpack.c.b16 %v4253, %v4244
      %v4506 = vpack.c.b16 %v4254, %v4245
      %v4507 = vpack.c.b16 %v4264, %v4255
      %v4508 = vpack.c.b16 %v4265, %v4256
      %v4509 = vpack.c.b16 %v4266, %v4257
      %v4510 = vpack.c.b16 %v4267, %v4258
      %v4511 = vpack.c.b16 %v4268, %v4259
      %v4512 = vpack.c.b16 %v4269, %v4260
      %v4513 = vpack.c.b16 %v4270, %v4261
      %v4514 = vpack.c.b16 %v4271, %v4262
      %v4515 = vpack.c.b16 %v4272, %v4263
      %v4516 = vpack.c.b16 %v4282, %v4273
      %v4517 = vpack.c.b16 %v4283, %v4274
      %v4518 = vpack.c.b16 %v4284, %v4275
      %v4519 = vpack.c.b16 %v4285, %v4276
      %v4520 = vpack.c.b16 %v4286, %v4277
      %v4521 = vpack.c.b16 %v4287, %v4278
      %v4522 = vpack.c.b16 %v4288, %v4279
      %v4523 = vpack.c.b16 %v4289, %v4280
      %v4524 = vpack.c.b16 %v4290, %v4281
      %v4525 = vpack.c.b16 %v4300, %v4291
      %v4526 = vpack.c.b16 %v4301, %v4292
      %v4527 = vpack.c.b16 %v4302, %v4293
      %v4528 = vpack.c.b16 %v4303, %v4294
      %v4529 = vpack.c.b16 %v4304, %v4295
      %v4530 = vpack.c.b16 %v4305, %v4296
      %v4531 = vpack.c.b16 %v4306, %v4297
      %v4532 = vpack.c.b16 %v4307, %v4298
      %v4533 = vpack.c.b16 %v4308, %v4299
      %v4534 = vpack.c.b16 %v4318, %v4309
      %v4535 = vpack.c.b16 %v4319, %v4310
      %v4536 = vpack.c.b16 %v4320, %v4311
      %v4537 = vpack.c.b16 %v4321, %v4312
      %v4538 = vpack.c.b16 %v4322, %v4313
      %v4539 = vpack.c.b16 %v4323, %v4314
      %v4540 = vpack.c.b16 %v4324, %v4315
      %v4541 = vpack.c.b16 %v4325, %v4316
      %v4542 = vpack.c.b16 %v4326, %v4317
      %v4543 = vpack.c.b16 %v4336, %v4327
      %v4544 = vpack.c.b16 %v4337, %v4328
      %v4545 = vpack.c.b16 %v4338, %v4329
      %v4546 = vpack.c.b16 %v4339, %v4330
      %v4547 = vpack.c.b16 %v4340, %v4331
      %v4548 = vpack.c.b16 %v4341, %v4332
      %v4549 = vpack.c.b16 %v4342, %v4333
      %v4550 = vpack.c.b16 %v4343, %v4334
      %v4551 = vpack.c.b16 %v4344, %v4335
      %v4552 = vpack.c.b16 %v4354, %v4345
      %v4553 = vpack.c.b16 %v4355, %v4346
      %v4554 = vpack.c.b16 %v4356, %v4347
      %v4555 = vpack.c.b16 %v4357, %v4348
      %v4556 = vpack.c.b16 %v4358, %v4349
      %v4557 = vpack.c.b16 %v4359, %v4350
      %v4558 = vpack.c.b16 %v4360, %v4351
      %v4559 = vpack.c.b16 %v4361, %v4352
      %v4560 = vpack.c.b16 %v4362, %v4353
      %v4561 = vpack.c.b16 %v4372, %v4363
      %v4562 = vpack.c.b16 %v4373, %v4364
      %v4563 = vpack.c.b16 %v4374, %v4365
      %v4564 = vpack.c.b16 %v4375, %v4366
      %v4565 = vpack.c.b16 %v4376, %v4367
      %v4566 = vpack.c.b16 %v4377, %v4368
      %v4567 = vpack.c.b16 %v4378, %v4369
      %v4568 = vpack.c.b16 %v4379, %v4370
      %v4569 = vpack.c.b16 %v4380, %v4371
      %v4570 = vpack.c.b16 %v4381, %v4381
      %v4571 = vpack.c.b16 %v4382, %v4382
      %v4572 = vpack.c.b16 %v4383, %v4383
      %v4573 = vpack.c.b16 %v4384, %v4384
      %v4574 = vpack.c.b16 %v4385, %v4385
      %v4575 = vpack.c.b16 %v4386, %v4386
      %v4576 = vpack.c.b16 %v4387, %v4387
      %v4577 = vpack.c.b16 %v4388, %v4388
      %v4578 = vpack.c.b16 %v4389, %v4389
      %v4912 = vunpack.c.l.b16 %v3665
      %v4913 = vunpack.c.l.b16 %v3666
      %v4914 = vunpack.c.l.b16 %v3667
      %v4915 = vunpack.c.l.b16 %v3668
      %v4916 = vunpack.c.l.b16 %v3669
      %v4917 = vunpack.c.l.b16 %v3670
      %v4918 = vunpack.c.l.b16 %v3671
      %v4919 = vunpack.c.l.b16 %v3672
      %v4920 = vunpack.c.l.b16 %v3673
      %v4921 = vunpack.c.l.b16 %v3674
      %v4922 = vunpack.c.l.b16 %v3675
      %v4923 = vunpack.c.l.b16 %v3676
      %v4924 = vunpack.c.l.b16 %v3677
      %v4925 = vunpack.c.l.b16 %v3678
      %v4926 = vunpack.c.l.b16 %v3679
      %v4927 = vunpack.c.l.b16 %v3680
      %v4928 = vunpack.c.l.b16 %v3681
      %v4929 = vunpack.c.l.b16 %v3682
      %v4930 = vunpack.c.l.b16 %v3683
      %v4931 = vunpack.c.l.b16 %v3684
      %v4932 = vunpack.c.l.b16 %v3685
      %v4933 = vunpack.c.l.b16 %v3686
      %v4934 = vunpack.c.l.b16 %v3687
      %v4935 = vunpack.c.l.b16 %v3688
      %v4936 = vunpack.c.l.b16 %v3689
      %v4937 = vunpack.c.l.b16 %v3690
      %v4938 = vunpack.c.l.b16 %v3691
      %v4939 = vunpack.c.l.b16 %v3692
      %v4940 = vunpack.c.l.b16 %v3693
      %v4941 = vunpack.c.l.b16 %v3694
      %v4942 = vunpack.c.l.b16 %v3695
      %v4943 = vunpack.c.l.b16 %v3696
      %v4944 = vunpack.c.l.b16 %v3697
      %v4945 = vunpack.c.l.b16 %v3698
      %v4946 = vunpack.c.l.b16 %v3699
      %v4947 = vunpack.c.l.b16 %v3700
      %v4948 = vunpack.c.l.b16 %v3701
      %v4949 = vunpack.c.l.b16 %v3702
      %v4950 = vunpack.c.l.b16 %v3703
      %v4951 = vunpack.c.l.b16 %v3704
      %v4952 = vunpack.c.l.b16 %v3705
      %v4953 = vunpack.c.l.b16 %v3706
      %v4954 = vunpack.c.l.b16 %v3707
      %v4955 = vunpack.c.l.b16 %v3708
      %v4956 = vunpack.c.l.b16 %v3709
      %v4957 = vunpack.c.l.b16 %v3710
      %v4958 = vunpack.c.l.b16 %v3711
      %v4959 = vunpack.c.l.b16 %v3712
      %v4960 = vunpack.c.l.b16 %v3713
      %v4961 = vunpack.c.l.b16 %v3714
      %v4962 = vunpack.c.l.b16 %v3715
      %v4963 = vunpack.c.l.b16 %v3716
      %v4964 = vunpack.c.l.b16 %v3717
      %v4965 = vunpack.c.l.b16 %v3718
      %v4966 = vunpack.c.l.b16 %v3719
      %v4967 = vunpack.c.l.b16 %v3720
      %v4968 = vunpack.c.l.b16 %v3721
      %v4969 = vunpack.c.l.b16 %v3722
      %v4970 = vunpack.c.l.b16 %v3723
      %v4971 = vunpack.c.l.b16 %v3724
      %v4972 = vunpack.c.l.b16 %v3725
      %v4973 = vunpack.c.l.b16 %v3726
      %v4974 = vunpack.c.l.b16 %v3727
      %v4975 = vunpack.c.l.b16 %v3728
      %v4976 = vunpack.c.l.b16 %v3729
      %v4977 = vunpack.c.l.b16 %v3730
      %v4978 = vunpack.c.l.b16 %v3731
      %v4979 = vunpack.c.l.b16 %v3732
      %v4980 = vunpack.c.l.b16 %v3733
      %v4981 = vunpack.c.l.b16 %v3734
      %v4982 = vunpack.c.l.b16 %v3735
      %v4983 = vunpack.c.l.b16 %v3736
      %v4984 = vunpack.c.l.b16 %v3737
      %v4985 = vunpack.c.l.b16 %v3738
      %v4986 = vunpack.c.l.b16 %v3739
      %v4987 = vunpack.c.l.b16 %v3740
      %v4988 = vunpack.c.l.b16 %v3741
      %v4989 = vunpack.c.l.b16 %v3742
      %v4990 = vunpack.c.l.b16 %v3743
      %v4991 = vunpack.c.l.b16 %v3744
      %v4992 = vunpack.c.l.b16 %v3745
      %v4993 = vunpack.c.l.b16 %v3746
      %v4994 = vunpack.c.l.b16 %v3747
      %v4995 = vunpack.c.l.b16 %v3748
      %v4996 = vunpack.c.l.b16 %v3749
      %v4997 = vunpack.c.l.b16 %v3750
      %v4998 = vunpack.c.l.b16 %v3751
      %v4999 = vunpack.c.l.b16 %v3752
      %v5000 = vunpack.c.l.b16 %v3753
      %v5001 = vunpack.c.l.b16 %v3754
      %v5002 = vunpack.c.l.b16 %v3755
      %v5003 = vunpack.c.l.b16 %v3756
      %v5004 = vunpack.c.l.b16 %v3757
      %v5005 = vunpack.c.l.b16 %v3758
      %v5006 = vunpack.c.l.b16 %v3759
      %v5007 = vunpack.c.l.b16 %v3760
      %v5008 = vunpack.c.l.b16 %v3761
      %v5009 = vunpack.c.l.b16 %v3762
      %v5010 = vunpack.c.l.b16 %v3763
      %v5011 = vunpack.c.l.b16 %v3764
      %v5012 = vunpack.c.l.b16 %v3765
      %v5013 = vunpack.c.l.b16 %v3766
      %v5014 = vunpack.c.l.b16 %v3767
      %v5015 = vunpack.c.l.b16 %v3768
      %v5016 = vunpack.c.l.b16 %v3769
      %v5017 = vunpack.c.l.b16 %v3770
      %v5018 = vunpack.c.l.b16 %v3771
      %v5019 = vunpack.c.l.b16 %v3772
      %v5020 = vunpack.c.l.b16 %v3773
      %v5021 = vunpack.c.l.b16 %v3774
      %v5022 = vunpack.c.l.b16 %v3775
      %v5023 = vunpack.c.l.b16 %v3776
      %v5024 = vunpack.c.l.b16 %v3777
      %v5025 = vunpack.c.l.b16 %v3778
      %v5026 = vunpack.c.l.b16 %v3779
      %v5027 = vunpack.c.l.b16 %v3780
      %v5028 = vunpack.c.l.b16 %v3781
      %v5029 = vunpack.c.l.b16 %v3782
      %v5030 = vunpack.c.l.b16 %v3783
      %v5031 = vunpack.c.l.b16 %v3784
      %v5032 = vunpack.c.l.b16 %v3785
      %v5033 = vunpack.c.l.b16 %v3786
      %v5034 = vunpack.c.l.b16 %v3787
      %v5035 = vunpack.c.l.b16 %v3788
      %v5036 = vunpack.c.l.b16 %v3789
      %v5037 = vunpack.c.l.b16 %v3790
      %v5038 = vunpack.c.l.b16 %v3791
      %v5039 = vunpack.c.l.b16 %v3792
      %v5040 = vunpack.c.l.b16 %v3793
      %v5041 = vunpack.c.l.b16 %v3794
      %v5042 = vunpack.c.l.b16 %v3795
      %v5043 = vunpack.c.l.b16 %v3796
      %v5044 = vunpack.c.l.b16 %v3797
      %v5045 = vunpack.c.l.b16 %v3798
      %v5046 = vunpack.c.l.b16 %v3799
      %v5047 = vunpack.c.l.b16 %v3800
      %v5048 = vunpack.c.l.b16 %v3801
      %v5049 = vunpack.c.l.b16 %v3802
      %v5050 = vunpack.c.l.b16 %v3803
      %v5051 = vunpack.c.l.b16 %v3804
      %v5052 = vunpack.c.l.b16 %v3805
      %v5053 = vunpack.c.l.b16 %v3806
      %v5054 = vunpack.c.l.b16 %v3807
      %v5055 = vunpack.c.l.b16 %v3808
      %v5056 = vpack.c.b16 %v4913, %v4912
      %v5057 = vpack.c.b16 %v4915, %v4914
      %v5058 = vpack.c.b16 %v4917, %v4916
      %v5059 = vpack.c.b16 %v4919, %v4918
      %v5060 = vpack.c.b16 %v4921, %v4920
      %v5061 = vpack.c.b16 %v4923, %v4922
      %v5062 = vpack.c.b16 %v4925, %v4924
      %v5063 = vpack.c.b16 %v4927, %v4926
      %v5064 = vpack.c.b16 %v4929, %v4928
      %v5065 = vpack.c.b16 %v4931, %v4930
      %v5066 = vpack.c.b16 %v4933, %v4932
      %v5067 = vpack.c.b16 %v4935, %v4934
      %v5068 = vpack.c.b16 %v4937, %v4936
      %v5069 = vpack.c.b16 %v4939, %v4938
      %v5070 = vpack.c.b16 %v4941, %v4940
      %v5071 = vpack.c.b16 %v4943, %v4942
      %v5072 = vpack.c.b16 %v4945, %v4944
      %v5073 = vpack.c.b16 %v4947, %v4946
      %v5074 = vpack.c.b16 %v4949, %v4948
      %v5075 = vpack.c.b16 %v4951, %v4950
      %v5076 = vpack.c.b16 %v4953, %v4952
      %v5077 = vpack.c.b16 %v4955, %v4954
      %v5078 = vpack.c.b16 %v4957, %v4956
      %v5079 = vpack.c.b16 %v4959, %v4958
      %v5080 = vpack.c.b16 %v4961, %v4960
      %v5081 = vpack.c.b16 %v4963, %v4962
      %v5082 = vpack.c.b16 %v4965, %v4964
      %v5083 = vpack.c.b16 %v4967, %v4966
      %v5084 = vpack.c.b16 %v4969, %v4968
      %v5085 = vpack.c.b16 %v4971, %v4970
      %v5086 = vpack.c.b16 %v4973, %v4972
      %v5087 = vpack.c.b16 %v4975, %v4974
      %v5088 = vpack.c.b16 %v4977, %v4976
      %v5089 = vpack.c.b16 %v4979, %v4978
      %v5090 = vpack.c.b16 %v4981, %v4980
      %v5091 = vpack.c.b16 %v4983, %v4982
      %v5092 = vpack.c.b16 %v4985, %v4984
      %v5093 = vpack.c.b16 %v4987, %v4986
      %v5094 = vpack.c.b16 %v4989, %v4988
      %v5095 = vpack.c.b16 %v4991, %v4990
      %v5096 = vpack.c.b16 %v4993, %v4992
      %v5097 = vpack.c.b16 %v4995, %v4994
      %v5098 = vpack.c.b16 %v4997, %v4996
      %v5099 = vpack.c.b16 %v4999, %v4998
      %v5100 = vpack.c.b16 %v5001, %v5000
      %v5101 = vpack.c.b16 %v5003, %v5002
      %v5102 = vpack.c.b16 %v5005, %v5004
      %v5103 = vpack.c.b16 %v5007, %v5006
      %v5104 = vpack.c.b16 %v5009, %v5008
      %v5105 = vpack.c.b16 %v5011, %v5010
      %v5106 = vpack.c.b16 %v5013, %v5012
      %v5107 = vpack.c.b16 %v5015, %v5014
      %v5108 = vpack.c.b16 %v5017, %v5016
      %v5109 = vpack.c.b16 %v5019, %v5018
      %v5110 = vpack.c.b16 %v5021, %v5020
      %v5111 = vpack.c.b16 %v5023, %v5022
      %v5112 = vpack.c.b16 %v5025, %v5024
      %v5113 = vpack.c.b16 %v5027, %v5026
      %v5114 = vpack.c.b16 %v5029, %v5028
      %v5115 = vpack.c.b16 %v5031, %v5030
      %v5116 = vpack.c.b16 %v5033, %v5032
      %v5117 = vpack.c.b16 %v5035, %v5034
      %v5118 = vpack.c.b16 %v5037, %v5036
      %v5119 = vpack.c.b16 %v5039, %v5038
      %v5120 = vpack.c.b16 %v5041, %v5040
      %v5121 = vpack.c.b16 %v5043, %v5042
      %v5122 = vpack.c.b16 %v5045, %v5044
      %v5123 = vpack.c.b16 %v5047, %v5046
      %v5124 = vpack.c.b16 %v5049, %v5048
      %v5125 = vpack.c.b16 %v5051, %v5050
      %v5126 = vpack.c.b16 %v5053, %v5052
      %v5127 = vpack.c.b16 %v5055, %v5054
      %5200 = vmatprep.subr.bf16.mxu0 0
      %5201 = vmatpush1.bf16.msra.mxu0 %v5063
      %5202 = vmatprep.subr.bf16.mxu0 0
      %5203 = vmatpush1.bf16.msra.mxu0 %v5062
      %5204 = vmatprep.subr.bf16.mxu0 0
      %5205 = vmatpush1.bf16.msra.mxu0 %v5061
      %5206 = vmatprep.subr.bf16.mxu0 0
      %5207 = vmatpush1.bf16.msra.mxu0 %v5060
      %5208 = vmatprep.subr.bf16.mxu0 0
      %5209 = vmatpush1.bf16.msra.mxu0 %v5059
      %5210 = vmatprep.subr.bf16.mxu0 0
      %5211 = vmatpush1.bf16.msra.mxu0 %v5058
      %5212 = vmatprep.subr.bf16.mxu0 0
      %5213 = vmatpush1.bf16.msra.mxu0 %v5057
      %5214 = vmatprep.subr.bf16.mxu0 0
      %5215 = vmatpush1.bf16.msra.mxu0 %v5056
      %5216 = vmatprep.subr.bf16.mxu0 0
      %5217 = vmatpush2.bf16.msra.mxu0 %v5071
      %5218 = vmatprep.subr.bf16.mxu0 0
      %5219 = vmatpush2.bf16.msra.mxu0 %v5070
      %5220 = vmatprep.subr.bf16.mxu0 0
      %5221 = vmatpush2.bf16.msra.mxu0 %v5069
      %5222 = vmatprep.subr.bf16.mxu0 0
      %5223 = vmatpush2.bf16.msra.mxu0 %v5068
      %5224 = vmatprep.subr.bf16.mxu0 0
      %5225 = vmatpush2.bf16.msra.mxu0 %v5067
      %5226 = vmatprep.subr.bf16.mxu0 0
      %5227 = vmatpush2.bf16.msra.mxu0 %v5066
      %5228 = vmatprep.subr.bf16.mxu0 0
      %5229 = vmatpush2.bf16.msra.mxu0 %v5065
      %5230 = vmatprep.subr.bf16.mxu0 0
      %5231 = vmatpush2.bf16.msra.mxu0 %v5064
      %5232 = vmatprep.mubr.bf16.mxu0 %v4391
      %5233 = vmatmul.mubr.bf16.gmra.mxu0 %v4390
      %v5234 = vpop.f32.mrf.mxu0
      %v5235 = vadd.f32 %v3814, %v5234
      %v5236 = vpop.f32.mrf.mxu0
      %v5237 = vpop.f32.mrf.mxu0
      %v5238 = vadd.f32 %v3814, %v5237
      %v5239 = vpop.f32.mrf.mxu0
      %5240 = vmatprep.mubr.bf16.mxu0 %v4400
      %5241 = vmatmul.mubr.bf16.gmra.mxu0 %v4399
      %v5242 = vpop.f32.mrf.mxu0
      %v5243 = vadd.f32 %v3814, %v5242
      %v5244 = vpop.f32.mrf.mxu0
      %v5245 = vpop.f32.mrf.mxu0
      %v5246 = vadd.f32 %v3814, %v5245
      %v5247 = vpop.f32.mrf.mxu0
      %5248 = vmatprep.mubr.bf16.mxu0 %v4409
      %5249 = vmatmul.mubr.bf16.gmra.mxu0 %v4408
      %v5250 = vpop.f32.mrf.mxu0
      %v5251 = vadd.f32 %v3814, %v5250
      %v5252 = vpop.f32.mrf.mxu0
      %v5253 = vpop.f32.mrf.mxu0
      %v5254 = vadd.f32 %v3814, %v5253
      %v5255 = vpop.f32.mrf.mxu0
      %5256 = vmatprep.mubr.bf16.mxu0 %v4418
      %5257 = vmatmul.mubr.bf16.gmra.mxu0 %v4417
      %v5258 = vpop.f32.mrf.mxu0
      %v5259 = vadd.f32 %v3814, %v5258
      %v5260 = vpop.f32.mrf.mxu0
      %v5261 = vpop.f32.mrf.mxu0
      %v5262 = vadd.f32 %v3814, %v5261
      %v5263 = vpop.f32.mrf.mxu0
      %5264 = vmatprep.mubr.bf16.mxu0 %v4427
      %5265 = vmatmul.mubr.bf16.gmra.mxu0 %v4426
      %v5266 = vpop.f32.mrf.mxu0
      %v5267 = vadd.f32 %v3814, %v5266
      %v5268 = vpop.f32.mrf.mxu0
      %v5269 = vpop.f32.mrf.mxu0
      %v5270 = vadd.f32 %v3814, %v5269
      %v5271 = vpop.f32.mrf.mxu0
      %5272 = vmatprep.mubr.bf16.mxu0 %v4436
      %5273 = vmatmul.mubr.bf16.gmra.mxu0 %v4435
      %v5274 = vpop.f32.mrf.mxu0
      %v5275 = vadd.f32 %v3814, %v5274
      %v5276 = vpop.f32.mrf.mxu0
      %v5277 = vpop.f32.mrf.mxu0
      %v5278 = vadd.f32 %v3814, %v5277
      %v5279 = vpop.f32.mrf.mxu0
      %5280 = vmatprep.mubr.bf16.mxu0 %v4445
      %5281 = vmatmul.mubr.bf16.gmra.mxu0 %v4444
      %v5282 = vpop.f32.mrf.mxu0
      %v5283 = vadd.f32 %v3814, %v5282
      %v5284 = vpop.f32.mrf.mxu0
      %v5285 = vpop.f32.mrf.mxu0
      %v5286 = vadd.f32 %v3814, %v5285
      %v5287 = vpop.f32.mrf.mxu0
      %5288 = vmatprep.mubr.bf16.mxu0 %v4454
      %5289 = vmatmul.mubr.bf16.gmra.mxu0 %v4453
      %v5290 = vpop.f32.mrf.mxu0
      %v5291 = vadd.f32 %v3814, %v5290
      %v5292 = vpop.f32.mrf.mxu0
      %v5293 = vpop.f32.mrf.mxu0
      %v5294 = vadd.f32 %v3814, %v5293
      %v5295 = vpop.f32.mrf.mxu0
      %5296 = vmatprep.mubr.bf16.mxu0 %v4463
      %5297 = vmatmul.mubr.bf16.gmra.mxu0 %v4462
      %v5298 = vpop.f32.mrf.mxu0
      %v5299 = vadd.f32 %v3814, %v5298
      %v5300 = vpop.f32.mrf.mxu0
      %v5301 = vpop.f32.mrf.mxu0
      %v5302 = vadd.f32 %v3814, %v5301
      %v5303 = vpop.f32.mrf.mxu0
      %5304 = vmatprep.mubr.bf16.mxu0 %v4472
      %5305 = vmatmul.mubr.bf16.gmra.mxu0 %v4471
      %v5306 = vpop.f32.mrf.mxu0
      %v5307 = vadd.f32 %v3814, %v5306
      %v5308 = vpop.f32.mrf.mxu0
      %v5309 = vpop.f32.mrf.mxu0
      %v5310 = vadd.f32 %v3814, %v5309
      %v5311 = vpop.f32.mrf.mxu0
      %5312 = vmatprep.mubr.bf16.mxu0 %v4481
      %5313 = vmatmul.mubr.bf16.gmra.mxu0 %v4480
      %v5314 = vpop.f32.mrf.mxu0
      %v5315 = vadd.f32 %v3814, %v5314
      %v5316 = vpop.f32.mrf.mxu0
      %v5317 = vpop.f32.mrf.mxu0
      %v5318 = vadd.f32 %v3814, %v5317
      %v5319 = vpop.f32.mrf.mxu0
      %5320 = vmatprep.mubr.bf16.mxu0 %v4490
      %5321 = vmatmul.mubr.bf16.gmra.mxu0 %v4489
      %v5322 = vpop.f32.mrf.mxu0
      %v5323 = vadd.f32 %v3814, %v5322
      %v5324 = vpop.f32.mrf.mxu0
      %v5325 = vpop.f32.mrf.mxu0
      %v5326 = vadd.f32 %v3814, %v5325
      %v5327 = vpop.f32.mrf.mxu0
      %5328 = vmatprep.mubr.bf16.mxu0 %v4499
      %5329 = vmatmul.mubr.bf16.gmra.mxu0 %v4498
      %v5330 = vpop.f32.mrf.mxu0
      %v5331 = vadd.f32 %v3814, %v5330
      %v5332 = vpop.f32.mrf.mxu0
      %v5333 = vpop.f32.mrf.mxu0
      %v5334 = vadd.f32 %v3814, %v5333
      %v5335 = vpop.f32.mrf.mxu0
      %5336 = vmatprep.mubr.bf16.mxu0 %v4508
      %5337 = vmatmul.mubr.bf16.gmra.mxu0 %v4507
      %v5338 = vpop.f32.mrf.mxu0
      %v5339 = vadd.f32 %v3814, %v5338
      %v5340 = vpop.f32.mrf.mxu0
      %v5341 = vpop.f32.mrf.mxu0
      %v5342 = vadd.f32 %v3814, %v5341
      %v5343 = vpop.f32.mrf.mxu0
      %5344 = vmatprep.mubr.bf16.mxu0 %v4517
      %5345 = vmatmul.mubr.bf16.gmra.mxu0 %v4516
      %v5346 = vpop.f32.mrf.mxu0
      %v5347 = vadd.f32 %v3814, %v5346
      %v5348 = vpop.f32.mrf.mxu0
      %v5349 = vpop.f32.mrf.mxu0
      %v5350 = vadd.f32 %v3814, %v5349
      %v5351 = vpop.f32.mrf.mxu0
      %5352 = vmatprep.mubr.bf16.mxu0 %v4526
      %5353 = vmatmul.mubr.bf16.gmra.mxu0 %v4525
      %v5354 = vpop.f32.mrf.mxu0
      %v5355 = vadd.f32 %v3814, %v5354
      %v5356 = vpop.f32.mrf.mxu0
      %v5357 = vpop.f32.mrf.mxu0
      %v5358 = vadd.f32 %v3814, %v5357
      %v5359 = vpop.f32.mrf.mxu0
      %5360 = vmatprep.mubr.bf16.mxu0 %v4535
      %5361 = vmatmul.mubr.bf16.gmra.mxu0 %v4534
      %v5362 = vpop.f32.mrf.mxu0
      %v5363 = vadd.f32 %v3814, %v5362
      %v5364 = vpop.f32.mrf.mxu0
      %v5365 = vpop.f32.mrf.mxu0
      %v5366 = vadd.f32 %v3814, %v5365
      %v5367 = vpop.f32.mrf.mxu0
      %5368 = vmatprep.mubr.bf16.mxu0 %v4544
      %5369 = vmatmul.mubr.bf16.gmra.mxu0 %v4543
      %v5370 = vpop.f32.mrf.mxu0
      %v5371 = vadd.f32 %v3814, %v5370
      %v5372 = vpop.f32.mrf.mxu0
      %v5373 = vpop.f32.mrf.mxu0
      %v5374 = vadd.f32 %v3814, %v5373
      %v5375 = vpop.f32.mrf.mxu0
      %5376 = vmatprep.mubr.bf16.mxu0 %v4553
      %5377 = vmatmul.mubr.bf16.gmra.mxu0 %v4552
      %v5378 = vpop.f32.mrf.mxu0
      %v5379 = vadd.f32 %v3814, %v5378
      %v5380 = vpop.f32.mrf.mxu0
      %v5381 = vpop.f32.mrf.mxu0
      %v5382 = vadd.f32 %v3814, %v5381
      %v5383 = vpop.f32.mrf.mxu0
      %5384 = vmatprep.mubr.bf16.mxu0 %v4562
      %5385 = vmatmul.mubr.bf16.gmra.mxu0 %v4561
      %v5386 = vpop.f32.mrf.mxu0
      %v5387 = vadd.f32 %v3814, %v5386
      %v5388 = vpop.f32.mrf.mxu0
      %v5389 = vpop.f32.mrf.mxu0
      %v5390 = vadd.f32 %v3814, %v5389
      %v5391 = vpop.f32.mrf.mxu0
      %5392 = vmatprep.mubr.bf16.mxu0 %v4571
      %5393 = vmatmul.mubr.bf16.gmra.mxu0 %v4570
      %v5394 = vpop.f32.mrf.mxu0
      %v5395 = vadd.f32 %v3814, %v5394
      %v5396 = vpop.f32.mrf.mxu0
      %v5397 = vpop.f32.mrf.mxu0
      %v5398 = vpop.f32.mrf.mxu0
      %5399 = vdwg.mxu0
      %5400 = vmatprep.subr.bf16.mxu0 0
      %5401 = vmatpush1.bf16.msra.mxu0 %v5079
      %5402 = vmatprep.subr.bf16.mxu0 0
      %5403 = vmatpush1.bf16.msra.mxu0 %v5078
      %5404 = vmatprep.subr.bf16.mxu0 0
      %5405 = vmatpush1.bf16.msra.mxu0 %v5077
      %5406 = vmatprep.subr.bf16.mxu0 0
      %5407 = vmatpush1.bf16.msra.mxu0 %v5076
      %5408 = vmatprep.subr.bf16.mxu0 0
      %5409 = vmatpush1.bf16.msra.mxu0 %v5075
      %5410 = vmatprep.subr.bf16.mxu0 0
      %5411 = vmatpush1.bf16.msra.mxu0 %v5074
      %5412 = vmatprep.subr.bf16.mxu0 0
      %5413 = vmatpush1.bf16.msra.mxu0 %v5073
      %5414 = vmatprep.subr.bf16.mxu0 0
      %5415 = vmatpush1.bf16.msra.mxu0 %v5072
      %5416 = vmatprep.subr.bf16.mxu0 0
      %5417 = vmatpush2.bf16.msra.mxu0 %v5087
      %5418 = vmatprep.subr.bf16.mxu0 0
      %5419 = vmatpush2.bf16.msra.mxu0 %v5086
      %5420 = vmatprep.subr.bf16.mxu0 0
      %5421 = vmatpush2.bf16.msra.mxu0 %v5085
      %5422 = vmatprep.subr.bf16.mxu0 0
      %5423 = vmatpush2.bf16.msra.mxu0 %v5084
      %5424 = vmatprep.subr.bf16.mxu0 0
      %5425 = vmatpush2.bf16.msra.mxu0 %v5083
      %5426 = vmatprep.subr.bf16.mxu0 0
      %5427 = vmatpush2.bf16.msra.mxu0 %v5082
      %5428 = vmatprep.subr.bf16.mxu0 0
      %5429 = vmatpush2.bf16.msra.mxu0 %v5081
      %5430 = vmatprep.subr.bf16.mxu0 0
      %5431 = vmatpush2.bf16.msra.mxu0 %v5080
      %5432 = vmatprep.mubr.bf16.mxu0 %v4393
      %5433 = vmatmul.mubr.bf16.gmra.mxu0 %v4392
      %v5434 = vpop.f32.mrf.mxu0
      %v5435 = vadd.f32 %v5235, %v5434
      %v5436 = vpop.f32.mrf.mxu0
      %v5437 = vpop.f32.mrf.mxu0
      %v5438 = vadd.f32 %v5238, %v5437
      %v5439 = vpop.f32.mrf.mxu0
      %5440 = vmatprep.mubr.bf16.mxu0 %v4402
      %5441 = vmatmul.mubr.bf16.gmra.mxu0 %v4401
      %v5442 = vpop.f32.mrf.mxu0
      %v5443 = vadd.f32 %v5243, %v5442
      %v5444 = vpop.f32.mrf.mxu0
      %v5445 = vpop.f32.mrf.mxu0
      %v5446 = vadd.f32 %v5246, %v5445
      %v5447 = vpop.f32.mrf.mxu0
      %5448 = vmatprep.mubr.bf16.mxu0 %v4411
      %5449 = vmatmul.mubr.bf16.gmra.mxu0 %v4410
      %v5450 = vpop.f32.mrf.mxu0
      %v5451 = vadd.f32 %v5251, %v5450
      %v5452 = vpop.f32.mrf.mxu0
      %v5453 = vpop.f32.mrf.mxu0
      %v5454 = vadd.f32 %v5254, %v5453
      %v5455 = vpop.f32.mrf.mxu0
      %5456 = vmatprep.mubr.bf16.mxu0 %v4420
      %5457 = vmatmul.mubr.bf16.gmra.mxu0 %v4419
      %v5458 = vpop.f32.mrf.mxu0
      %v5459 = vadd.f32 %v5259, %v5458
      %v5460 = vpop.f32.mrf.mxu0
      %v5461 = vpop.f32.mrf.mxu0
      %v5462 = vadd.f32 %v5262, %v5461
      %v5463 = vpop.f32.mrf.mxu0
      %5464 = vmatprep.mubr.bf16.mxu0 %v4429
      %5465 = vmatmul.mubr.bf16.gmra.mxu0 %v4428
      %v5466 = vpop.f32.mrf.mxu0
      %v5467 = vadd.f32 %v5267, %v5466
      %v5468 = vpop.f32.mrf.mxu0
      %v5469 = vpop.f32.mrf.mxu0
      %v5470 = vadd.f32 %v5270, %v5469
      %v5471 = vpop.f32.mrf.mxu0
      %5472 = vmatprep.mubr.bf16.mxu0 %v4438
      %5473 = vmatmul.mubr.bf16.gmra.mxu0 %v4437
      %v5474 = vpop.f32.mrf.mxu0
      %v5475 = vadd.f32 %v5275, %v5474
      %v5476 = vpop.f32.mrf.mxu0
      %v5477 = vpop.f32.mrf.mxu0
      %v5478 = vadd.f32 %v5278, %v5477
      %v5479 = vpop.f32.mrf.mxu0
      %5480 = vmatprep.mubr.bf16.mxu0 %v4447
      %5481 = vmatmul.mubr.bf16.gmra.mxu0 %v4446
      %v5482 = vpop.f32.mrf.mxu0
      %v5483 = vadd.f32 %v5283, %v5482
      %v5484 = vpop.f32.mrf.mxu0
      %v5485 = vpop.f32.mrf.mxu0
      %v5486 = vadd.f32 %v5286, %v5485
      %v5487 = vpop.f32.mrf.mxu0
      %5488 = vmatprep.mubr.bf16.mxu0 %v4456
      %5489 = vmatmul.mubr.bf16.gmra.mxu0 %v4455
      %v5490 = vpop.f32.mrf.mxu0
      %v5491 = vadd.f32 %v5291, %v5490
      %v5492 = vpop.f32.mrf.mxu0
      %v5493 = vpop.f32.mrf.mxu0
      %v5494 = vadd.f32 %v5294, %v5493
      %v5495 = vpop.f32.mrf.mxu0
      %5496 = vmatprep.mubr.bf16.mxu0 %v4465
      %5497 = vmatmul.mubr.bf16.gmra.mxu0 %v4464
      %v5498 = vpop.f32.mrf.mxu0
      %v5499 = vadd.f32 %v5299, %v5498
      %v5500 = vpop.f32.mrf.mxu0
      %v5501 = vpop.f32.mrf.mxu0
      %v5502 = vadd.f32 %v5302, %v5501
      %v5503 = vpop.f32.mrf.mxu0
      %5504 = vmatprep.mubr.bf16.mxu0 %v4474
      %5505 = vmatmul.mubr.bf16.gmra.mxu0 %v4473
      %v5506 = vpop.f32.mrf.mxu0
      %v5507 = vadd.f32 %v5307, %v5506
      %v5508 = vpop.f32.mrf.mxu0
      %v5509 = vpop.f32.mrf.mxu0
      %v5510 = vadd.f32 %v5310, %v5509
      %v5511 = vpop.f32.mrf.mxu0
      %5512 = vmatprep.mubr.bf16.mxu0 %v4483
      %5513 = vmatmul.mubr.bf16.gmra.mxu0 %v4482
      %v5514 = vpop.f32.mrf.mxu0
      %v5515 = vadd.f32 %v5315, %v5514
      %v5516 = vpop.f32.mrf.mxu0
      %v5517 = vpop.f32.mrf.mxu0
      %v5518 = vadd.f32 %v5318, %v5517
      %v5519 = vpop.f32.mrf.mxu0
      %5520 = vmatprep.mubr.bf16.mxu0 %v4492
      %5521 = vmatmul.mubr.bf16.gmra.mxu0 %v4491
      %v5522 = vpop.f32.mrf.mxu0
      %v5523 = vadd.f32 %v5323, %v5522
      %v5524 = vpop.f32.mrf.mxu0
      %v5525 = vpop.f32.mrf.mxu0
      %v5526 = vadd.f32 %v5326, %v5525
      %v5527 = vpop.f32.mrf.mxu0
      %5528 = vmatprep.mubr.bf16.mxu0 %v4501
      %5529 = vmatmul.mubr.bf16.gmra.mxu0 %v4500
      %v5530 = vpop.f32.mrf.mxu0
      %v5531 = vadd.f32 %v5331, %v5530
      %v5532 = vpop.f32.mrf.mxu0
      %v5533 = vpop.f32.mrf.mxu0
      %v5534 = vadd.f32 %v5334, %v5533
      %v5535 = vpop.f32.mrf.mxu0
      %5536 = vmatprep.mubr.bf16.mxu0 %v4510
      %5537 = vmatmul.mubr.bf16.gmra.mxu0 %v4509
      %v5538 = vpop.f32.mrf.mxu0
      %v5539 = vadd.f32 %v5339, %v5538
      %v5540 = vpop.f32.mrf.mxu0
      %v5541 = vpop.f32.mrf.mxu0
      %v5542 = vadd.f32 %v5342, %v5541
      %v5543 = vpop.f32.mrf.mxu0
      %5544 = vmatprep.mubr.bf16.mxu0 %v4519
      %5545 = vmatmul.mubr.bf16.gmra.mxu0 %v4518
      %v5546 = vpop.f32.mrf.mxu0
      %v5547 = vadd.f32 %v5347, %v5546
      %v5548 = vpop.f32.mrf.mxu0
      %v5549 = vpop.f32.mrf.mxu0
      %v5550 = vadd.f32 %v5350, %v5549
      %v5551 = vpop.f32.mrf.mxu0
      %5552 = vmatprep.mubr.bf16.mxu0 %v4528
      %5553 = vmatmul.mubr.bf16.gmra.mxu0 %v4527
      %v5554 = vpop.f32.mrf.mxu0
      %v5555 = vadd.f32 %v5355, %v5554
      %v5556 = vpop.f32.mrf.mxu0
      %v5557 = vpop.f32.mrf.mxu0
      %v5558 = vadd.f32 %v5358, %v5557
      %v5559 = vpop.f32.mrf.mxu0
      %5560 = vmatprep.mubr.bf16.mxu0 %v4537
      %5561 = vmatmul.mubr.bf16.gmra.mxu0 %v4536
      %v5562 = vpop.f32.mrf.mxu0
      %v5563 = vadd.f32 %v5363, %v5562
      %v5564 = vpop.f32.mrf.mxu0
      %v5565 = vpop.f32.mrf.mxu0
      %v5566 = vadd.f32 %v5366, %v5565
      %v5567 = vpop.f32.mrf.mxu0
      %5568 = vmatprep.mubr.bf16.mxu0 %v4546
      %5569 = vmatmul.mubr.bf16.gmra.mxu0 %v4545
      %v5570 = vpop.f32.mrf.mxu0
      %v5571 = vadd.f32 %v5371, %v5570
      %v5572 = vpop.f32.mrf.mxu0
      %v5573 = vpop.f32.mrf.mxu0
      %v5574 = vadd.f32 %v5374, %v5573
      %v5575 = vpop.f32.mrf.mxu0
      %5576 = vmatprep.mubr.bf16.mxu0 %v4555
      %5577 = vmatmul.mubr.bf16.gmra.mxu0 %v4554
      %v5578 = vpop.f32.mrf.mxu0
      %v5579 = vadd.f32 %v5379, %v5578
      %v5580 = vpop.f32.mrf.mxu0
      %v5581 = vpop.f32.mrf.mxu0
      %v5582 = vadd.f32 %v5382, %v5581
      %v5583 = vpop.f32.mrf.mxu0
      %5584 = vmatprep.mubr.bf16.mxu0 %v4564
      %5585 = vmatmul.mubr.bf16.gmra.mxu0 %v4563
      %v5586 = vpop.f32.mrf.mxu0
      %v5587 = vadd.f32 %v5387, %v5586
      %v5588 = vpop.f32.mrf.mxu0
      %v5589 = vpop.f32.mrf.mxu0
      %v5590 = vadd.f32 %v5390, %v5589
      %v5591 = vpop.f32.mrf.mxu0
      %5592 = vmatprep.mubr.bf16.mxu0 %v4573
      %5593 = vmatmul.mubr.bf16.gmra.mxu0 %v4572
      %v5594 = vpop.f32.mrf.mxu0
      %v5595 = vadd.f32 %v5395, %v5594
      %v5596 = vpop.f32.mrf.mxu0
      %v5597 = vpop.f32.mrf.mxu0
      %v5598 = vpop.f32.mrf.mxu0
      %5599 = vdwg.mxu0
      %5600 = vmatprep.subr.bf16.mxu0 0
      %5601 = vmatpush1.bf16.msra.mxu0 %v5095
      %5602 = vmatprep.subr.bf16.mxu0 0
      %5603 = vmatpush1.bf16.msra.mxu0 %v5094
      %5604 = vmatprep.subr.bf16.mxu0 0
      %5605 = vmatpush1.bf16.msra.mxu0 %v5093
      %5606 = vmatprep.subr.bf16.mxu0 0
      %5607 = vmatpush1.bf16.msra.mxu0 %v5092
      %5608 = vmatprep.subr.bf16.mxu0 0
      %5609 = vmatpush1.bf16.msra.mxu0 %v5091
      %5610 = vmatprep.subr.bf16.mxu0 0
      %5611 = vmatpush1.bf16.msra.mxu0 %v5090
      %5612 = vmatprep.subr.bf16.mxu0 0
      %5613 = vmatpush1.bf16.msra.mxu0 %v5089
      %5614 = vmatprep.subr.bf16.mxu0 0
      %5615 = vmatpush1.bf16.msra.mxu0 %v5088
      %5616 = vmatprep.subr.bf16.mxu0 0
      %5617 = vmatpush2.bf16.msra.mxu0 %v5103
      %5618 = vmatprep.subr.bf16.mxu0 0
      %5619 = vmatpush2.bf16.msra.mxu0 %v5102
      %5620 = vmatprep.subr.bf16.mxu0 0
      %5621 = vmatpush2.bf16.msra.mxu0 %v5101
      %5622 = vmatprep.subr.bf16.mxu0 0
      %5623 = vmatpush2.bf16.msra.mxu0 %v5100
      %5624 = vmatprep.subr.bf16.mxu0 0
      %5625 = vmatpush2.bf16.msra.mxu0 %v5099
      %5626 = vmatprep.subr.bf16.mxu0 0
      %5627 = vmatpush2.bf16.msra.mxu0 %v5098
      %5628 = vmatprep.subr.bf16.mxu0 0
      %5629 = vmatpush2.bf16.msra.mxu0 %v5097
      %5630 = vmatprep.subr.bf16.mxu0 0
      %5631 = vmatpush2.bf16.msra.mxu0 %v5096
      %5632 = vmatprep.mubr.bf16.mxu0 %v4395
      %5633 = vmatmul.mubr.bf16.gmra.mxu0 %v4394
      %v5634 = vpop.f32.mrf.mxu0
      %v5635 = vadd.f32 %v5435, %v5634
      %v5636 = vpop.f32.mrf.mxu0
      %v5637 = vpop.f32.mrf.mxu0
      %v5638 = vadd.f32 %v5438, %v5637
      %v5639 = vpop.f32.mrf.mxu0
      %5640 = vmatprep.mubr.bf16.mxu0 %v4404
      %5641 = vmatmul.mubr.bf16.gmra.mxu0 %v4403
      %v5642 = vpop.f32.mrf.mxu0
      %v5643 = vadd.f32 %v5443, %v5642
      %v5644 = vpop.f32.mrf.mxu0
      %v5645 = vpop.f32.mrf.mxu0
      %v5646 = vadd.f32 %v5446, %v5645
      %v5647 = vpop.f32.mrf.mxu0
      %5648 = vmatprep.mubr.bf16.mxu0 %v4413
      %5649 = vmatmul.mubr.bf16.gmra.mxu0 %v4412
      %v5650 = vpop.f32.mrf.mxu0
      %v5651 = vadd.f32 %v5451, %v5650
      %v5652 = vpop.f32.mrf.mxu0
      %v5653 = vpop.f32.mrf.mxu0
      %v5654 = vadd.f32 %v5454, %v5653
      %v5655 = vpop.f32.mrf.mxu0
      %5656 = vmatprep.mubr.bf16.mxu0 %v4422
      %5657 = vmatmul.mubr.bf16.gmra.mxu0 %v4421
      %v5658 = vpop.f32.mrf.mxu0
      %v5659 = vadd.f32 %v5459, %v5658
      %v5660 = vpop.f32.mrf.mxu0
      %v5661 = vpop.f32.mrf.mxu0
      %v5662 = vadd.f32 %v5462, %v5661
      %v5663 = vpop.f32.mrf.mxu0
      %5664 = vmatprep.mubr.bf16.mxu0 %v4431
      %5665 = vmatmul.mubr.bf16.gmra.mxu0 %v4430
      %v5666 = vpop.f32.mrf.mxu0
      %v5667 = vadd.f32 %v5467, %v5666
      %v5668 = vpop.f32.mrf.mxu0
      %v5669 = vpop.f32.mrf.mxu0
      %v5670 = vadd.f32 %v5470, %v5669
      %v5671 = vpop.f32.mrf.mxu0
      %5672 = vmatprep.mubr.bf16.mxu0 %v4440
      %5673 = vmatmul.mubr.bf16.gmra.mxu0 %v4439
      %v5674 = vpop.f32.mrf.mxu0
      %v5675 = vadd.f32 %v5475, %v5674
      %v5676 = vpop.f32.mrf.mxu0
      %v5677 = vpop.f32.mrf.mxu0
      %v5678 = vadd.f32 %v5478, %v5677
      %v5679 = vpop.f32.mrf.mxu0
      %5680 = vmatprep.mubr.bf16.mxu0 %v4449
      %5681 = vmatmul.mubr.bf16.gmra.mxu0 %v4448
      %v5682 = vpop.f32.mrf.mxu0
      %v5683 = vadd.f32 %v5483, %v5682
      %v5684 = vpop.f32.mrf.mxu0
      %v5685 = vpop.f32.mrf.mxu0
      %v5686 = vadd.f32 %v5486, %v5685
      %v5687 = vpop.f32.mrf.mxu0
      %5688 = vmatprep.mubr.bf16.mxu0 %v4458
      %5689 = vmatmul.mubr.bf16.gmra.mxu0 %v4457
      %v5690 = vpop.f32.mrf.mxu0
      %v5691 = vadd.f32 %v5491, %v5690
      %v5692 = vpop.f32.mrf.mxu0
      %v5693 = vpop.f32.mrf.mxu0
      %v5694 = vadd.f32 %v5494, %v5693
      %v5695 = vpop.f32.mrf.mxu0
      %5696 = vmatprep.mubr.bf16.mxu0 %v4467
      %5697 = vmatmul.mubr.bf16.gmra.mxu0 %v4466
      %v5698 = vpop.f32.mrf.mxu0
      %v5699 = vadd.f32 %v5499, %v5698
      %v5700 = vpop.f32.mrf.mxu0
      %v5701 = vpop.f32.mrf.mxu0
      %v5702 = vadd.f32 %v5502, %v5701
      %v5703 = vpop.f32.mrf.mxu0
      %5704 = vmatprep.mubr.bf16.mxu0 %v4476
      %5705 = vmatmul.mubr.bf16.gmra.mxu0 %v4475
      %v5706 = vpop.f32.mrf.mxu0
      %v5707 = vadd.f32 %v5507, %v5706
      %v5708 = vpop.f32.mrf.mxu0
      %v5709 = vpop.f32.mrf.mxu0
      %v5710 = vadd.f32 %v5510, %v5709
      %v5711 = vpop.f32.mrf.mxu0
      %5712 = vmatprep.mubr.bf16.mxu0 %v4485
      %5713 = vmatmul.mubr.bf16.gmra.mxu0 %v4484
      %v5714 = vpop.f32.mrf.mxu0
      %v5715 = vadd.f32 %v5515, %v5714
      %v5716 = vpop.f32.mrf.mxu0
      %v5717 = vpop.f32.mrf.mxu0
      %v5718 = vadd.f32 %v5518, %v5717
      %v5719 = vpop.f32.mrf.mxu0
      %5720 = vmatprep.mubr.bf16.mxu0 %v4494
      %5721 = vmatmul.mubr.bf16.gmra.mxu0 %v4493
      %v5722 = vpop.f32.mrf.mxu0
      %v5723 = vadd.f32 %v5523, %v5722
      %v5724 = vpop.f32.mrf.mxu0
      %v5725 = vpop.f32.mrf.mxu0
      %v5726 = vadd.f32 %v5526, %v5725
      %v5727 = vpop.f32.mrf.mxu0
      %5728 = vmatprep.mubr.bf16.mxu0 %v4503
      %5729 = vmatmul.mubr.bf16.gmra.mxu0 %v4502
      %v5730 = vpop.f32.mrf.mxu0
      %v5731 = vadd.f32 %v5531, %v5730
      %v5732 = vpop.f32.mrf.mxu0
      %v5733 = vpop.f32.mrf.mxu0
      %v5734 = vadd.f32 %v5534, %v5733
      %v5735 = vpop.f32.mrf.mxu0
      %5736 = vmatprep.mubr.bf16.mxu0 %v4512
      %5737 = vmatmul.mubr.bf16.gmra.mxu0 %v4511
      %v5738 = vpop.f32.mrf.mxu0
      %v5739 = vadd.f32 %v5539, %v5738
      %v5740 = vpop.f32.mrf.mxu0
      %v5741 = vpop.f32.mrf.mxu0
      %v5742 = vadd.f32 %v5542, %v5741
      %v5743 = vpop.f32.mrf.mxu0
      %5744 = vmatprep.mubr.bf16.mxu0 %v4521
      %5745 = vmatmul.mubr.bf16.gmra.mxu0 %v4520
      %v5746 = vpop.f32.mrf.mxu0
      %v5747 = vadd.f32 %v5547, %v5746
      %v5748 = vpop.f32.mrf.mxu0
      %v5749 = vpop.f32.mrf.mxu0
      %v5750 = vadd.f32 %v5550, %v5749
      %v5751 = vpop.f32.mrf.mxu0
      %5752 = vmatprep.mubr.bf16.mxu0 %v4530
      %5753 = vmatmul.mubr.bf16.gmra.mxu0 %v4529
      %v5754 = vpop.f32.mrf.mxu0
      %v5755 = vadd.f32 %v5555, %v5754
      %v5756 = vpop.f32.mrf.mxu0
      %v5757 = vpop.f32.mrf.mxu0
      %v5758 = vadd.f32 %v5558, %v5757
      %v5759 = vpop.f32.mrf.mxu0
      %5760 = vmatprep.mubr.bf16.mxu0 %v4539
      %5761 = vmatmul.mubr.bf16.gmra.mxu0 %v4538
      %v5762 = vpop.f32.mrf.mxu0
      %v5763 = vadd.f32 %v5563, %v5762
      %v5764 = vpop.f32.mrf.mxu0
      %v5765 = vpop.f32.mrf.mxu0
      %v5766 = vadd.f32 %v5566, %v5765
      %v5767 = vpop.f32.mrf.mxu0
      %5768 = vmatprep.mubr.bf16.mxu0 %v4548
      %5769 = vmatmul.mubr.bf16.gmra.mxu0 %v4547
      %v5770 = vpop.f32.mrf.mxu0
      %v5771 = vadd.f32 %v5571, %v5770
      %v5772 = vpop.f32.mrf.mxu0
      %v5773 = vpop.f32.mrf.mxu0
      %v5774 = vadd.f32 %v5574, %v5773
      %v5775 = vpop.f32.mrf.mxu0
      %5776 = vmatprep.mubr.bf16.mxu0 %v4557
      %5777 = vmatmul.mubr.bf16.gmra.mxu0 %v4556
      %v5778 = vpop.f32.mrf.mxu0
      %v5779 = vadd.f32 %v5579, %v5778
      %v5780 = vpop.f32.mrf.mxu0
      %v5781 = vpop.f32.mrf.mxu0
      %v5782 = vadd.f32 %v5582, %v5781
      %v5783 = vpop.f32.mrf.mxu0
      %5784 = vmatprep.mubr.bf16.mxu0 %v4566
      %5785 = vmatmul.mubr.bf16.gmra.mxu0 %v4565
      %v5786 = vpop.f32.mrf.mxu0
      %v5787 = vadd.f32 %v5587, %v5786
      %v5788 = vpop.f32.mrf.mxu0
      %v5789 = vpop.f32.mrf.mxu0
      %v5790 = vadd.f32 %v5590, %v5789
      %v5791 = vpop.f32.mrf.mxu0
      %5792 = vmatprep.mubr.bf16.mxu0 %v4575
      %5793 = vmatmul.mubr.bf16.gmra.mxu0 %v4574
      %v5794 = vpop.f32.mrf.mxu0
      %v5795 = vadd.f32 %v5595, %v5794
      %v5796 = vpop.f32.mrf.mxu0
      %v5797 = vpop.f32.mrf.mxu0
      %v5798 = vpop.f32.mrf.mxu0
      %5799 = vdwg.mxu0
      %5800 = vmatprep.subr.bf16.mxu0 0
      %5801 = vmatpush1.bf16.msra.mxu0 %v5111
      %5802 = vmatprep.subr.bf16.mxu0 0
      %5803 = vmatpush1.bf16.msra.mxu0 %v5110
      %5804 = vmatprep.subr.bf16.mxu0 0
      %5805 = vmatpush1.bf16.msra.mxu0 %v5109
      %5806 = vmatprep.subr.bf16.mxu0 0
      %5807 = vmatpush1.bf16.msra.mxu0 %v5108
      %5808 = vmatprep.subr.bf16.mxu0 0
      %5809 = vmatpush1.bf16.msra.mxu0 %v5107
      %5810 = vmatprep.subr.bf16.mxu0 0
      %5811 = vmatpush1.bf16.msra.mxu0 %v5106
      %5812 = vmatprep.subr.bf16.mxu0 0
      %5813 = vmatpush1.bf16.msra.mxu0 %v5105
      %5814 = vmatprep.subr.bf16.mxu0 0
      %5815 = vmatpush1.bf16.msra.mxu0 %v5104
      %5816 = vmatprep.subr.bf16.mxu0 0
      %5817 = vmatpush2.bf16.msra.mxu0 %v5119
      %5818 = vmatprep.subr.bf16.mxu0 0
      %5819 = vmatpush2.bf16.msra.mxu0 %v5118
      %5820 = vmatprep.subr.bf16.mxu0 0
      %5821 = vmatpush2.bf16.msra.mxu0 %v5117
      %5822 = vmatprep.subr.bf16.mxu0 0
      %5823 = vmatpush2.bf16.msra.mxu0 %v5116
      %5824 = vmatprep.subr.bf16.mxu0 0
      %5825 = vmatpush2.bf16.msra.mxu0 %v5115
      %5826 = vmatprep.subr.bf16.mxu0 0
      %5827 = vmatpush2.bf16.msra.mxu0 %v5114
      %5828 = vmatprep.subr.bf16.mxu0 0
      %5829 = vmatpush2.bf16.msra.mxu0 %v5113
      %5830 = vmatprep.subr.bf16.mxu0 0
      %5831 = vmatpush2.bf16.msra.mxu0 %v5112
      %5832 = vmatprep.mubr.bf16.mxu0 %v4397
      %5833 = vmatmul.mubr.bf16.gmra.mxu0 %v4396
      %v5834 = vpop.f32.mrf.mxu0
      %v5835 = vadd.f32 %v5635, %v5834
      %v5836 = vpop.f32.mrf.mxu0
      %v5837 = vpop.f32.mrf.mxu0
      %v5838 = vadd.f32 %v5638, %v5837
      %v5839 = vpop.f32.mrf.mxu0
      %5840 = vmatprep.mubr.bf16.mxu0 %v4406
      %5841 = vmatmul.mubr.bf16.gmra.mxu0 %v4405
      %v5842 = vpop.f32.mrf.mxu0
      %v5843 = vadd.f32 %v5643, %v5842
      %v5844 = vpop.f32.mrf.mxu0
      %v5845 = vpop.f32.mrf.mxu0
      %v5846 = vadd.f32 %v5646, %v5845
      %v5847 = vpop.f32.mrf.mxu0
      %5848 = vmatprep.mubr.bf16.mxu0 %v4415
      %5849 = vmatmul.mubr.bf16.gmra.mxu0 %v4414
      %v5850 = vpop.f32.mrf.mxu0
      %v5851 = vadd.f32 %v5651, %v5850
      %v5852 = vpop.f32.mrf.mxu0
      %v5853 = vpop.f32.mrf.mxu0
      %v5854 = vadd.f32 %v5654, %v5853
      %v5855 = vpop.f32.mrf.mxu0
      %5856 = vmatprep.mubr.bf16.mxu0 %v4424
      %5857 = vmatmul.mubr.bf16.gmra.mxu0 %v4423
      %v5858 = vpop.f32.mrf.mxu0
      %v5859 = vadd.f32 %v5659, %v5858
      %v5860 = vpop.f32.mrf.mxu0
      %v5861 = vpop.f32.mrf.mxu0
      %v5862 = vadd.f32 %v5662, %v5861
      %v5863 = vpop.f32.mrf.mxu0
      %5864 = vmatprep.mubr.bf16.mxu0 %v4433
      %5865 = vmatmul.mubr.bf16.gmra.mxu0 %v4432
      %v5866 = vpop.f32.mrf.mxu0
      %v5867 = vadd.f32 %v5667, %v5866
      %v5868 = vpop.f32.mrf.mxu0
      %v5869 = vpop.f32.mrf.mxu0
      %v5870 = vadd.f32 %v5670, %v5869
      %v5871 = vpop.f32.mrf.mxu0
      %5872 = vmatprep.mubr.bf16.mxu0 %v4442
      %5873 = vmatmul.mubr.bf16.gmra.mxu0 %v4441
      %v5874 = vpop.f32.mrf.mxu0
      %v5875 = vadd.f32 %v5675, %v5874
      %v5876 = vpop.f32.mrf.mxu0
      %v5877 = vpop.f32.mrf.mxu0
      %v5878 = vadd.f32 %v5678, %v5877
      %v5879 = vpop.f32.mrf.mxu0
      %5880 = vmatprep.mubr.bf16.mxu0 %v4451
      %5881 = vmatmul.mubr.bf16.gmra.mxu0 %v4450
      %v5882 = vpop.f32.mrf.mxu0
      %v5883 = vadd.f32 %v5683, %v5882
      %v5884 = vpop.f32.mrf.mxu0
      %v5885 = vpop.f32.mrf.mxu0
      %v5886 = vadd.f32 %v5686, %v5885
      %v5887 = vpop.f32.mrf.mxu0
      %5888 = vmatprep.mubr.bf16.mxu0 %v4460
      %5889 = vmatmul.mubr.bf16.gmra.mxu0 %v4459
      %v5890 = vpop.f32.mrf.mxu0
      %v5891 = vadd.f32 %v5691, %v5890
      %v5892 = vpop.f32.mrf.mxu0
      %v5893 = vpop.f32.mrf.mxu0
      %v5894 = vadd.f32 %v5694, %v5893
      %v5895 = vpop.f32.mrf.mxu0
      %5896 = vmatprep.mubr.bf16.mxu0 %v4469
      %5897 = vmatmul.mubr.bf16.gmra.mxu0 %v4468
      %v5898 = vpop.f32.mrf.mxu0
      %v5899 = vadd.f32 %v5699, %v5898
      %v5900 = vpop.f32.mrf.mxu0
      %v5901 = vpop.f32.mrf.mxu0
      %v5902 = vadd.f32 %v5702, %v5901
      %v5903 = vpop.f32.mrf.mxu0
      %5904 = vmatprep.mubr.bf16.mxu0 %v4478
      %5905 = vmatmul.mubr.bf16.gmra.mxu0 %v4477
      %v5906 = vpop.f32.mrf.mxu0
      %v5907 = vadd.f32 %v5707, %v5906
      %v5908 = vpop.f32.mrf.mxu0
      %v5909 = vpop.f32.mrf.mxu0
      %v5910 = vadd.f32 %v5710, %v5909
      %v5911 = vpop.f32.mrf.mxu0
      %5912 = vmatprep.mubr.bf16.mxu0 %v4487
      %5913 = vmatmul.mubr.bf16.gmra.mxu0 %v4486
      %v5914 = vpop.f32.mrf.mxu0
      %v5915 = vadd.f32 %v5715, %v5914
      %v5916 = vpop.f32.mrf.mxu0
      %v5917 = vpop.f32.mrf.mxu0
      %v5918 = vadd.f32 %v5718, %v5917
      %v5919 = vpop.f32.mrf.mxu0
      %5920 = vmatprep.mubr.bf16.mxu0 %v4496
      %5921 = vmatmul.mubr.bf16.gmra.mxu0 %v4495
      %v5922 = vpop.f32.mrf.mxu0
      %v5923 = vadd.f32 %v5723, %v5922
      %v5924 = vpop.f32.mrf.mxu0
      %v5925 = vpop.f32.mrf.mxu0
      %v5926 = vadd.f32 %v5726, %v5925
      %v5927 = vpop.f32.mrf.mxu0
      %5928 = vmatprep.mubr.bf16.mxu0 %v4505
      %5929 = vmatmul.mubr.bf16.gmra.mxu0 %v4504
      %v5930 = vpop.f32.mrf.mxu0
      %v5931 = vadd.f32 %v5731, %v5930
      %v5932 = vpop.f32.mrf.mxu0
      %v5933 = vpop.f32.mrf.mxu0
      %v5934 = vadd.f32 %v5734, %v5933
      %v5935 = vpop.f32.mrf.mxu0
      %5936 = vmatprep.mubr.bf16.mxu0 %v4514
      %5937 = vmatmul.mubr.bf16.gmra.mxu0 %v4513
      %v5938 = vpop.f32.mrf.mxu0
      %v5939 = vadd.f32 %v5739, %v5938
      %v5940 = vpop.f32.mrf.mxu0
      %v5941 = vpop.f32.mrf.mxu0
      %v5942 = vadd.f32 %v5742, %v5941
      %v5943 = vpop.f32.mrf.mxu0
      %5944 = vmatprep.mubr.bf16.mxu0 %v4523
      %5945 = vmatmul.mubr.bf16.gmra.mxu0 %v4522
      %v5946 = vpop.f32.mrf.mxu0
      %v5947 = vadd.f32 %v5747, %v5946
      %v5948 = vpop.f32.mrf.mxu0
      %v5949 = vpop.f32.mrf.mxu0
      %v5950 = vadd.f32 %v5750, %v5949
      %v5951 = vpop.f32.mrf.mxu0
      %5952 = vmatprep.mubr.bf16.mxu0 %v4532
      %5953 = vmatmul.mubr.bf16.gmra.mxu0 %v4531
      %v5954 = vpop.f32.mrf.mxu0
      %v5955 = vadd.f32 %v5755, %v5954
      %v5956 = vpop.f32.mrf.mxu0
      %v5957 = vpop.f32.mrf.mxu0
      %v5958 = vadd.f32 %v5758, %v5957
      %v5959 = vpop.f32.mrf.mxu0
      %5960 = vmatprep.mubr.bf16.mxu0 %v4541
      %5961 = vmatmul.mubr.bf16.gmra.mxu0 %v4540
      %v5962 = vpop.f32.mrf.mxu0
      %v5963 = vadd.f32 %v5763, %v5962
      %v5964 = vpop.f32.mrf.mxu0
      %v5965 = vpop.f32.mrf.mxu0
      %v5966 = vadd.f32 %v5766, %v5965
      %v5967 = vpop.f32.mrf.mxu0
      %5968 = vmatprep.mubr.bf16.mxu0 %v4550
      %5969 = vmatmul.mubr.bf16.gmra.mxu0 %v4549
      %v5970 = vpop.f32.mrf.mxu0
      %v5971 = vadd.f32 %v5771, %v5970
      %v5972 = vpop.f32.mrf.mxu0
      %v5973 = vpop.f32.mrf.mxu0
      %v5974 = vadd.f32 %v5774, %v5973
      %v5975 = vpop.f32.mrf.mxu0
      %5976 = vmatprep.mubr.bf16.mxu0 %v4559
      %5977 = vmatmul.mubr.bf16.gmra.mxu0 %v4558
      %v5978 = vpop.f32.mrf.mxu0
      %v5979 = vadd.f32 %v5779, %v5978
      %v5980 = vpop.f32.mrf.mxu0
      %v5981 = vpop.f32.mrf.mxu0
      %v5982 = vadd.f32 %v5782, %v5981
      %v5983 = vpop.f32.mrf.mxu0
      %5984 = vmatprep.mubr.bf16.mxu0 %v4568
      %5985 = vmatmul.mubr.bf16.gmra.mxu0 %v4567
      %v5986 = vpop.f32.mrf.mxu0
      %v5987 = vadd.f32 %v5787, %v5986
      %v5988 = vpop.f32.mrf.mxu0
      %v5989 = vpop.f32.mrf.mxu0
      %v5990 = vadd.f32 %v5790, %v5989
      %v5991 = vpop.f32.mrf.mxu0
      %5992 = vmatprep.mubr.bf16.mxu0 %v4577
      %5993 = vmatmul.mubr.bf16.gmra.mxu0 %v4576
      %v5994 = vpop.f32.mrf.mxu0
      %v5995 = vadd.f32 %v5795, %v5994
      %v5996 = vpop.f32.mrf.mxu0
      %v5997 = vpop.f32.mrf.mxu0
      %v5998 = vpop.f32.mrf.mxu0
      %5999 = vdwg.mxu0
      %6000 = vmatprep.subr.bf16.mxu0 0
      %6001 = vmatpush1.bf16.msra.mxu0 %v5127
      %6002 = vmatprep.subr.bf16.mxu0 0
      %6003 = vmatpush1.bf16.msra.mxu0 %v5126
      %6004 = vmatprep.subr.bf16.mxu0 0
      %6005 = vmatpush1.bf16.msra.mxu0 %v5125
      %6006 = vmatprep.subr.bf16.mxu0 0
      %6007 = vmatpush1.bf16.msra.mxu0 %v5124
      %6008 = vmatprep.subr.bf16.mxu0 0
      %6009 = vmatpush1.bf16.msra.mxu0 %v5123
      %6010 = vmatprep.subr.bf16.mxu0 0
      %6011 = vmatpush1.bf16.msra.mxu0 %v5122
      %6012 = vmatprep.subr.bf16.mxu0 0
      %6013 = vmatpush1.bf16.msra.mxu0 %v5121
      %6014 = vmatprep.subr.bf16.mxu0 0
      %6015 = vmatpush1.bf16.msra.mxu0 %v5120
      %6016 = vmatprep.subr.bf16.mxu0 0
      %6017 = vmatpush2.bf16.msra.mxu0 0
      %6018 = vmatprep.subr.bf16.mxu0 0
      %6019 = vmatpush2.bf16.msra.mxu0 0
      %6020 = vmatprep.subr.bf16.mxu0 0
      %6021 = vmatpush2.bf16.msra.mxu0 0
      %6022 = vmatprep.subr.bf16.mxu0 0
      %6023 = vmatpush2.bf16.msra.mxu0 0
      %6024 = vmatprep.subr.bf16.mxu0 0
      %6025 = vmatpush2.bf16.msra.mxu0 0
      %6026 = vmatprep.subr.bf16.mxu0 0
      %6027 = vmatpush2.bf16.msra.mxu0 0
      %6028 = vmatprep.subr.bf16.mxu0 0
      %6029 = vmatpush2.bf16.msra.mxu0 0
      %6030 = vmatprep.subr.bf16.mxu0 0
      %6031 = vmatpush2.bf16.msra.mxu0 0
      %6032 = vmatprep.mubr.bf16.mxu0 0
      %6033 = vmatmul.mubr.bf16.gmra.mxu0 %v4398
      %v6034 = vpop.f32.mrf.mxu0
      %v6035 = vadd.f32 %v5835, %v6034
      %v6036 = vpop.f32.mrf.mxu0
      %v6037 = vpop.f32.mrf.mxu0
      %v6038 = vadd.f32 %v5838, %v6037
      %v6039 = vpop.f32.mrf.mxu0
      %6040 = vmatprep.mubr.bf16.mxu0 0
      %6041 = vmatmul.mubr.bf16.gmra.mxu0 %v4407
      %v6042 = vpop.f32.mrf.mxu0
      %v6043 = vadd.f32 %v5843, %v6042
      %v6044 = vpop.f32.mrf.mxu0
      %v6045 = vpop.f32.mrf.mxu0
      %v6046 = vadd.f32 %v5846, %v6045
      %v6047 = vpop.f32.mrf.mxu0
      %6048 = vmatprep.mubr.bf16.mxu0 0
      %6049 = vmatmul.mubr.bf16.gmra.mxu0 %v4416
      %v6050 = vpop.f32.mrf.mxu0
      %v6051 = vadd.f32 %v5851, %v6050
      %v6052 = vpop.f32.mrf.mxu0
      %v6053 = vpop.f32.mrf.mxu0
      %v6054 = vadd.f32 %v5854, %v6053
      %v6055 = vpop.f32.mrf.mxu0
      %6056 = vmatprep.mubr.bf16.mxu0 0
      %6057 = vmatmul.mubr.bf16.gmra.mxu0 %v4425
      %v6058 = vpop.f32.mrf.mxu0
      %v6059 = vadd.f32 %v5859, %v6058
      %v6060 = vpop.f32.mrf.mxu0
      %v6061 = vpop.f32.mrf.mxu0
      %v6062 = vadd.f32 %v5862, %v6061
      %v6063 = vpop.f32.mrf.mxu0
      %6064 = vmatprep.mubr.bf16.mxu0 0
      %6065 = vmatmul.mubr.bf16.gmra.mxu0 %v4434
      %v6066 = vpop.f32.mrf.mxu0
      %v6067 = vadd.f32 %v5867, %v6066
      %v6068 = vpop.f32.mrf.mxu0
      %v6069 = vpop.f32.mrf.mxu0
      %v6070 = vadd.f32 %v5870, %v6069
      %v6071 = vpop.f32.mrf.mxu0
      %6072 = vmatprep.mubr.bf16.mxu0 0
      %6073 = vmatmul.mubr.bf16.gmra.mxu0 %v4443
      %v6074 = vpop.f32.mrf.mxu0
      %v6075 = vadd.f32 %v5875, %v6074
      %v6076 = vpop.f32.mrf.mxu0
      %v6077 = vpop.f32.mrf.mxu0
      %v6078 = vadd.f32 %v5878, %v6077
      %v6079 = vpop.f32.mrf.mxu0
      %6080 = vmatprep.mubr.bf16.mxu0 0
      %6081 = vmatmul.mubr.bf16.gmra.mxu0 %v4452
      %v6082 = vpop.f32.mrf.mxu0
      %v6083 = vadd.f32 %v5883, %v6082
      %v6084 = vpop.f32.mrf.mxu0
      %v6085 = vpop.f32.mrf.mxu0
      %v6086 = vadd.f32 %v5886, %v6085
      %v6087 = vpop.f32.mrf.mxu0
      %6088 = vmatprep.mubr.bf16.mxu0 0
      %6089 = vmatmul.mubr.bf16.gmra.mxu0 %v4461
      %v6090 = vpop.f32.mrf.mxu0
      %v6091 = vadd.f32 %v5891, %v6090
      %v6092 = vpop.f32.mrf.mxu0
      %v6093 = vpop.f32.mrf.mxu0
      %v6094 = vadd.f32 %v5894, %v6093
      %v6095 = vpop.f32.mrf.mxu0
      %6096 = vmatprep.mubr.bf16.mxu0 0
      %6097 = vmatmul.mubr.bf16.gmra.mxu0 %v4470
      %v6098 = vpop.f32.mrf.mxu0
      %v6099 = vadd.f32 %v5899, %v6098
      %v6100 = vpop.f32.mrf.mxu0
      %v6101 = vpop.f32.mrf.mxu0
      %v6102 = vadd.f32 %v5902, %v6101
      %v6103 = vpop.f32.mrf.mxu0
      %6104 = vmatprep.mubr.bf16.mxu0 0
      %6105 = vmatmul.mubr.bf16.gmra.mxu0 %v4479
      %v6106 = vpop.f32.mrf.mxu0
      %v6107 = vadd.f32 %v5907, %v6106
      %v6108 = vpop.f32.mrf.mxu0
      %v6109 = vpop.f32.mrf.mxu0
      %v6110 = vadd.f32 %v5910, %v6109
      %v6111 = vpop.f32.mrf.mxu0
      %6112 = vmatprep.mubr.bf16.mxu0 0
      %6113 = vmatmul.mubr.bf16.gmra.mxu0 %v4488
      %v6114 = vpop.f32.mrf.mxu0
      %v6115 = vadd.f32 %v5915, %v6114
      %v6116 = vpop.f32.mrf.mxu0
      %v6117 = vpop.f32.mrf.mxu0
      %v6118 = vadd.f32 %v5918, %v6117
      %v6119 = vpop.f32.mrf.mxu0
      %6120 = vmatprep.mubr.bf16.mxu0 0
      %6121 = vmatmul.mubr.bf16.gmra.mxu0 %v4497
      %v6122 = vpop.f32.mrf.mxu0
      %v6123 = vadd.f32 %v5923, %v6122
      %v6124 = vpop.f32.mrf.mxu0
      %v6125 = vpop.f32.mrf.mxu0
      %v6126 = vadd.f32 %v5926, %v6125
      %v6127 = vpop.f32.mrf.mxu0
      %6128 = vmatprep.mubr.bf16.mxu0 0
      %6129 = vmatmul.mubr.bf16.gmra.mxu0 %v4506
      %v6130 = vpop.f32.mrf.mxu0
      %v6131 = vadd.f32 %v5931, %v6130
      %v6132 = vpop.f32.mrf.mxu0
      %v6133 = vpop.f32.mrf.mxu0
      %v6134 = vadd.f32 %v5934, %v6133
      %v6135 = vpop.f32.mrf.mxu0
      %6136 = vmatprep.mubr.bf16.mxu0 0
      %6137 = vmatmul.mubr.bf16.gmra.mxu0 %v4515
      %v6138 = vpop.f32.mrf.mxu0
      %v6139 = vadd.f32 %v5939, %v6138
      %v6140 = vpop.f32.mrf.mxu0
      %v6141 = vpop.f32.mrf.mxu0
      %v6142 = vadd.f32 %v5942, %v6141
      %v6143 = vpop.f32.mrf.mxu0
      %6144 = vmatprep.mubr.bf16.mxu0 0
      %6145 = vmatmul.mubr.bf16.gmra.mxu0 %v4524
      %v6146 = vpop.f32.mrf.mxu0
      %v6147 = vadd.f32 %v5947, %v6146
      %v6148 = vpop.f32.mrf.mxu0
      %v6149 = vpop.f32.mrf.mxu0
      %v6150 = vadd.f32 %v5950, %v6149
      %v6151 = vpop.f32.mrf.mxu0
      %6152 = vmatprep.mubr.bf16.mxu0 0
      %6153 = vmatmul.mubr.bf16.gmra.mxu0 %v4533
      %v6154 = vpop.f32.mrf.mxu0
      %v6155 = vadd.f32 %v5955, %v6154
      %v6156 = vpop.f32.mrf.mxu0
      %v6157 = vpop.f32.mrf.mxu0
      %v6158 = vadd.f32 %v5958, %v6157
      %v6159 = vpop.f32.mrf.mxu0
      %6160 = vmatprep.mubr.bf16.mxu0 0
      %6161 = vmatmul.mubr.bf16.gmra.mxu0 %v4542
      %v6162 = vpop.f32.mrf.mxu0
      %v6163 = vadd.f32 %v5963, %v6162
      %v6164 = vpop.f32.mrf.mxu0
      %v6165 = vpop.f32.mrf.mxu0
      %v6166 = vadd.f32 %v5966, %v6165
      %v6167 = vpop.f32.mrf.mxu0
      %6168 = vmatprep.mubr.bf16.mxu0 0
      %6169 = vmatmul.mubr.bf16.gmra.mxu0 %v4551
      %v6170 = vpop.f32.mrf.mxu0
      %v6171 = vadd.f32 %v5971, %v6170
      %v6172 = vpop.f32.mrf.mxu0
      %v6173 = vpop.f32.mrf.mxu0
      %v6174 = vadd.f32 %v5974, %v6173
      %v6175 = vpop.f32.mrf.mxu0
      %6176 = vmatprep.mubr.bf16.mxu0 0
      %6177 = vmatmul.mubr.bf16.gmra.mxu0 %v4560
      %v6178 = vpop.f32.mrf.mxu0
      %v6179 = vadd.f32 %v5979, %v6178
      %v6180 = vpop.f32.mrf.mxu0
      %v6181 = vpop.f32.mrf.mxu0
      %v6182 = vadd.f32 %v5982, %v6181
      %v6183 = vpop.f32.mrf.mxu0
      %6184 = vmatprep.mubr.bf16.mxu0 0
      %6185 = vmatmul.mubr.bf16.gmra.mxu0 %v4569
      %v6186 = vpop.f32.mrf.mxu0
      %v6187 = vadd.f32 %v5987, %v6186
      %v6188 = vpop.f32.mrf.mxu0
      %v6189 = vpop.f32.mrf.mxu0
      %v6190 = vadd.f32 %v5990, %v6189
      %v6191 = vpop.f32.mrf.mxu0
      %6192 = vmatprep.mubr.bf16.mxu0 0
      %6193 = vmatmul.mubr.bf16.gmra.mxu0 %v4578
      %v6194 = vpop.f32.mrf.mxu0
      %v6195 = vadd.f32 %v5995, %v6194
      %v6196 = vpop.f32.mrf.mxu0
      %v6197 = vpop.f32.mrf.mxu0
      %v6198 = vpop.f32.mrf.mxu0
      %6199 = vdwg.mxu0
      %v6200 = vmax.f32 %v6035, 0.0
      %v6201 = vmax.f32 %v6038, 0.0
      %v6202 = vmax.f32 %v6043, 0.0
      %v6203 = vmax.f32 %v6046, 0.0
      %v6204 = vmax.f32 %v6051, 0.0
      %v6205 = vmax.f32 %v6054, 0.0
      %v6206 = vmax.f32 %v6059, 0.0
      %v6207 = vmax.f32 %v6062, 0.0
      %v6208 = vmax.f32 %v6067, 0.0
      %v6209 = vmax.f32 %v6070, 0.0
      %v6210 = vmax.f32 %v6075, 0.0
      %v6211 = vmax.f32 %v6078, 0.0
      %v6212 = vmax.f32 %v6083, 0.0
      %v6213 = vmax.f32 %v6086, 0.0
      %v6214 = vmax.f32 %v6091, 0.0
      %v6215 = vmax.f32 %v6094, 0.0
      %v6216 = vmax.f32 %v6099, 0.0
      %v6217 = vmax.f32 %v6102, 0.0
      %v6218 = vmax.f32 %v6107, 0.0
      %v6219 = vmax.f32 %v6110, 0.0
      %v6220 = vmax.f32 %v6115, 0.0
      %v6221 = vmax.f32 %v6118, 0.0
      %v6222 = vmax.f32 %v6123, 0.0
      %v6223 = vmax.f32 %v6126, 0.0
      %v6224 = vmax.f32 %v6131, 0.0
      %v6225 = vmax.f32 %v6134, 0.0
      %v6226 = vmax.f32 %v6139, 0.0
      %v6227 = vmax.f32 %v6142, 0.0
      %v6228 = vmax.f32 %v6147, 0.0
      %v6229 = vmax.f32 %v6150, 0.0
      %v6230 = vmax.f32 %v6155, 0.0
      %v6231 = vmax.f32 %v6158, 0.0
      %v6232 = vmax.f32 %v6163, 0.0
      %v6233 = vmax.f32 %v6166, 0.0
      %v6234 = vmax.f32 %v6171, 0.0
      %v6235 = vmax.f32 %v6174, 0.0
      %v6236 = vmax.f32 %v6179, 0.0
      %v6237 = vmax.f32 %v6182, 0.0
      %v6238 = vmax.f32 %v6187, 0.0
      %v6239 = vmax.f32 %v6190, 0.0
      %v6240 = vmax.f32 %v6195, 0.0
      %v6241 = vpack.c.bf16 %v6201, %v6200
      %v6242 = vpack.c.bf16 %v6203, %v6202
      %v6243 = vpack.c.bf16 %v6205, %v6204
      %v6244 = vpack.c.bf16 %v6207, %v6206
      %v6245 = vpack.c.bf16 %v6209, %v6208
      %v6246 = vpack.c.bf16 %v6211, %v6210
      %v6247 = vpack.c.bf16 %v6213, %v6212
      %v6248 = vpack.c.bf16 %v6215, %v6214
      %v6249 = vpack.c.bf16 %v6217, %v6216
      %v6250 = vpack.c.bf16 %v6219, %v6218
      %v6251 = vpack.c.bf16 %v6221, %v6220
      %v6252 = vpack.c.bf16 %v6223, %v6222
      %v6253 = vpack.c.bf16 %v6225, %v6224
      %v6254 = vpack.c.bf16 %v6227, %v6226
      %v6255 = vpack.c.bf16 %v6229, %v6228
      %v6256 = vpack.c.bf16 %v6231, %v6230
      %v6257 = vpack.c.bf16 %v6233, %v6232
      %v6258 = vpack.c.bf16 %v6235, %v6234
      %v6259 = vpack.c.bf16 %v6237, %v6236
      %v6260 = vpack.c.bf16 %v6239, %v6238
      %v6261 = vpack.c.bf16 %v6240, %v6240
      %v6262 = vld [vmem:[%s6] sm:$0xf]
      %v6263 = vld [vmem:[%s6 + $0x4] sm:$0xf]
      %v6264 = vld [vmem:[%s6 + $0x8] sm:$0xf]
      %v6265 = vld [vmem:[%s6 + $0xc] sm:$0xf]
      %v6266 = vld [vmem:[%s6 + $0x10] sm:$0xf]
      %v6267 = vld [vmem:[%s6 + $0x14] sm:$0xf]
      %v6268 = vld [vmem:[%s6 + $0x18] sm:$0xf]
      %v6269 = vld [vmem:[%s6 + $0x1c] sm:$0xf]
      %v6270 = vld [vmem:[%s6 + $0x20] sm:$0xf]
      %v6271 = vld [vmem:[%s6 + $0x24] sm:$0xf]
      %v6272 = vld [vmem:[%s6 + $0x28] sm:$0xf]
      %v6273 = vld [vmem:[%s6 + $0x2c] sm:$0xf]
      %v6274 = vld [vmem:[%s6 + $0x30] sm:$0xf]
      %v6275 = vld [vmem:[%s6 + $0x34] sm:$0xf]
      %v6276 = vld [vmem:[%s6 + $0x38] sm:$0xf]
      %v6277 = vld [vmem:[%s6 + $0x3c] sm:$0xf]
      %v6294 = vunpack.c.l.b16 %v6262
      %v6295 = vunpack.c.l.b16 %v6263
      %v6296 = vunpack.c.l.b16 %v6264
      %v6297 = vunpack.c.l.b16 %v6265
      %v6298 = vunpack.c.l.b16 %v6266
      %v6299 = vunpack.c.l.b16 %v6267
      %v6300 = vunpack.c.l.b16 %v6268
      %v6301 = vunpack.c.l.b16 %v6269
      %v6302 = vunpack.c.l.b16 %v6270
      %v6303 = vunpack.c.l.b16 %v6271
      %v6304 = vunpack.c.l.b16 %v6272
      %v6305 = vunpack.c.l.b16 %v6273
      %v6306 = vunpack.c.l.b16 %v6274
      %v6307 = vunpack.c.l.b16 %v6275
      %v6308 = vunpack.c.l.b16 %v6276
      %v6309 = vunpack.c.l.b16 %v6277
      %v6310 = vpack.c.b16 %v6295, %v6294
      %v6311 = vpack.c.b16 %v6297, %v6296
      %v6312 = vpack.c.b16 %v6299, %v6298
      %v6313 = vpack.c.b16 %v6301, %v6300
      %v6314 = vpack.c.b16 %v6303, %v6302
      %v6315 = vpack.c.b16 %v6305, %v6304
      %v6316 = vpack.c.b16 %v6307, %v6306
      %v6317 = vpack.c.b16 %v6309, %v6308
      %6326 = vmatprep.subr.bf16.mxu0 0
      %6327 = vmatpush1.bf16.msra.mxu0 %v6317
      %6328 = vmatprep.subr.bf16.mxu0 0
      %6329 = vmatpush1.bf16.msra.mxu0 %v6316
      %6330 = vmatprep.subr.bf16.mxu0 0
      %6331 = vmatpush1.bf16.msra.mxu0 %v6315
      %6332 = vmatprep.subr.bf16.mxu0 0
      %6333 = vmatpush1.bf16.msra.mxu0 %v6314
      %6334 = vmatprep.subr.bf16.mxu0 0
      %6335 = vmatpush1.bf16.msra.mxu0 %v6313
      %6336 = vmatprep.subr.bf16.mxu0 0
      %6337 = vmatpush1.bf16.msra.mxu0 %v6312
      %6338 = vmatprep.subr.bf16.mxu0 0
      %6339 = vmatpush1.bf16.msra.mxu0 %v6311
      %6340 = vmatprep.subr.bf16.mxu0 0
      %6341 = vmatpush1.bf16.msra.mxu0 %v6310
      %6342 = vmatprep.subr.bf16.mxu0 0
      %6343 = vmatpush2.bf16.msra.mxu0 0
      %6344 = vmatprep.subr.bf16.mxu0 0
      %6345 = vmatpush2.bf16.msra.mxu0 0
      %6346 = vmatprep.subr.bf16.mxu0 0
      %6347 = vmatpush2.bf16.msra.mxu0 0
      %6348 = vmatprep.subr.bf16.mxu0 0
      %6349 = vmatpush2.bf16.msra.mxu0 0
      %6350 = vmatprep.subr.bf16.mxu0 0
      %6351 = vmatpush2.bf16.msra.mxu0 0
      %6352 = vmatprep.subr.bf16.mxu0 0
      %6353 = vmatpush2.bf16.msra.mxu0 0
      %6354 = vmatprep.subr.bf16.mxu0 0
      %6355 = vmatpush2.bf16.msra.mxu0 0
      %6356 = vmatprep.subr.bf16.mxu0 0
      %6357 = vmatpush2.bf16.msra.mxu0 0
      %6358 = vmatprep.mubr.bf16.mxu0 0
      %6359 = vmatmul.mubr.bf16.gmra.mxu0 %v6241
      %v6360 = vpop.f32.mrf.mxu0
      %v6361 = vadd.f32 0.0, %v6360
      %v6362 = vpop.f32.mrf.mxu0
      %v6363 = vpop.f32.mrf.mxu0
      %v6364 = vadd.f32 0.0, %v6363
      %v6365 = vpop.f32.mrf.mxu0
      %6366 = vmatprep.mubr.bf16.mxu0 0
      %6367 = vmatmul.mubr.bf16.gmra.mxu0 %v6242
      %v6368 = vpop.f32.mrf.mxu0
      %v6369 = vadd.f32 0.0, %v6368
      %v6370 = vpop.f32.mrf.mxu0
      %v6371 = vpop.f32.mrf.mxu0
      %v6372 = vadd.f32 0.0, %v6371
      %v6373 = vpop.f32.mrf.mxu0
      %6374 = vmatprep.mubr.bf16.mxu0 0
      %6375 = vmatmul.mubr.bf16.gmra.mxu0 %v6243
      %v6376 = vpop.f32.mrf.mxu0
      %v6377 = vadd.f32 0.0, %v6376
      %v6378 = vpop.f32.mrf.mxu0
      %v6379 = vpop.f32.mrf.mxu0
      %v6380 = vadd.f32 0.0, %v6379
      %v6381 = vpop.f32.mrf.mxu0
      %6382 = vmatprep.mubr.bf16.mxu0 0
      %6383 = vmatmul.mubr.bf16.gmra.mxu0 %v6244
      %v6384 = vpop.f32.mrf.mxu0
      %v6385 = vadd.f32 0.0, %v6384
      %v6386 = vpop.f32.mrf.mxu0
      %v6387 = vpop.f32.mrf.mxu0
      %v6388 = vadd.f32 0.0, %v6387
      %v6389 = vpop.f32.mrf.mxu0
      %6390 = vmatprep.mubr.bf16.mxu0 0
      %6391 = vmatmul.mubr.bf16.gmra.mxu0 %v6245
      %v6392 = vpop.f32.mrf.mxu0
      %v6393 = vadd.f32 0.0, %v6392
      %v6394 = vpop.f32.mrf.mxu0
      %v6395 = vpop.f32.mrf.mxu0
      %v6396 = vadd.f32 0.0, %v6395
      %v6397 = vpop.f32.mrf.mxu0
      %6398 = vmatprep.mubr.bf16.mxu0 0
      %6399 = vmatmul.mubr.bf16.gmra.mxu0 %v6246
      %v6400 = vpop.f32.mrf.mxu0
      %v6401 = vadd.f32 0.0, %v6400
      %v6402 = vpop.f32.mrf.mxu0
      %v6403 = vpop.f32.mrf.mxu0
      %v6404 = vadd.f32 0.0, %v6403
      %v6405 = vpop.f32.mrf.mxu0
      %6406 = vmatprep.mubr.bf16.mxu0 0
      %6407 = vmatmul.mubr.bf16.gmra.mxu0 %v6247
      %v6408 = vpop.f32.mrf.mxu0
      %v6409 = vadd.f32 0.0, %v6408
      %v6410 = vpop.f32.mrf.mxu0
      %v6411 = vpop.f32.mrf.mxu0
      %v6412 = vadd.f32 0.0, %v6411
      %v6413 = vpop.f32.mrf.mxu0
      %6414 = vmatprep.mubr.bf16.mxu0 0
      %6415 = vmatmul.mubr.bf16.gmra.mxu0 %v6248
      %v6416 = vpop.f32.mrf.mxu0
      %v6417 = vadd.f32 0.0, %v6416
      %v6418 = vpop.f32.mrf.mxu0
      %v6419 = vpop.f32.mrf.mxu0
      %v6420 = vadd.f32 0.0, %v6419
      %v6421 = vpop.f32.mrf.mxu0
      %6422 = vmatprep.mubr.bf16.mxu0 0
      %6423 = vmatmul.mubr.bf16.gmra.mxu0 %v6249
      %v6424 = vpop.f32.mrf.mxu0
      %v6425 = vadd.f32 0.0, %v6424
      %v6426 = vpop.f32.mrf.mxu0
      %v6427 = vpop.f32.mrf.mxu0
      %v6428 = vadd.f32 0.0, %v6427
      %v6429 = vpop.f32.mrf.mxu0
      %6430 = vmatprep.mubr.bf16.mxu0 0
      %6431 = vmatmul.mubr.bf16.gmra.mxu0 %v6250
      %v6432 = vpop.f32.mrf.mxu0
      %v6433 = vadd.f32 0.0, %v6432
      %v6434 = vpop.f32.mrf.mxu0
      %v6435 = vpop.f32.mrf.mxu0
      %v6436 = vadd.f32 0.0, %v6435
      %v6437 = vpop.f32.mrf.mxu0
      %6438 = vmatprep.mubr.bf16.mxu0 0
      %6439 = vmatmul.mubr.bf16.gmra.mxu0 %v6251
      %v6440 = vpop.f32.mrf.mxu0
      %v6441 = vadd.f32 0.0, %v6440
      %v6442 = vpop.f32.mrf.mxu0
      %v6443 = vpop.f32.mrf.mxu0
      %v6444 = vadd.f32 0.0, %v6443
      %v6445 = vpop.f32.mrf.mxu0
      %6446 = vmatprep.mubr.bf16.mxu0 0
      %6447 = vmatmul.mubr.bf16.gmra.mxu0 %v6252
      %v6448 = vpop.f32.mrf.mxu0
      %v6449 = vadd.f32 0.0, %v6448
      %v6450 = vpop.f32.mrf.mxu0
      %v6451 = vpop.f32.mrf.mxu0
      %v6452 = vadd.f32 0.0, %v6451
      %v6453 = vpop.f32.mrf.mxu0
      %6454 = vmatprep.mubr.bf16.mxu0 0
      %6455 = vmatmul.mubr.bf16.gmra.mxu0 %v6253
      %v6456 = vpop.f32.mrf.mxu0
      %v6457 = vadd.f32 0.0, %v6456
      %v6458 = vpop.f32.mrf.mxu0
      %v6459 = vpop.f32.mrf.mxu0
      %v6460 = vadd.f32 0.0, %v6459
      %v6461 = vpop.f32.mrf.mxu0
      %6462 = vmatprep.mubr.bf16.mxu0 0
      %6463 = vmatmul.mubr.bf16.gmra.mxu0 %v6254
      %v6464 = vpop.f32.mrf.mxu0
      %v6465 = vadd.f32 0.0, %v6464
      %v6466 = vpop.f32.mrf.mxu0
      %v6467 = vpop.f32.mrf.mxu0
      %v6468 = vadd.f32 0.0, %v6467
      %v6469 = vpop.f32.mrf.mxu0
      %6470 = vmatprep.mubr.bf16.mxu0 0
      %6471 = vmatmul.mubr.bf16.gmra.mxu0 %v6255
      %v6472 = vpop.f32.mrf.mxu0
      %v6473 = vadd.f32 0.0, %v6472
      %v6474 = vpop.f32.mrf.mxu0
      %v6475 = vpop.f32.mrf.mxu0
      %v6476 = vadd.f32 0.0, %v6475
      %v6477 = vpop.f32.mrf.mxu0
      %6478 = vmatprep.mubr.bf16.mxu0 0
      %6479 = vmatmul.mubr.bf16.gmra.mxu0 %v6256
      %v6480 = vpop.f32.mrf.mxu0
      %v6481 = vadd.f32 0.0, %v6480
      %v6482 = vpop.f32.mrf.mxu0
      %v6483 = vpop.f32.mrf.mxu0
      %v6484 = vadd.f32 0.0, %v6483
      %v6485 = vpop.f32.mrf.mxu0
      %6486 = vmatprep.mubr.bf16.mxu0 0
      %6487 = vmatmul.mubr.bf16.gmra.mxu0 %v6257
      %v6488 = vpop.f32.mrf.mxu0
      %v6489 = vadd.f32 0.0, %v6488
      %v6490 = vpop.f32.mrf.mxu0
      %v6491 = vpop.f32.mrf.mxu0
      %v6492 = vadd.f32 0.0, %v6491
      %v6493 = vpop.f32.mrf.mxu0
      %6494 = vmatprep.mubr.bf16.mxu0 0
      %6495 = vmatmul.mubr.bf16.gmra.mxu0 %v6258
      %v6496 = vpop.f32.mrf.mxu0
      %v6497 = vadd.f32 0.0, %v6496
      %v6498 = vpop.f32.mrf.mxu0
      %v6499 = vpop.f32.mrf.mxu0
      %v6500 = vadd.f32 0.0, %v6499
      %v6501 = vpop.f32.mrf.mxu0
      %6502 = vmatprep.mubr.bf16.mxu0 0
      %6503 = vmatmul.mubr.bf16.gmra.mxu0 %v6259
      %v6504 = vpop.f32.mrf.mxu0
      %v6505 = vadd.f32 0.0, %v6504
      %v6506 = vpop.f32.mrf.mxu0
      %v6507 = vpop.f32.mrf.mxu0
      %v6508 = vadd.f32 0.0, %v6507
      %v6509 = vpop.f32.mrf.mxu0
      %6510 = vmatprep.mubr.bf16.mxu0 0
      %6511 = vmatmul.mubr.bf16.gmra.mxu0 %v6260
      %v6512 = vpop.f32.mrf.mxu0
      %v6513 = vadd.f32 0.0, %v6512
      %v6514 = vpop.f32.mrf.mxu0
      %v6515 = vpop.f32.mrf.mxu0
      %v6516 = vadd.f32 0.0, %v6515
      %v6517 = vpop.f32.mrf.mxu0
      %6518 = vmatprep.mubr.bf16.mxu0 0
      %6519 = vmatmul.mubr.bf16.gmra.mxu0 %v6261
      %v6520 = vpop.f32.mrf.mxu0
      %v6521 = vadd.f32 0.0, %v6520
      %v6522 = vpop.f32.mrf.mxu0
      %v6523 = vpop.f32.mrf.mxu0
      %v6524 = vpop.f32.mrf.mxu0
      %6525 = vdwg.mxu0
      %v6526 = vld [vmem:[%s305] sm:$0xff]
      %v6527 = vld [vmem:[%s305 + $0x8] sm:$0xff]
      %v6528 = vld [vmem:[%s305 + $0x10] sm:$0xff]
      %v6529 = vld [vmem:[%s305 + $0x18] sm:$0xff]
      %v6530 = vld [vmem:[%s305 + $0x20] sm:$0xff]
      %v6531 = vld [vmem:[%s305 + $0x28] sm:$0xff]
      %v6532 = vld [vmem:[%s305 + $0x30] sm:$0xff]
      %v6533 = vld [vmem:[%s305 + $0x38] sm:$0xff]
      %v6534 = vld [vmem:[%s305 + $0x40] sm:$0xff]
      %v6535 = vld [vmem:[%s305 + $0x48] sm:$0xff]
      %v6536 = vld [vmem:[%s305 + $0x50] sm:$0xff]
      %v6537 = vld [vmem:[%s305 + $0x58] sm:$0xff]
      %v6538 = vld [vmem:[%s305 + $0x60] sm:$0xff]
      %v6539 = vld [vmem:[%s305 + $0x68] sm:$0xff]
      %v6540 = vld [vmem:[%s305 + $0x70] sm:$0xff]
      %v6541 = vld [vmem:[%s305 + $0x78] sm:$0xff]
      %v6542 = vld [vmem:[%s305 + $0x80] sm:$0xff]
      %v6543 = vld [vmem:[%s305 + $0x88] sm:$0xff]
      %v6544 = vld [vmem:[%s305 + $0x90] sm:$0xff]
      %v6545 = vld [vmem:[%s305 + $0x98] sm:$0xff]
      %v6546 = vld [vmem:[%s305 + $0xa0] sm:$0xff]
      %v6547 = vld [vmem:[%s305 + $0xa8] sm:$0xff]
      %v6548 = vld [vmem:[%s305 + $0xb0] sm:$0xff]
      %v6549 = vld [vmem:[%s305 + $0xb8] sm:$0xff]
      %v6550 = vld [vmem:[%s305 + $0xc0] sm:$0xff]
      %v6551 = vld [vmem:[%s305 + $0xc8] sm:$0xff]
      %v6552 = vld [vmem:[%s305 + $0xd0] sm:$0xff]
      %v6553 = vld [vmem:[%s305 + $0xd8] sm:$0xff]
      %v6554 = vld [vmem:[%s305 + $0xe0] sm:$0xff]
      %v6555 = vld [vmem:[%s305 + $0xe8] sm:$0xff]
      %v6556 = vld [vmem:[%s305 + $0xf0] sm:$0xff]
      %v6557 = vld [vmem:[%s305 + $0xf8] sm:$0xff]
      %v6558 = vld [vmem:[%s305 + $0x100] sm:$0xff]
      %v6559 = vld [vmem:[%s305 + $0x108] sm:$0xff]
      %v6560 = vld [vmem:[%s305 + $0x110] sm:$0xff]
      %v6561 = vld [vmem:[%s305 + $0x118] sm:$0xff]
      %v6562 = vld [vmem:[%s305 + $0x120] sm:$0xff]
      %v6563 = vld [vmem:[%s305 + $0x128] sm:$0xff]
      %v6564 = vld [vmem:[%s305 + $0x130] sm:$0xff]
      %v6565 = vld [vmem:[%s305 + $0x138] sm:$0xff]
      %v6566 = vld [vmem:[%s305 + $0x140] sm:$0xf]
      %v6567 = vadd.f32 %v6526, %v6361
      %v6568 = vadd.f32 %v6527, %v6364
      %v6569 = vadd.f32 %v6528, %v6369
      %v6570 = vadd.f32 %v6529, %v6372
      %v6571 = vadd.f32 %v6530, %v6377
      %v6572 = vadd.f32 %v6531, %v6380
      %v6573 = vadd.f32 %v6532, %v6385
      %v6574 = vadd.f32 %v6533, %v6388
      %v6575 = vadd.f32 %v6534, %v6393
      %v6576 = vadd.f32 %v6535, %v6396
      %v6577 = vadd.f32 %v6536, %v6401
      %v6578 = vadd.f32 %v6537, %v6404
      %v6579 = vadd.f32 %v6538, %v6409
      %v6580 = vadd.f32 %v6539, %v6412
      %v6581 = vadd.f32 %v6540, %v6417
      %v6582 = vadd.f32 %v6541, %v6420
      %v6583 = vadd.f32 %v6542, %v6425
      %v6584 = vadd.f32 %v6543, %v6428
      %v6585 = vadd.f32 %v6544, %v6433
      %v6586 = vadd.f32 %v6545, %v6436
      %v6587 = vadd.f32 %v6546, %v6441
      %v6588 = vadd.f32 %v6547, %v6444
      %v6589 = vadd.f32 %v6548, %v6449
      %v6590 = vadd.f32 %v6549, %v6452
      %v6591 = vadd.f32 %v6550, %v6457
      %v6592 = vadd.f32 %v6551, %v6460
      %v6593 = vadd.f32 %v6552, %v6465
      %v6594 = vadd.f32 %v6553, %v6468
      %v6595 = vadd.f32 %v6554, %v6473
      %v6596 = vadd.f32 %v6555, %v6476
      %v6597 = vadd.f32 %v6556, %v6481
      %v6598 = vadd.f32 %v6557, %v6484
      %v6599 = vadd.f32 %v6558, %v6489
      %v6600 = vadd.f32 %v6559, %v6492
      %v6601 = vadd.f32 %v6560, %v6497
      %v6602 = vadd.f32 %v6561, %v6500
      %v6603 = vadd.f32 %v6562, %v6505
      %v6604 = vadd.f32 %v6563, %v6508
      %v6605 = vadd.f32 %v6564, %v6513
      %v6606 = vadd.f32 %v6565, %v6516
      %v6607 = vadd.f32 %v6566, %v6521
      %v6608 = vld [vmem:[%s7] sm:$0x1]
      %v6610 = vlaneseq
      %v6611 = vshrl.u32 %v6610, 7
      %v6612 = vsub.s32 0, %v6611
      %v6613 = vrot.slane %v6608, %v6612
      %v6615 = vadd.f32 %v6567, %v6613
      %v6616 = vadd.f32 %v6568, %v6613
      %v6617 = vadd.f32 %v6569, %v6613
      %v6618 = vadd.f32 %v6570, %v6613
      %v6619 = vadd.f32 %v6571, %v6613
      %v6620 = vadd.f32 %v6572, %v6613
      %v6621 = vadd.f32 %v6573, %v6613
      %v6622 = vadd.f32 %v6574, %v6613
      %v6623 = vadd.f32 %v6575, %v6613
      %v6624 = vadd.f32 %v6576, %v6613
      %v6625 = vadd.f32 %v6577, %v6613
      %v6626 = vadd.f32 %v6578, %v6613
      %v6627 = vadd.f32 %v6579, %v6613
      %v6628 = vadd.f32 %v6580, %v6613
      %v6629 = vadd.f32 %v6581, %v6613
      %v6630 = vadd.f32 %v6582, %v6613
      %v6631 = vadd.f32 %v6583, %v6613
      %v6632 = vadd.f32 %v6584, %v6613
      %v6633 = vadd.f32 %v6585, %v6613
      %v6634 = vadd.f32 %v6586, %v6613
      %v6635 = vadd.f32 %v6587, %v6613
      %v6636 = vadd.f32 %v6588, %v6613
      %v6637 = vadd.f32 %v6589, %v6613
      %v6638 = vadd.f32 %v6590, %v6613
      %v6639 = vadd.f32 %v6591, %v6613
      %v6640 = vadd.f32 %v6592, %v6613
      %v6641 = vadd.f32 %v6593, %v6613
      %v6642 = vadd.f32 %v6594, %v6613
      %v6643 = vadd.f32 %v6595, %v6613
      %v6644 = vadd.f32 %v6596, %v6613
      %v6645 = vadd.f32 %v6597, %v6613
      %v6646 = vadd.f32 %v6598, %v6613
      %v6647 = vadd.f32 %v6599, %v6613
      %v6648 = vadd.f32 %v6600, %v6613
      %v6649 = vadd.f32 %v6601, %v6613
      %v6650 = vadd.f32 %v6602, %v6613
      %v6651 = vadd.f32 %v6603, %v6613
      %v6652 = vadd.f32 %v6604, %v6613
      %v6653 = vadd.f32 %v6605, %v6613
      %v6654 = vadd.f32 %v6606, %v6613
      %v6655 = vadd.f32 %v6607, %v6613
      %v6656 = vmax.f32 %v6615, 0.0
      %v6657 = vmax.f32 %v6616, 0.0
      %v6658 = vmax.f32 %v6617, 0.0
      %v6659 = vmax.f32 %v6618, 0.0
      %v6660 = vmax.f32 %v6619, 0.0
      %v6661 = vmax.f32 %v6620, 0.0
      %v6662 = vmax.f32 %v6621, 0.0
      %v6663 = vmax.f32 %v6622, 0.0
      %v6664 = vmax.f32 %v6623, 0.0
      %v6665 = vmax.f32 %v6624, 0.0
      %v6666 = vmax.f32 %v6625, 0.0
      %v6667 = vmax.f32 %v6626, 0.0
      %v6668 = vmax.f32 %v6627, 0.0
      %v6669 = vmax.f32 %v6628, 0.0
      %v6670 = vmax.f32 %v6629, 0.0
      %v6671 = vmax.f32 %v6630, 0.0
      %v6672 = vmax.f32 %v6631, 0.0
      %v6673 = vmax.f32 %v6632, 0.0
      %v6674 = vmax.f32 %v6633, 0.0
      %v6675 = vmax.f32 %v6634, 0.0
      %v6676 = vmax.f32 %v6635, 0.0
      %v6677 = vmax.f32 %v6636, 0.0
      %v6678 = vmax.f32 %v6637, 0.0
      %v6679 = vmax.f32 %v6638, 0.0
      %v6680 = vmax.f32 %v6639, 0.0
      %v6681 = vmax.f32 %v6640, 0.0
      %v6682 = vmax.f32 %v6641, 0.0
      %v6683 = vmax.f32 %v6642, 0.0
      %v6684 = vmax.f32 %v6643, 0.0
      %v6685 = vmax.f32 %v6644, 0.0
      %v6686 = vmax.f32 %v6645, 0.0
      %v6687 = vmax.f32 %v6646, 0.0
      %v6688 = vmax.f32 %v6647, 0.0
      %v6689 = vmax.f32 %v6648, 0.0
      %v6690 = vmax.f32 %v6649, 0.0
      %v6691 = vmax.f32 %v6650, 0.0
      %v6692 = vmax.f32 %v6651, 0.0
      %v6693 = vmax.f32 %v6652, 0.0
      %v6694 = vmax.f32 %v6653, 0.0
      %v6695 = vmax.f32 %v6654, 0.0
      %v6696 = vmax.f32 %v6655, 0.0
      %6697 = vst [vmem:[%s305] sm:$0xff] %v6656
      %6698 = vst [vmem:[%s305 + $0x8] sm:$0xff] %v6657
      %6699 = vst [vmem:[%s305 + $0x10] sm:$0xff] %v6658
      %6700 = vst [vmem:[%s305 + $0x18] sm:$0xff] %v6659
      %6701 = vst [vmem:[%s305 + $0x20] sm:$0xff] %v6660
      %6702 = vst [vmem:[%s305 + $0x28] sm:$0xff] %v6661
      %6703 = vst [vmem:[%s305 + $0x30] sm:$0xff] %v6662
      %6704 = vst [vmem:[%s305 + $0x38] sm:$0xff] %v6663
      %6705 = vst [vmem:[%s305 + $0x40] sm:$0xff] %v6664
      %6706 = vst [vmem:[%s305 + $0x48] sm:$0xff] %v6665
      %6707 = vst [vmem:[%s305 + $0x50] sm:$0xff] %v6666
      %6708 = vst [vmem:[%s305 + $0x58] sm:$0xff] %v6667
      %6709 = vst [vmem:[%s305 + $0x60] sm:$0xff] %v6668
      %6710 = vst [vmem:[%s305 + $0x68] sm:$0xff] %v6669
      %6711 = vst [vmem:[%s305 + $0x70] sm:$0xff] %v6670
      %6712 = vst [vmem:[%s305 + $0x78] sm:$0xff] %v6671
      %6713 = vst [vmem:[%s305 + $0x80] sm:$0xff] %v6672
      %6714 = vst [vmem:[%s305 + $0x88] sm:$0xff] %v6673
      %6715 = vst [vmem:[%s305 + $0x90] sm:$0xff] %v6674
      %6716 = vst [vmem:[%s305 + $0x98] sm:$0xff] %v6675
      %6717 = vst [vmem:[%s305 + $0xa0] sm:$0xff] %v6676
      %6718 = vst [vmem:[%s305 + $0xa8] sm:$0xff] %v6677
      %6719 = vst [vmem:[%s305 + $0xb0] sm:$0xff] %v6678
      %6720 = vst [vmem:[%s305 + $0xb8] sm:$0xff] %v6679
      %6721 = vst [vmem:[%s305 + $0xc0] sm:$0xff] %v6680
      %6722 = vst [vmem:[%s305 + $0xc8] sm:$0xff] %v6681
      %6723 = vst [vmem:[%s305 + $0xd0] sm:$0xff] %v6682
      %6724 = vst [vmem:[%s305 + $0xd8] sm:$0xff] %v6683
      %6725 = vst [vmem:[%s305 + $0xe0] sm:$0xff] %v6684
      %6726 = vst [vmem:[%s305 + $0xe8] sm:$0xff] %v6685
      %6727 = vst [vmem:[%s305 + $0xf0] sm:$0xff] %v6686
      %6728 = vst [vmem:[%s305 + $0xf8] sm:$0xff] %v6687
      %6729 = vst [vmem:[%s305 + $0x100] sm:$0xff] %v6688
      %6730 = vst [vmem:[%s305 + $0x108] sm:$0xff] %v6689
      %6731 = vst [vmem:[%s305 + $0x110] sm:$0xff] %v6690
      %6732 = vst [vmem:[%s305 + $0x118] sm:$0xff] %v6691
      %6733 = vst [vmem:[%s305 + $0x120] sm:$0xff] %v6692
      %6734 = vst [vmem:[%s305 + $0x128] sm:$0xff] %v6693
      %6735 = vst [vmem:[%s305 + $0x130] sm:$0xff] %v6694
      %6736 = vst [vmem:[%s305 + $0x138] sm:$0xff] %v6695
      %6737 = vst [vmem:[%s305 + $0x140] sm:$0xf] %v6696
      %p6738 = scmp.lt.s32.totalorder %s19, 1
      %s6739 = scalar_select %p6738, %s19, 1
      %s6740 = smul.addr %s6739, 41
      %s6741 = smul.addr %s6740, 8
      %s6742 = scalar_lea.vmem %s8, %s6741
      // Predicated region
      $region53: #{resnext_inconv_forward.1} parent=51 // pred_check
        %p6743 = pneg %p210
      $region54: #{resnext_inconv_forward.1} parent=51 // pred_check_branch
        %6745 = sbr.rel (%p6743) target = $region56
      $region55: #{resnext_inconv_forward.1} parent=51 // pred_region
        _
      $region56: #{resnext_inconv_forward.1} parent=51 // pred_fallthru
        _
    $region52: #{resnext_inconv_forward.1} parent=5 // pred_fallthru
      _
    %p6746 = scmp.le.s32.totalorder 2, %s14
    // Predicated region
    $region57: #{resnext_inconv_forward.1} parent=5 // pred_check
      %p6747 = pneg %p6746
    $region58: #{resnext_inconv_forward.1} parent=5 // pred_check_branch
      %6749 = sbr.rel (%p6747) target = $region60
    $region59: #{resnext_inconv_forward.1} parent=5 // pred_region
      %s6750 = ssub.s32 %s14, 2
      // Predicated region
      $region61: #{resnext_inconv_forward.1} parent=59 // pred_check
        %p6751 = pneg %p216
      $region62: #{resnext_inconv_forward.1} parent=59 // pred_check_branch
        %6753 = sbr.rel (%p6751) target = $region64
      $region63: #{resnext_inconv_forward.1} parent=59 // pred_region
        %p6754 = scmp.lt.s32.totalorder %s20, 1
        %s6755 = scalar_select %p6754, %s20, 1
        %s6756 = smul.addr %s6755, 41
        %s6757 = smul.addr %s6756, 8
        %s6758 = scalar_lea.vmem %s8, %s6757
      $region64: #{resnext_inconv_forward.1} parent=59 // pred_fallthru
        _
    $region60: #{resnext_inconv_forward.1} parent=5 // pred_fallthru
      _
  $region6: #{resnext_inconv_forward.1} parent=0 // loop_footer
    %s18 = sadd.s32 1, %s14
  $region7: #{resnext_inconv_forward.1} parent=0 // loop_footer_branch
    %13 = sbr.rel target = $region3
  $region8: #{resnext_inconv_forward.1} parent=0 // loop_exit
    _

</llo_original>
